<compile_context>
chip_gen: v7x
topology: tpu7x:2x2x1
jax: 0.10.0
libtpu: 0.0.40
codegen_flags: <defaults>
</compile_context>

<pallas_src>
import functools

import numpy as np

import jax
import jax.numpy as jnp
from jax.experimental import pallas as pl
from jax.experimental.pallas import tpu as pltpu

EPS = 1e-5
RES_CHUNK = 3  # ResnetBlocks fused per pallas_call

_CP = pltpu.CompilerParams(vmem_limit_bytes=32 * 1024 * 1024)


def _ceil_to(v, m):
    return ((v + m - 1) // m) * m


# ----------------------------------------------------------------------------
# Pallas kernels
# ----------------------------------------------------------------------------
def _mm_kernel(x_ref, w_ref, b_ref, o_ref, *, act):
    """Single matmul (im2col'd conv) + bias + optional activation."""
    y = jnp.dot(x_ref[...].astype(jnp.bfloat16), w_ref[...],
                preferred_element_type=jnp.float32) + b_ref[...]
    if act == "tanh":
        y = jnp.tanh(y)
    elif act == "relu":
        y = jnp.maximum(y, 0.0)
    o_ref[...] = y.astype(o_ref.dtype)


def _mm_bn_kernel(x_ref, w_ref, b_ref, g_ref, be_ref, o_ref, *, relu, eps):
    """Conv (one matmul) + train-mode BatchNorm (batch stats over M rows) + ReLU."""
    y = jnp.dot(x_ref[...].astype(jnp.bfloat16), w_ref[...],
                preferred_element_type=jnp.float32) + b_ref[...]
    m = y.shape[0]                                   # m = N*H*W (full batch)
    mean = jnp.sum(y, axis=0, keepdims=True) * (1.0 / m)
    c = y - mean
    var = jnp.sum(c * c, axis=0, keepdims=True) * (1.0 / m)
    y = c * jax.lax.rsqrt(var + eps) * g_ref[...] + be_ref[...]
    if relu:
        y = jnp.maximum(y, 0.0)
    o_ref[...] = y.astype(o_ref.dtype)


def _roll_rows(x, shift):
    """Roll along the row (sublane) axis; out[r] = x[(r - shift) mod M]."""
    m = x.shape[0]
    return pltpu.roll(x, shift % m, axis=0)


def _unpack_masks(mask_ref):
    """(M,4) f32 boundary-mask input -> 4 (M,1) bool columns: j==0, j==W-1, i==0, i==H-1."""
    return (mask_ref[:, 0:1] > 0.5, mask_ref[:, 1:2] > 0.5,
            mask_ref[:, 2:3] > 0.5, mask_ref[:, 3:4] > 0.5)


def _reflect_taps9(h, masks, img_w):
    """3x3 reflect-pad-1 tap gather over the (M, C) = (N*H*W, C) activation.

    Interior rows use pltpu.roll by +-1 (W neighbours) / +-img_w (H neighbours);
    boundary rows (reflection, which also covers image/batch wrap-around) select
    the mirrored roll via the precomputed boundary masks.  Returns (M, 9C).
    """
    mj0, mjw, mi0, mih = masks
    up1 = _roll_rows(h, 1)       # value from row r-1  (j-1 neighbour)
    dn1 = _roll_rows(h, -1)      # value from row r+1  (j+1 neighbour)
    yj = {
        -1: jnp.where(mj0, dn1, up1),
        0: h,
        1: jnp.where(mjw, up1, dn1),
    }
    taps = []
    for di in (-1, 0, 1):
        for dj in (-1, 0, 1):
            base = yj[dj]
            if di == 0:
                taps.append(base)
            elif di == -1:
                taps.append(jnp.where(mi0, _roll_rows(base, -img_w),
                                      _roll_rows(base, img_w)))
            else:  # di == +1
                taps.append(jnp.where(mih, _roll_rows(base, img_w),
                                      _roll_rows(base, -img_w)))
    return jnp.concatenate(taps, axis=1)             # tap order = (kh, kw) = (di+1, dj+1)


def _res_blocks_body(h, masks, w_ref, b_ref, g_ref, be_ref, *, n_blocks, img_w,
                     eps):
    """n_blocks ResnetBlocks on the (M, C) activation kept entirely in VMEM.

    Each conv half: roll/select tap gather -> one K=9C bf16 matmul -> BN -> (ReLU).
    """
    m = h.shape[0]
    for blk in range(n_blocks):
        y = h
        for half in range(2):
            li = blk * 2 + half
            taps = _reflect_taps9(y, masks, img_w)                 # (M, 9C) f32
            z = jnp.dot(taps.astype(jnp.bfloat16), w_ref[li],
                        preferred_element_type=jnp.float32) + b_ref[li]
            mean = jnp.sum(z, axis=0, keepdims=True) * (1.0 / m)
            zc = z - mean
            var = jnp.sum(zc * zc, axis=0, keepdims=True) * (1.0 / m)
            z = zc * jax.lax.rsqrt(var + eps) * g_ref[li] + be_ref[li]
            if half == 0:
                z = jnp.maximum(z, 0.0)              # ReLU after first conv only
            y = z
        h = h + y                                    # residual
    return h


def _image_head_kernel(x_ref, pw_ref, pb_ref, mask_ref, w_ref, b_ref, g_ref,
                       be_ref, o_ref, *, n_blocks, img_w, eps):
    """1x1 projection conv + first chunk of ResnetBlocks, fully fused."""
    h = jnp.dot(x_ref[...], pw_ref[...],
                preferred_element_type=jnp.float32) + pb_ref[...]
    masks = _unpack_masks(mask_ref)
    o_ref[...] = _res_blocks_body(h, masks, w_ref, b_ref, g_ref, be_ref,
                                  n_blocks=n_blocks, img_w=img_w,
                                  eps=eps).astype(o_ref.dtype)


def _res_chunk_kernel(x_ref, mask_ref, w_ref, b_ref, g_ref, be_ref, o_ref, *,
                      n_blocks, img_w, eps):
    h = x_ref[...].astype(jnp.float32)
    masks = _unpack_masks(mask_ref)
    o_ref[...] = _res_blocks_body(h, masks, w_ref, b_ref, g_ref, be_ref,
                                  n_blocks=n_blocks, img_w=img_w,
                                  eps=eps).astype(o_ref.dtype)


def _deconv_bn_relu_kernel(x_ref, w_ref, b_ref, g_ref, be_ref, o_ref, *, cout,
                           eps):
    """ConvTranspose2d(4,2,1) as ONE matmul: (M,9Cin) x (9Cin,4*cout) with the 4
    phase weights lane-concatenated; train-mode BN per channel folded across the
    4 phase lane-groups + ReLU."""
    y = jnp.dot(x_ref[...], w_ref[...],
                preferred_element_type=jnp.float32) + b_ref[...]
    m = y.shape[0]
    inv_cnt = 1.0 / (4 * m)
    sl = [y[:, p * cout:(p + 1) * cout] for p in range(4)]      # 128-aligned slices
    mean = jnp.sum(sl[0] + sl[1] + sl[2] + sl[3], axis=0,
                   keepdims=True) * inv_cnt
    var = None
    for p in range(4):
        c = sl[p] - mean
        v = jnp.sum(c * c, axis=0, keepdims=True)
        var = v if var is None else var + v
    inv = jax.lax.rsqrt(var * inv_cnt + eps)
    outs = [jnp.maximum((sl[p] - mean) * inv * g_ref[...] + be_ref[...], 0.0)
            for p in range(4)]
    o_ref[...] = jnp.concatenate(outs, axis=1).astype(o_ref.dtype)


# ----------------------------------------------------------------------------
# Glue wrappers (pad / im2col / phase interleave are cheap XLA ops fused under jit)
# ----------------------------------------------------------------------------
def _im2col(xp, KH, KW):
    N, Hp, Wp, Cin = xp.shape
    oh, ow = Hp - KH + 1, Wp - KW + 1
    cols = jnp.concatenate(
        [xp[:, kh:kh + oh, kw:kw + ow, :] for kh in range(KH) for kw in range(KW)],
        axis=-1)
    return cols.reshape(N * oh * ow, KH * KW * Cin), oh, ow


def _boundary_masks(n, h, w):
    """(M,4) f32 0/1 masks over flattened (n,h,w) rows: [j==0, j==W-1, i==0, i==H-1]."""
    r = np.arange(n * h * w)
    j = r % w
    i = (r // w) % h
    m = np.stack([j == 0, j == w - 1, i == 0, i == h - 1], axis=1)
    return jnp.asarray(m.astype(np.float32))


def conv_bn_relu(x_padded, w, b, g, be, out_dtype=jnp.float32):
    """Stride-1 conv over an already padded NHWC input + BN + ReLU (one call).
    Output lanes padded to a multiple of 128 inside the kernel (lane-dense stores)."""
    N = x_padded.shape[0]
    KH, KW, Cin, Cout = w.shape
    xcol, oh, ow = _im2col(x_padded, KH, KW)
    xcol = xcol.astype(jnp.bfloat16)
    cpad = _ceil_to(Cout, 128)
    w2 = jnp.pad(w.reshape(KH * KW * Cin, Cout), ((0, 0), (0, cpad - Cout)))
    b2 = jnp.pad(b, (0, cpad - Cout)).reshape(1, cpad)
    g2 = jnp.pad(g, (0, cpad - Cout)).reshape(1, cpad)
    be2 = jnp.pad(be, (0, cpad - Cout)).reshape(1, cpad)
    y = pl.pallas_call(
        functools.partial(_mm_bn_kernel, relu=True, eps=EPS),
        out_shape=jax.ShapeDtypeStruct((N * oh * ow, cpad), out_dtype),
        compiler_params=_CP,
    )(xcol, w2.astype(jnp.bfloat16), b2, g2, be2)
    return y[:, :Cout].reshape(N, oh, ow, Cout)


def conv_s2_bn_relu(x, w, b, g, be, out_dtype=jnp.float32):
    """Conv2d(k=3, s=2, p=1) + BN + ReLU.  Only strided output taps are gathered."""
    N, H, W, Cin = x.shape
    Cout = w.shape[-1]
    oh, ow = H // 2, W // 2
    xp = jnp.pad(x, ((0, 0), (1, 1), (1, 1), (0, 0)))
    cols = jnp.concatenate(
        [xp[:, kh:kh + 2 * oh:2, kw:kw + 2 * ow:2, :]
         for kh in range(3) for kw in range(3)], axis=-1)
    xcol = cols.reshape(N * oh * ow, 9 * Cin).astype(jnp.bfloat16)
    cpad = _ceil_to(Cout, 128)
    w2 = jnp.pad(w.reshape(9 * Cin, Cout), ((0, 0), (0, cpad - Cout)))
    b2 = jnp.pad(b, (0, cpad - Cout)).reshape(1, cpad)
    g2 = jnp.pad(g, (0, cpad - Cout)).reshape(1, cpad)
    be2 = jnp.pad(be, (0, cpad - Cout)).reshape(1, cpad)
    y = pl.pallas_call(
        functools.partial(_mm_bn_kernel, relu=True, eps=EPS),
        out_shape=jax.ShapeDtypeStruct((N * oh * ow, cpad), out_dtype),
        compiler_params=_CP,
    )(xcol, w2.astype(jnp.bfloat16), b2, g2, be2)
    return y[:, :Cout].reshape(N, oh, ow, Cout)


def conv_bias_act(x_in, w, b, act=None, out_dtype=jnp.float32):
    """Conv (no norm) + optional activation; lane-dense padded output, sliced in glue."""
    N = x_in.shape[0]
    KH, KW, Cin, Cout = w.shape
    if KH == 1 and KW == 1:
        oh, ow = x_in.shape[1], x_in.shape[2]
        xcol = x_in.reshape(N * oh * ow, Cin)
    else:
        xcol, oh, ow = _im2col(x_in, KH, KW)
    xcol = xcol.astype(jnp.bfloat16)
    cpad = _ceil_to(Cout, 128)
    w2 = jnp.pad(w.reshape(KH * KW * Cin, Cout), ((0, 0), (0, cpad - Cout)))
    b2 = jnp.pad(b, (0, cpad - Cout)).reshape(1, cpad)
    y = pl.pallas_call(
        functools.partial(_mm_kernel, act=act),
        out_shape=jax.ShapeDtypeStruct((N * oh * ow, cpad), out_dtype),
        compiler_params=_CP,
    )(xcol, w2.astype(jnp.bfloat16), b2)
    return y[:, :Cout].reshape(N, oh, ow, Cout)


def conv_transpose_bn_relu(x, wT, b, g, be, out_dtype=jnp.float32):
    """ConvTranspose2d(4, stride=2, pad=1) + BN + ReLU as ONE lane-dense matmul.

    wT is PyTorch layout (Cin, Cout, KH, KW).  Output phase (ph, pw) at pixel (a, b)
    uses input taps (a+kh-1, b+kw-1) with kh in {ph, ph+1}, kw in {pw, pw+1} and
    kernel index (3+ph-2kh, 3+pw-2kw); the 4 phase weight blocks (zero at unused
    taps) are lane-concatenated into a single (9Cin, 4*Cpad) matrix.
    """
    N, H, W, Cin = x.shape
    Cout = wT.shape[1]
    M = N * H * W
    cpad = _ceil_to(Cout, 128)
    xp = jnp.pad(x, ((0, 0), (1, 1), (1, 1), (0, 0)))
    cols = jnp.concatenate(
        [xp[:, kh:kh + H, kw:kw + W, :] for kh in range(3) for kw in range(3)],
        axis=-1)
    xcol = cols.reshape(M, 9 * Cin).astype(jnp.bfloat16)

    zero = jnp.zeros((Cin, cpad), wT.dtype)
    wblocks = []
    for kh in range(3):
        for kw in range(3):
            row = []
            for ph in range(2):
                for pw_ in range(2):
                    if kh in (ph, ph + 1) and kw in (pw_, pw_ + 1):
                        wt = wT[:, :, 3 + ph - 2 * kh, 3 + pw_ - 2 * kw]
                        row.append(jnp.pad(wt, ((0, 0), (0, cpad - Cout))))
                    else:
                        row.append(zero)
            wblocks.append(jnp.concatenate(row, axis=1))
    w9 = jnp.concatenate(wblocks, axis=0).astype(jnp.bfloat16)   # (9Cin, 4*cpad)

    bp = jnp.pad(b, (0, cpad - Cout))
    b4 = jnp.tile(bp.reshape(1, cpad), (1, 4))
    gp = jnp.pad(g, (0, cpad - Cout)).reshape(1, cpad)
    bep = jnp.pad(be, (0, cpad - Cout)).reshape(1, cpad)

    out = pl.pallas_call(
        functools.partial(_deconv_bn_relu_kernel, cout=cpad, eps=EPS),
        out_shape=jax.ShapeDtypeStruct((M, 4 * cpad), out_dtype),
        compiler_params=_CP,
    )(xcol, w9, b4, gp, bep)
    out = out.reshape(N, H, W, 2, 2, cpad)
    out = jnp.transpose(out, (0, 1, 3, 2, 4, 5)).reshape(N, 2 * H, 2 * W, cpad)
    return out[..., :Cout]


# ----------------------------------------------------------------------------
# GeneratorNetwork forward branches
# ----------------------------------------------------------------------------
@jax.jit
def label_encoder(params, x):
    down = params["down"]
    h = jnp.pad(x, ((0, 0), (3, 3), (3, 3), (0, 0)), mode="reflect")
    h = conv_bn_relu(h, down[0]["conv"]["w"], down[0]["conv"]["b"],
                     down[0]["bn"]["g"], down[0]["bn"]["be"],
                     out_dtype=jnp.bfloat16)
    h = conv_s2_bn_relu(h, down[1]["conv"]["w"], down[1]["conv"]["b"],
                        down[1]["bn"]["g"], down[1]["bn"]["be"],
                        out_dtype=jnp.bfloat16)
    h = conv_s2_bn_relu(h, down[2]["conv"]["w"], down[2]["conv"]["b"],
                        down[2]["bn"]["g"], down[2]["bn"]["be"],
                        out_dtype=jnp.float32)
    return h


@jax.jit
def image_G(params, x):
    m = params["model"]
    blocks = m["res"]
    N, H, W, Cin = x.shape
    C = blocks[0]["c1"]["w"].shape[-1]
    M = N * H * W
    masks = _boundary_masks(N, H, W)

    def stack_chunk(blks):
        ws, bs, gs, bes = [], [], [], []
        for blk in blks:
            for cn, nn in (("c1", "n1"), ("c2", "n2")):
                ws.append(blk[cn]["w"].reshape(9 * C, C))
                bs.append(blk[cn]["b"].reshape(1, C))
                gs.append(blk[nn]["g"].reshape(1, C))
                bes.append(blk[nn]["be"].reshape(1, C))
        return (jnp.stack(ws).astype(jnp.bfloat16), jnp.stack(bs),
                jnp.stack(gs), jnp.stack(bes))

    # Head: 1x1 projection conv + first RES_CHUNK ResnetBlocks in one pallas_call.
    w_s, b_s, g_s, be_s = stack_chunk(blocks[:RES_CHUNK])
    h = pl.pallas_call(
        functools.partial(_image_head_kernel, n_blocks=RES_CHUNK, img_w=W,
                          eps=EPS),
        out_shape=jax.ShapeDtypeStruct((M, C), jnp.bfloat16),
        compiler_params=_CP,
    )(x.reshape(M, Cin).astype(jnp.bfloat16),
      m["proj"]["w"].reshape(Cin, C).astype(jnp.bfloat16),
      m["proj"]["b"].reshape(1, C), masks, w_s, b_s, g_s, be_s)

    # Remaining ResnetBlocks, RES_CHUNK per pallas_call; activation stays 2-D bf16.
    for lo in range(RES_CHUNK, len(blocks), RES_CHUNK):
        nb = min(RES_CHUNK, len(blocks) - lo)
        w_s, b_s, g_s, be_s = stack_chunk(blocks[lo:lo + nb])
        h = pl.pallas_call(
            functools.partial(_res_chunk_kernel, n_blocks=nb, img_w=W, eps=EPS),
            out_shape=jax.ShapeDtypeStruct((M, C), jnp.bfloat16),
            compiler_params=_CP,
        )(h, masks, w_s, b_s, g_s, be_s)

    h = h.reshape(N, H, W, C)
    ups = m["up"]
    for idx, up in enumerate(ups):
        is_last = idx == len(ups) - 1
        h = conv_transpose_bn_relu(
            h, up["dc"]["w"], up["dc"]["b"], up["bn"]["g"], up["bn"]["be"],
            out_dtype=jnp.float32 if is_last else jnp.bfloat16)
    return h


@jax.jit
def bg_encoder(params, x):
    p = params["bg_enc"]
    h = jnp.pad(x, ((0, 0), (3, 3), (3, 3), (0, 0)), mode="reflect")
    return conv_bn_relu(h, p["conv"]["w"], p["conv"]["b"],
                        p["bn"]["g"], p["bn"]["be"], out_dtype=jnp.float32)


@jax.jit
def bg_decoder(params, x):
    p = params["bg_dec"]
    h = conv_bias_act(x, p["c1"]["w"], p["c1"]["b"], act=None,
                      out_dtype=jnp.bfloat16)
    h = jnp.pad(h, ((0, 0), (3, 3), (3, 3), (0, 0)), mode="reflect")
    return conv_bias_act(h, p["c2"]["w"], p["c2"]["b"], act="tanh",
                         out_dtype=jnp.float32)


# ----------------------------------------------------------------------------
# Deterministic parameter construction (synthetic weights, module shapes)
# ----------------------------------------------------------------------------
def init_params(key, input_nc, output_nc):
    ngf = 64
    n_downsample = 2
    n_blocks_global = 9
    embed_nc = 256 * 5

    kit = iter(jax.random.split(key, 128))

    def conv_p(kh, kw, cin, cout):
        k1, k2 = jax.random.split(next(kit))
        return {"w": jax.random.normal(k1, (kh, kw, cin, cout), jnp.float32) * 0.05,
                "b": jax.random.normal(k2, (cout,), jnp.float32) * 0.05}

    def deconv_p(cin, cout, k=4):
        k1, k2 = jax.random.split(next(kit))
        return {"w": jax.random.normal(k1, (cin, cout, k, k), jnp.float32) * 0.05,
                "b": jax.random.normal(k2, (cout,), jnp.float32) * 0.05}

    def bn_p(c):
        return {"g": jnp.ones((c,), jnp.float32), "be": jnp.zeros((c,), jnp.float32)}

    params = {}

    # downsample_model ('label_encoder')
    down = [dict(conv=conv_p(7, 7, input_nc, ngf), bn=bn_p(ngf))]
    for i in range(n_downsample):
        mult = 2 ** i
        down.append(dict(conv=conv_p(3, 3, ngf * mult, ngf * mult * 2),
                         bn=bn_p(ngf * mult * 2)))
    params["down"] = down

    # model ('image_G')
    mult = 2 ** n_downsample
    model = {"proj": conv_p(1, 1, ngf * mult + embed_nc, ngf * mult)}
    model["res"] = [dict(c1=conv_p(3, 3, ngf * mult, ngf * mult), n1=bn_p(ngf * mult),
                         c2=conv_p(3, 3, ngf * mult, ngf * mult), n2=bn_p(ngf * mult))
                    for _ in range(n_blocks_global)]
    up = []
    for i in range(n_downsample):
        mm = 2 ** (n_downsample - i)
        up.append(dict(dc=deconv_p(ngf * mm, ngf * mm // 2), bn=bn_p(ngf * mm // 2)))
    model["up"] = up
    params["model"] = model

    # bg_encoder
    params["bg_enc"] = dict(conv=conv_p(7, 7, 3, ngf), bn=bn_p(ngf))

    # bg_decoder
    params["bg_dec"] = dict(c1=conv_p(1, 1, ngf * 2, ngf),
                            c2=conv_p(7, 7, ngf, output_nc))
    return params


# ----------------------------------------------------------------------------
if __name__ == "__main__":
    input_nc, output_nc = 4, 3
    ngf, embed_nc = 64, 256 * 5

    key = jax.random.PRNGKey(0)
    pkey, xkey = jax.random.split(key)
    params = init_params(pkey, input_nc, output_nc)

    ks = jax.random.split(xkey, 4)
    # PyTorch-convention NCHW inputs for each forward branch (small shapes).
    x_label = jax.random.normal(ks[0], (2, input_nc, 16, 16), jnp.float32)
    x_imgg = jax.random.normal(ks[1], (2, ngf * 4 + embed_nc, 4, 4), jnp.float32)
    x_bge = jax.random.normal(ks[2], (2, 3, 16, 16), jnp.float32)
    x_bgd = jax.random.normal(ks[3], (2, ngf * 2, 16, 16), jnp.float32)

    to_nhwc = lambda t: jnp.transpose(t, (0, 2, 3, 1))

    y_label = label_encoder(params, to_nhwc(x_label))   # (2, 4, 4, 256)
    y_imgg = image_G(params, to_nhwc(x_imgg))           # (2, 16, 16, 64)
    y_bge = bg_encoder(params, to_nhwc(x_bge))          # (2, 16, 16, 64)
    y_bgd = bg_decoder(params, to_nhwc(x_bgd))          # (2, 16, 16, output_nc)

    jax.block_until_ready((y_label, y_imgg, y_bge, y_bgd))

    assert y_label.shape == (2, 4, 4, 256)
    assert y_imgg.shape == (2, 16, 16, 64)
    assert y_bge.shape == (2, 16, 16, 64)
    assert y_bgd.shape == (2, 16, 16, output_nc)
    assert bool(jnp.all(jnp.isfinite(y_label)))
    assert bool(jnp.all(jnp.isfinite(y_imgg)))
    assert bool(jnp.all(jnp.isfinite(y_bge)))
    assert bool(jnp.all(jnp.isfinite(y_bgd)))
    assert bool(jnp.abs(y_bgd).max() <= 1.0)             # tanh output range

    print("KERNEL_OK")
</pallas_src>

<mosaic_0001>
module attributes {stable_mosaic.version = 11 : i64} {
  func.func @_mm_bn_kernel(%arg0: memref<512x196xbf16, #tpu.memory_space<vmem>>, %arg1: memref<196x128xbf16, #tpu.memory_space<vmem>>, %arg2: memref<1x128xf32, #tpu.memory_space<vmem>>, %arg3: memref<1x128xf32, #tpu.memory_space<vmem>>, %arg4: memref<1x128xf32, #tpu.memory_space<vmem>>, %arg5: memref<512x128xbf16, #tpu.memory_space<vmem>>) attributes {dimension_semantics = [], scalar_prefetch = 0 : i64, scratch_operands = 0 : i64, tpu.core_type = #tpu.core_type<tc>} {
    %c0 = arith.constant 0 : index
    %c0_0 = arith.constant 0 : index
    %0 = vector.load %arg0[%c0, %c0_0] : memref<512x196xbf16, #tpu.memory_space<vmem>>, vector<512x196xbf16>
    %c0_1 = arith.constant 0 : index
    %c0_2 = arith.constant 0 : index
    %1 = vector.load %arg1[%c0_1, %c0_2] : memref<196x128xbf16, #tpu.memory_space<vmem>>, vector<196x128xbf16>
    %cst = arith.constant dense<0.000000e+00> : vector<512x128xf32>
    %2 = tpu.matmul %0, %1, %cst {dimension_numbers = #tpu.dot_dimension_numbers<[1], [0], [0], [1], [0, 0, 1, 1], [], []>} : vector<512x196xbf16>, vector<196x128xbf16>, vector<512x128xf32> -> vector<512x128xf32>
    %c0_3 = arith.constant 0 : index
    %c0_4 = arith.constant 0 : index
    %3 = vector.load %arg2[%c0_3, %c0_4] : memref<1x128xf32, #tpu.memory_space<vmem>>, vector<1x128xf32>
    %4 = vector.broadcast %3 : vector<1x128xf32> to vector<512x128xf32>
    %5 = arith.addf %2, %4 : vector<512x128xf32>
    %cst_5 = arith.constant dense<0.000000e+00> : vector<128xf32>
    %6 = vector.multi_reduction <add>, %5, %cst_5 [0] : vector<512x128xf32> to vector<128xf32>
    %7 = vector.shape_cast %6 : vector<128xf32> to vector<1x128xf32>
    %cst_6 = arith.constant 0.001953125 : f32
    %8 = vector.broadcast %cst_6 : f32 to vector<1x128xf32>
    %9 = arith.mulf %7, %8 : vector<1x128xf32>
    %10 = vector.broadcast %9 : vector<1x128xf32> to vector<512x128xf32>
    %11 = arith.subf %5, %10 : vector<512x128xf32>
    %12 = arith.mulf %11, %11 : vector<512x128xf32>
    %cst_7 = arith.constant dense<0.000000e+00> : vector<128xf32>
    %13 = vector.multi_reduction <add>, %12, %cst_7 [0] : vector<512x128xf32> to vector<128xf32>
    %14 = vector.shape_cast %13 : vector<128xf32> to vector<1x128xf32>
    %cst_8 = arith.constant 0.001953125 : f32
    %15 = vector.broadcast %cst_8 : f32 to vector<1x128xf32>
    %16 = arith.mulf %14, %15 : vector<1x128xf32>
    %cst_9 = arith.constant 9.99999974E-6 : f32
    %17 = vector.broadcast %cst_9 : f32 to vector<1x128xf32>
    %18 = arith.addf %16, %17 : vector<1x128xf32>
    %19 = math.rsqrt %18 : vector<1x128xf32>
    %20 = vector.broadcast %19 : vector<1x128xf32> to vector<512x128xf32>
    %21 = arith.mulf %11, %20 : vector<512x128xf32>
    %c0_10 = arith.constant 0 : index
    %c0_11 = arith.constant 0 : index
    %22 = vector.load %arg3[%c0_10, %c0_11] : memref<1x128xf32, #tpu.memory_space<vmem>>, vector<1x128xf32>
    %23 = vector.broadcast %22 : vector<1x128xf32> to vector<512x128xf32>
    %24 = arith.mulf %21, %23 : vector<512x128xf32>
    %c0_12 = arith.constant 0 : index
    %c0_13 = arith.constant 0 : index
    %25 = vector.load %arg4[%c0_12, %c0_13] : memref<1x128xf32, #tpu.memory_space<vmem>>, vector<1x128xf32>
    %26 = vector.broadcast %25 : vector<1x128xf32> to vector<512x128xf32>
    %27 = arith.addf %24, %26 : vector<512x128xf32>
    %cst_14 = arith.constant 0.000000e+00 : f32
    %28 = vector.broadcast %cst_14 : f32 to vector<512x128xf32>
    %29 = arith.maximumf %27, %28 : vector<512x128xf32>
    %30 = arith.truncf %29 : vector<512x128xf32> to vector<512x128xbf16>
    %c0_15 = arith.constant 0 : index
    %c0_16 = arith.constant 0 : index
    %31 = vector.load %arg5[%c0_15, %c0_16] : memref<512x128xbf16, #tpu.memory_space<vmem>>, vector<512x128xbf16>
    tpu.vector_store %arg5[%c0_15, %c0_16], %30 {strides = array<i32>} : memref<512x128xbf16, #tpu.memory_space<vmem>>, vector<512x128xbf16>,
    return
  }
}

module attributes {stable_mosaic.version = 11 : i64} {
  func.func @_mm_bn_kernel(%arg0: memref<128x576xbf16, #tpu.memory_space<vmem>>, %arg1: memref<576x128xbf16, #tpu.memory_space<vmem>>, %arg2: memref<1x128xf32, #tpu.memory_space<vmem>>, %arg3: memref<1x128xf32, #tpu.memory_space<vmem>>, %arg4: memref<1x128xf32, #tpu.memory_space<vmem>>, %arg5: memref<128x128xbf16, #tpu.memory_space<vmem>>) attributes {dimension_semantics = [], scalar_prefetch = 0 : i64, scratch_operands = 0 : i64, tpu.core_type = #tpu.core_type<tc>} {
    %c0 = arith.constant 0 : index
    %c0_0 = arith.constant 0 : index
    %0 = vector.load %arg0[%c0, %c0_0] : memref<128x576xbf16, #tpu.memory_space<vmem>>, vector<128x576xbf16>
    %c0_1 = arith.constant 0 : index
    %c0_2 = arith.constant 0 : index
    %1 = vector.load %arg1[%c0_1, %c0_2] : memref<576x128xbf16, #tpu.memory_space<vmem>>, vector<576x128xbf16>
    %cst = arith.constant dense<0.000000e+00> : vector<128x128xf32>
    %2 = tpu.matmul %0, %1, %cst {dimension_numbers = #tpu.dot_dimension_numbers<[1], [0], [0], [1], [0, 0, 1, 1], [], []>} : vector<128x576xbf16>, vector<576x128xbf16>, vector<128x128xf32> -> vector<128x128xf32>
    %c0_3 = arith.constant 0 : index
    %c0_4 = arith.constant 0 : index
    %3 = vector.load %arg2[%c0_3, %c0_4] : memref<1x128xf32, #tpu.memory_space<vmem>>, vector<1x128xf32>
    %4 = vector.broadcast %3 : vector<1x128xf32> to vector<128x128xf32>
    %5 = arith.addf %2, %4 : vector<128x128xf32>
    %cst_5 = arith.constant dense<0.000000e+00> : vector<128xf32>
    %6 = vector.multi_reduction <add>, %5, %cst_5 [0] : vector<128x128xf32> to vector<128xf32>
    %7 = vector.shape_cast %6 : vector<128xf32> to vector<1x128xf32>
    %cst_6 = arith.constant 7.812500e-03 : f32
    %8 = vector.broadcast %cst_6 : f32 to vector<1x128xf32>
    %9 = arith.mulf %7, %8 : vector<1x128xf32>
    %10 = vector.broadcast %9 : vector<1x128xf32> to vector<128x128xf32>
    %11 = arith.subf %5, %10 : vector<128x128xf32>
    %12 = arith.mulf %11, %11 : vector<128x128xf32>
    %cst_7 = arith.constant dense<0.000000e+00> : vector<128xf32>
    %13 = vector.multi_reduction <add>, %12, %cst_7 [0] : vector<128x128xf32> to vector<128xf32>
    %14 = vector.shape_cast %13 : vector<128xf32> to vector<1x128xf32>
    %cst_8 = arith.constant 7.812500e-03 : f32
    %15 = vector.broadcast %cst_8 : f32 to vector<1x128xf32>
    %16 = arith.mulf %14, %15 : vector<1x128xf32>
    %cst_9 = arith.constant 9.99999974E-6 : f32
    %17 = vector.broadcast %cst_9 : f32 to vector<1x128xf32>
    %18 = arith.addf %16, %17 : vector<1x128xf32>
    %19 = math.rsqrt %18 : vector<1x128xf32>
    %20 = vector.broadcast %19 : vector<1x128xf32> to vector<128x128xf32>
    %21 = arith.mulf %11, %20 : vector<128x128xf32>
    %c0_10 = arith.constant 0 : index
    %c0_11 = arith.constant 0 : index
    %22 = vector.load %arg3[%c0_10, %c0_11] : memref<1x128xf32, #tpu.memory_space<vmem>>, vector<1x128xf32>
    %23 = vector.broadcast %22 : vector<1x128xf32> to vector<128x128xf32>
    %24 = arith.mulf %21, %23 : vector<128x128xf32>
    %c0_12 = arith.constant 0 : index
    %c0_13 = arith.constant 0 : index
    %25 = vector.load %arg4[%c0_12, %c0_13] : memref<1x128xf32, #tpu.memory_space<vmem>>, vector<1x128xf32>
    %26 = vector.broadcast %25 : vector<1x128xf32> to vector<128x128xf32>
    %27 = arith.addf %24, %26 : vector<128x128xf32>
    %cst_14 = arith.constant 0.000000e+00 : f32
    %28 = vector.broadcast %cst_14 : f32 to vector<128x128xf32>
    %29 = arith.maximumf %27, %28 : vector<128x128xf32>
    %30 = arith.truncf %29 : vector<128x128xf32> to vector<128x128xbf16>
    %c0_15 = arith.constant 0 : index
    %c0_16 = arith.constant 0 : index
    %31 = vector.load %arg5[%c0_15, %c0_16] : memref<128x128xbf16, #tpu.memory_space<vmem>>, vector<128x128xbf16>
    tpu.vector_store %arg5[%c0_15, %c0_16], %30 {strides = array<i32>} : memref<128x128xbf16, #tpu.memory_space<vmem>>, vector<128x128xbf16>,
    return
  }
}

module attributes {stable_mosaic.version = 11 : i64} {
  func.func @_mm_bn_kernel(%arg0: memref<32x1152xbf16, #tpu.memory_space<vmem>>, %arg1: memref<1152x256xbf16, #tpu.memory_space<vmem>>, %arg2: memref<1x256xf32, #tpu.memory_space<vmem>>, %arg3: memref<1x256xf32, #tpu.memory_space<vmem>>, %arg4: memref<1x256xf32, #tpu.memory_space<vmem>>, %arg5: memref<32x256xf32, #tpu.memory_space<vmem>>) attributes {dimension_semantics = [], scalar_prefetch = 0 : i64, scratch_operands = 0 : i64, tpu.core_type = #tpu.core_type<tc>} {
    %c0 = arith.constant 0 : index
    %c0_0 = arith.constant 0 : index
    %0 = vector.load %arg0[%c0, %c0_0] : memref<32x1152xbf16, #tpu.memory_space<vmem>>, vector<32x1152xbf16>
    %c0_1 = arith.constant 0 : index
    %c0_2 = arith.constant 0 : index
    %1 = vector.load %arg1[%c0_1, %c0_2] : memref<1152x256xbf16, #tpu.memory_space<vmem>>, vector<1152x256xbf16>
    %cst = arith.constant dense<0.000000e+00> : vector<32x256xf32>
    %2 = tpu.matmul %0, %1, %cst {dimension_numbers = #tpu.dot_dimension_numbers<[1], [0], [0], [1], [0, 0, 1, 1], [], []>} : vector<32x1152xbf16>, vector<1152x256xbf16>, vector<32x256xf32> -> vector<32x256xf32>
    %c0_3 = arith.constant 0 : index
    %c0_4 = arith.constant 0 : index
    %3 = vector.load %arg2[%c0_3, %c0_4] : memref<1x256xf32, #tpu.memory_space<vmem>>, vector<1x256xf32>
    %4 = vector.broadcast %3 : vector<1x256xf32> to vector<32x256xf32>
    %5 = arith.addf %2, %4 : vector<32x256xf32>
    %cst_5 = arith.constant dense<0.000000e+00> : vector<256xf32>
    %6 = vector.multi_reduction <add>, %5, %cst_5 [0] : vector<32x256xf32> to vector<256xf32>
    %7 = vector.shape_cast %6 : vector<256xf32> to vector<1x256xf32>
    %cst_6 = arith.constant 3.125000e-02 : f32
    %8 = vector.broadcast %cst_6 : f32 to vector<1x256xf32>
    %9 = arith.mulf %7, %8 : vector<1x256xf32>
    %10 = vector.broadcast %9 : vector<1x256xf32> to vector<32x256xf32>
    %11 = arith.subf %5, %10 : vector<32x256xf32>
    %12 = arith.mulf %11, %11 : vector<32x256xf32>
    %cst_7 = arith.constant dense<0.000000e+00> : vector<256xf32>
    %13 = vector.multi_reduction <add>, %12, %cst_7 [0] : vector<32x256xf32> to vector<256xf32>
    %14 = vector.shape_cast %13 : vector<256xf32> to vector<1x256xf32>
    %cst_8 = arith.constant 3.125000e-02 : f32
    %15 = vector.broadcast %cst_8 : f32 to vector<1x256xf32>
    %16 = arith.mulf %14, %15 : vector<1x256xf32>
    %cst_9 = arith.constant 9.99999974E-6 : f32
    %17 = vector.broadcast %cst_9 : f32 to vector<1x256xf32>
    %18 = arith.addf %16, %17 : vector<1x256xf32>
    %19 = math.rsqrt %18 : vector<1x256xf32>
    %20 = vector.broadcast %19 : vector<1x256xf32> to vector<32x256xf32>
    %21 = arith.mulf %11, %20 : vector<32x256xf32>
    %c0_10 = arith.constant 0 : index
    %c0_11 = arith.constant 0 : index
    %22 = vector.load %arg3[%c0_10, %c0_11] : memref<1x256xf32, #tpu.memory_space<vmem>>, vector<1x256xf32>
    %23 = vector.broadcast %22 : vector<1x256xf32> to vector<32x256xf32>
    %24 = arith.mulf %21, %23 : vector<32x256xf32>
    %c0_12 = arith.constant 0 : index
    %c0_13 = arith.constant 0 : index
    %25 = vector.load %arg4[%c0_12, %c0_13] : memref<1x256xf32, #tpu.memory_space<vmem>>, vector<1x256xf32>
    %26 = vector.broadcast %25 : vector<1x256xf32> to vector<32x256xf32>
    %27 = arith.addf %24, %26 : vector<32x256xf32>
    %cst_14 = arith.constant 0.000000e+00 : f32
    %28 = vector.broadcast %cst_14 : f32 to vector<32x256xf32>
    %29 = arith.maximumf %27, %28 : vector<32x256xf32>
    %c0_15 = arith.constant 0 : index
    %c0_16 = arith.constant 0 : index
    %30 = vector.load %arg5[%c0_15, %c0_16] : memref<32x256xf32, #tpu.memory_space<vmem>>, vector<32x256xf32>
    tpu.vector_store %arg5[%c0_15, %c0_16], %29 {strides = array<i32>} : memref<32x256xf32, #tpu.memory_space<vmem>>, vector<32x256xf32>,
    return
  }
}

</mosaic_0001>

<llo_original>
// kernel: label_encoder.3
$region0: #{label_encoder.3}
  #allocation0 [shape = 'u32[]', space=smem, size = 0x4, offset = 0x4, fixed_abs, tag = 'smem constant byte address 0x4 - core index']
  #allocation1 [shape = 'u32[144,128]{1,0:T(1,128)}', space=vmem, size = 0x12000, scoped, tag = 'internal scratch']
  %s0 = inlined_call_operand.vmem [shape: bf16[512,196], index: 0, kind: input, shape index: {}]
  %s1 = inlined_call_operand.vmem [shape: bf16[196,128], index: 1, kind: input, shape index: {}]
  %s2 = inlined_call_operand.vmem [shape: f32[1,128], index: 2, kind: input, shape index: {}]
  %s3 = inlined_call_operand.vmem [shape: f32[1,128], index: 3, kind: input, shape index: {}]
  %s4 = inlined_call_operand.vmem [shape: f32[1,128], index: 4, kind: input, shape index: {}]
  %s5 = inlined_call_operand.vmem [shape: bf16[512,128], index: 5, kind: output, shape index: {}]
  %s6 = sld [smem:[#allocation0]]
  $region30: #{label_encoder.3} parent=0
    _
  %s8 = ssub.s32 1, %s6
  %s9 = scalar_select 0, %s8, %s6
  // Predicated region
  $region2: #{label_encoder.3} parent=0 // pred_check
    _
  $region3: #{label_encoder.3} parent=0 // pred_check_branch
    %11 = sbr.rel (0) target = $region5
  $region4: #{label_encoder.3} parent=0 // pred_region
    _
  $region5: #{label_encoder.3} parent=0 // pred_fallthru
    _
  // Predicated region
  $region6: #{label_encoder.3} parent=0 // pred_check
    _
  $region7: #{label_encoder.3} parent=0 // pred_check_branch
    %13 = sbr.rel (0) target = $region9
  $region8: #{label_encoder.3} parent=0 // pred_region
    _
  $region9: #{label_encoder.3} parent=0 // pred_fallthru
    _
  // Predicated region
  $region10: #{label_encoder.3} parent=0 // pred_check
    _
  $region11: #{label_encoder.3} parent=0 // pred_check_branch
    %15 = sbr.rel (0) target = $region13
  $region12: #{label_encoder.3} parent=0 // pred_region
    _
  $region13: #{label_encoder.3} parent=0 // pred_fallthru
    _
  // Predicated region
  $region14: #{label_encoder.3} parent=0 // pred_check
    _
  $region15: #{label_encoder.3} parent=0 // pred_check_branch
    %17 = sbr.rel (0) target = $region17
  $region16: #{label_encoder.3} parent=0 // pred_region
    _
  $region17: #{label_encoder.3} parent=0 // pred_fallthru
    _
  // Predicated region
  $region18: #{label_encoder.3} parent=0 // pred_check
    _
  $region19: #{label_encoder.3} parent=0 // pred_check_branch
    %19 = sbr.rel (0) target = $region21
  $region20: #{label_encoder.3} parent=0 // pred_region
    _
  $region21: #{label_encoder.3} parent=0 // pred_fallthru
    _
  %v21 = vld [vmem:[%s0] sm:$0xff]
  %v22 = vld [vmem:[%s0 + $0x8] sm:$0xff]
  %v23 = vld [vmem:[%s0 + $0x10] sm:$0xff]
  %v24 = vld [vmem:[%s0 + $0x18] sm:$0xff]
  %v25 = vld [vmem:[%s0 + $0x20] sm:$0xff]
  %v26 = vld [vmem:[%s0 + $0x28] sm:$0xff]
  %v27 = vld [vmem:[%s0 + $0x30] sm:$0xff]
  %v28 = vld [vmem:[%s0 + $0x38] sm:$0xff]
  %v29 = vld [vmem:[%s0 + $0x40] sm:$0xff]
  %v30 = vld [vmem:[%s0 + $0x48] sm:$0xff]
  %v31 = vld [vmem:[%s0 + $0x50] sm:$0xff]
  %v32 = vld [vmem:[%s0 + $0x58] sm:$0xff]
  %v33 = vld [vmem:[%s0 + $0x60] sm:$0xff]
  %v34 = vld [vmem:[%s0 + $0x68] sm:$0xff]
  %v35 = vld [vmem:[%s0 + $0x70] sm:$0xff]
  %v36 = vld [vmem:[%s0 + $0x78] sm:$0xff]
  %v37 = vld [vmem:[%s0 + $0x80] sm:$0xff]
  %v38 = vld [vmem:[%s0 + $0x88] sm:$0xff]
  %v39 = vld [vmem:[%s0 + $0x90] sm:$0xff]
  %v40 = vld [vmem:[%s0 + $0x98] sm:$0xff]
  %v41 = vld [vmem:[%s0 + $0xa0] sm:$0xff]
  %v42 = vld [vmem:[%s0 + $0xa8] sm:$0xff]
  %v43 = vld [vmem:[%s0 + $0xb0] sm:$0xff]
  %v44 = vld [vmem:[%s0 + $0xb8] sm:$0xff]
  %v45 = vld [vmem:[%s0 + $0xc0] sm:$0xff]
  %v46 = vld [vmem:[%s0 + $0xc8] sm:$0xff]
  %v47 = vld [vmem:[%s0 + $0xd0] sm:$0xff]
  %v48 = vld [vmem:[%s0 + $0xd8] sm:$0xff]
  %v49 = vld [vmem:[%s0 + $0xe0] sm:$0xff]
  %v50 = vld [vmem:[%s0 + $0xe8] sm:$0xff]
  %v51 = vld [vmem:[%s0 + $0xf0] sm:$0xff]
  %v52 = vld [vmem:[%s0 + $0xf8] sm:$0xff]
  %v53 = vld [vmem:[%s0 + $0x100] sm:$0xff]
  %v54 = vld [vmem:[%s0 + $0x108] sm:$0xff]
  %v55 = vld [vmem:[%s0 + $0x110] sm:$0xff]
  %v56 = vld [vmem:[%s0 + $0x118] sm:$0xff]
  %v57 = vld [vmem:[%s0 + $0x120] sm:$0xff]
  %v58 = vld [vmem:[%s0 + $0x128] sm:$0xff]
  %v59 = vld [vmem:[%s0 + $0x130] sm:$0xff]
  %v60 = vld [vmem:[%s0 + $0x138] sm:$0xff]
  %v61 = vld [vmem:[%s0 + $0x140] sm:$0xff]
  %v62 = vld [vmem:[%s0 + $0x148] sm:$0xff]
  %v63 = vld [vmem:[%s0 + $0x150] sm:$0xff]
  %v64 = vld [vmem:[%s0 + $0x158] sm:$0xff]
  %v65 = vld [vmem:[%s0 + $0x160] sm:$0xff]
  %v66 = vld [vmem:[%s0 + $0x168] sm:$0xff]
  %v67 = vld [vmem:[%s0 + $0x170] sm:$0xff]
  %v68 = vld [vmem:[%s0 + $0x178] sm:$0xff]
  %v69 = vld [vmem:[%s0 + $0x180] sm:$0xff]
  %v70 = vld [vmem:[%s0 + $0x188] sm:$0xff]
  %v71 = vld [vmem:[%s0 + $0x190] sm:$0xff]
  %v72 = vld [vmem:[%s0 + $0x198] sm:$0xff]
  %v73 = vld [vmem:[%s0 + $0x1a0] sm:$0xff]
  %v74 = vld [vmem:[%s0 + $0x1a8] sm:$0xff]
  %v75 = vld [vmem:[%s0 + $0x1b0] sm:$0xff]
  %v76 = vld [vmem:[%s0 + $0x1b8] sm:$0xff]
  %v77 = vld [vmem:[%s0 + $0x1c0] sm:$0xff]
  %v78 = vld [vmem:[%s0 + $0x1c8] sm:$0xff]
  %v79 = vld [vmem:[%s0 + $0x1d0] sm:$0xff]
  %v80 = vld [vmem:[%s0 + $0x1d8] sm:$0xff]
  %v81 = vld [vmem:[%s0 + $0x1e0] sm:$0xff]
  %v82 = vld [vmem:[%s0 + $0x1e8] sm:$0xff]
  %v83 = vld [vmem:[%s0 + $0x1f0] sm:$0xff]
  %v84 = vld [vmem:[%s0 + $0x1f8] sm:$0xff]
  %v85 = vld [vmem:[%s1] sm:$0xf]
  %v86 = vld [vmem:[%s1 + $0x4] sm:$0xf]
  %v87 = vld [vmem:[%s1 + $0x8] sm:$0xf]
  %v88 = vld [vmem:[%s1 + $0xc] sm:$0xf]
  %v89 = vld [vmem:[%s1 + $0x10] sm:$0xf]
  %v90 = vld [vmem:[%s1 + $0x14] sm:$0xf]
  %v91 = vld [vmem:[%s1 + $0x18] sm:$0xf]
  %v92 = vld [vmem:[%s1 + $0x1c] sm:$0xf]
  %v93 = vld [vmem:[%s1 + $0x20] sm:$0xf]
  %v94 = vld [vmem:[%s1 + $0x24] sm:$0xf]
  %v95 = vld [vmem:[%s1 + $0x28] sm:$0xf]
  %v96 = vld [vmem:[%s1 + $0x2c] sm:$0xf]
  %v97 = vld [vmem:[%s1 + $0x30] sm:$0xf]
  %v98 = vld [vmem:[%s1 + $0x34] sm:$0xf]
  %v99 = vld [vmem:[%s1 + $0x38] sm:$0xf]
  %v100 = vld [vmem:[%s1 + $0x3c] sm:$0xf]
  %v101 = vld [vmem:[%s1 + $0x40] sm:$0xf]
  %v102 = vld [vmem:[%s1 + $0x44] sm:$0xf]
  %v103 = vld [vmem:[%s1 + $0x48] sm:$0xf]
  %v104 = vld [vmem:[%s1 + $0x4c] sm:$0xf]
  %v105 = vld [vmem:[%s1 + $0x50] sm:$0xf]
  %v106 = vld [vmem:[%s1 + $0x54] sm:$0xf]
  %v107 = vld [vmem:[%s1 + $0x58] sm:$0xf]
  %v108 = vld [vmem:[%s1 + $0x5c] sm:$0xf]
  %v109 = vld [vmem:[%s1 + $0x60] sm:$0x3]
  %v110 = vld [vmem:[%s2] sm:$0x1]
  %v112 = vlaneseq
  %v113 = vshrl.u32 %v112, 7
  %v114 = vsub.s32 0, %v113
  %v115 = vrot.slane %v110, %v114
  %v181 = vunpack.c.l.b16 %v21
  %v182 = vunpack.c.h.b16 %v21
  %v183 = vunpack.c.l.b16 %v22
  %v184 = vunpack.c.h.b16 %v22
  %v185 = vunpack.c.l.b16 %v23
  %v186 = vunpack.c.h.b16 %v23
  %v187 = vunpack.c.l.b16 %v24
  %v188 = vunpack.c.h.b16 %v24
  %v189 = vunpack.c.l.b16 %v25
  %v190 = vunpack.c.h.b16 %v25
  %v191 = vunpack.c.l.b16 %v26
  %v192 = vunpack.c.h.b16 %v26
  %v193 = vunpack.c.l.b16 %v27
  %v194 = vunpack.c.h.b16 %v27
  %v195 = vunpack.c.l.b16 %v28
  %v196 = vunpack.c.h.b16 %v28
  %v197 = vunpack.c.l.b16 %v29
  %v198 = vunpack.c.h.b16 %v29
  %v199 = vunpack.c.l.b16 %v30
  %v200 = vunpack.c.h.b16 %v30
  %v201 = vunpack.c.l.b16 %v31
  %v202 = vunpack.c.h.b16 %v31
  %v203 = vunpack.c.l.b16 %v32
  %v204 = vunpack.c.h.b16 %v32
  %v205 = vunpack.c.l.b16 %v33
  %v206 = vunpack.c.h.b16 %v33
  %v207 = vunpack.c.l.b16 %v34
  %v208 = vunpack.c.h.b16 %v34
  %v209 = vunpack.c.l.b16 %v35
  %v210 = vunpack.c.h.b16 %v35
  %v211 = vunpack.c.l.b16 %v36
  %v212 = vunpack.c.h.b16 %v36
  %v213 = vunpack.c.l.b16 %v37
  %v214 = vunpack.c.h.b16 %v37
  %v215 = vunpack.c.l.b16 %v38
  %v216 = vunpack.c.h.b16 %v38
  %v217 = vunpack.c.l.b16 %v39
  %v218 = vunpack.c.h.b16 %v39
  %v219 = vunpack.c.l.b16 %v40
  %v220 = vunpack.c.h.b16 %v40
  %v221 = vunpack.c.l.b16 %v41
  %v222 = vunpack.c.h.b16 %v41
  %v223 = vunpack.c.l.b16 %v42
  %v224 = vunpack.c.h.b16 %v42
  %v225 = vunpack.c.l.b16 %v43
  %v226 = vunpack.c.h.b16 %v43
  %v227 = vunpack.c.l.b16 %v44
  %v228 = vunpack.c.h.b16 %v44
  %v229 = vunpack.c.l.b16 %v45
  %v230 = vunpack.c.h.b16 %v45
  %v231 = vunpack.c.l.b16 %v46
  %v232 = vunpack.c.h.b16 %v46
  %v233 = vunpack.c.l.b16 %v47
  %v234 = vunpack.c.h.b16 %v47
  %v235 = vunpack.c.l.b16 %v48
  %v236 = vunpack.c.h.b16 %v48
  %v237 = vunpack.c.l.b16 %v49
  %v238 = vunpack.c.h.b16 %v49
  %v239 = vunpack.c.l.b16 %v50
  %v240 = vunpack.c.h.b16 %v50
  %v241 = vunpack.c.l.b16 %v51
  %v242 = vunpack.c.h.b16 %v51
  %v243 = vunpack.c.l.b16 %v52
  %v244 = vunpack.c.h.b16 %v52
  %v245 = vunpack.c.l.b16 %v53
  %v246 = vunpack.c.h.b16 %v53
  %v247 = vunpack.c.l.b16 %v54
  %v248 = vunpack.c.h.b16 %v54
  %v249 = vunpack.c.l.b16 %v55
  %v250 = vunpack.c.h.b16 %v55
  %v251 = vunpack.c.l.b16 %v56
  %v252 = vunpack.c.h.b16 %v56
  %v253 = vunpack.c.l.b16 %v57
  %v254 = vunpack.c.h.b16 %v57
  %v255 = vunpack.c.l.b16 %v58
  %v256 = vunpack.c.h.b16 %v58
  %v257 = vunpack.c.l.b16 %v59
  %v258 = vunpack.c.h.b16 %v59
  %v259 = vunpack.c.l.b16 %v60
  %v260 = vunpack.c.h.b16 %v60
  %v261 = vunpack.c.l.b16 %v61
  %v262 = vunpack.c.h.b16 %v61
  %v263 = vunpack.c.l.b16 %v62
  %v264 = vunpack.c.h.b16 %v62
  %v265 = vunpack.c.l.b16 %v63
  %v266 = vunpack.c.h.b16 %v63
  %v267 = vunpack.c.l.b16 %v64
  %v268 = vunpack.c.h.b16 %v64
  %v269 = vunpack.c.l.b16 %v65
  %v270 = vunpack.c.h.b16 %v65
  %v271 = vunpack.c.l.b16 %v66
  %v272 = vunpack.c.h.b16 %v66
  %v273 = vunpack.c.l.b16 %v67
  %v274 = vunpack.c.h.b16 %v67
  %v275 = vunpack.c.l.b16 %v68
  %v276 = vunpack.c.h.b16 %v68
  %v277 = vunpack.c.l.b16 %v69
  %v278 = vunpack.c.h.b16 %v69
  %v279 = vunpack.c.l.b16 %v70
  %v280 = vunpack.c.h.b16 %v70
  %v281 = vunpack.c.l.b16 %v71
  %v282 = vunpack.c.h.b16 %v71
  %v283 = vunpack.c.l.b16 %v72
  %v284 = vunpack.c.h.b16 %v72
  %v285 = vunpack.c.l.b16 %v73
  %v286 = vunpack.c.h.b16 %v73
  %v287 = vunpack.c.l.b16 %v74
  %v288 = vunpack.c.h.b16 %v74
  %v289 = vunpack.c.l.b16 %v75
  %v290 = vunpack.c.h.b16 %v75
  %v291 = vunpack.c.l.b16 %v76
  %v292 = vunpack.c.h.b16 %v76
  %v293 = vunpack.c.l.b16 %v77
  %v294 = vunpack.c.h.b16 %v77
  %v295 = vunpack.c.l.b16 %v78
  %v296 = vunpack.c.h.b16 %v78
  %v297 = vunpack.c.l.b16 %v79
  %v298 = vunpack.c.h.b16 %v79
  %v299 = vunpack.c.l.b16 %v80
  %v300 = vunpack.c.h.b16 %v80
  %v301 = vunpack.c.l.b16 %v81
  %v302 = vunpack.c.h.b16 %v81
  %v303 = vunpack.c.l.b16 %v82
  %v304 = vunpack.c.h.b16 %v82
  %v305 = vunpack.c.l.b16 %v83
  %v306 = vunpack.c.h.b16 %v83
  %v307 = vunpack.c.l.b16 %v84
  %v308 = vunpack.c.h.b16 %v84
  %v309 = vpack.c.b16 %v183, %v181
  %v310 = vpack.c.b16 %v184, %v182
  %v311 = vpack.c.b16 %v187, %v185
  %v312 = vpack.c.b16 %v188, %v186
  %v313 = vpack.c.b16 %v191, %v189
  %v314 = vpack.c.b16 %v192, %v190
  %v315 = vpack.c.b16 %v195, %v193
  %v316 = vpack.c.b16 %v196, %v194
  %v317 = vpack.c.b16 %v199, %v197
  %v318 = vpack.c.b16 %v200, %v198
  %v319 = vpack.c.b16 %v203, %v201
  %v320 = vpack.c.b16 %v204, %v202
  %v321 = vpack.c.b16 %v207, %v205
  %v322 = vpack.c.b16 %v208, %v206
  %v323 = vpack.c.b16 %v211, %v209
  %v324 = vpack.c.b16 %v212, %v210
  %v325 = vpack.c.b16 %v215, %v213
  %v326 = vpack.c.b16 %v216, %v214
  %v327 = vpack.c.b16 %v219, %v217
  %v328 = vpack.c.b16 %v220, %v218
  %v329 = vpack.c.b16 %v223, %v221
  %v330 = vpack.c.b16 %v224, %v222
  %v331 = vpack.c.b16 %v227, %v225
  %v332 = vpack.c.b16 %v228, %v226
  %v333 = vpack.c.b16 %v231, %v229
  %v334 = vpack.c.b16 %v232, %v230
  %v335 = vpack.c.b16 %v235, %v233
  %v336 = vpack.c.b16 %v236, %v234
  %v337 = vpack.c.b16 %v239, %v237
  %v338 = vpack.c.b16 %v240, %v238
  %v339 = vpack.c.b16 %v243, %v241
  %v340 = vpack.c.b16 %v244, %v242
  %v341 = vpack.c.b16 %v247, %v245
  %v342 = vpack.c.b16 %v248, %v246
  %v343 = vpack.c.b16 %v251, %v249
  %v344 = vpack.c.b16 %v252, %v250
  %v345 = vpack.c.b16 %v255, %v253
  %v346 = vpack.c.b16 %v256, %v254
  %v347 = vpack.c.b16 %v259, %v257
  %v348 = vpack.c.b16 %v260, %v258
  %v349 = vpack.c.b16 %v263, %v261
  %v350 = vpack.c.b16 %v264, %v262
  %v351 = vpack.c.b16 %v267, %v265
  %v352 = vpack.c.b16 %v268, %v266
  %v353 = vpack.c.b16 %v271, %v269
  %v354 = vpack.c.b16 %v272, %v270
  %v355 = vpack.c.b16 %v275, %v273
  %v356 = vpack.c.b16 %v276, %v274
  %v357 = vpack.c.b16 %v279, %v277
  %v358 = vpack.c.b16 %v280, %v278
  %v359 = vpack.c.b16 %v283, %v281
  %v360 = vpack.c.b16 %v284, %v282
  %v361 = vpack.c.b16 %v287, %v285
  %v362 = vpack.c.b16 %v288, %v286
  %v363 = vpack.c.b16 %v291, %v289
  %v364 = vpack.c.b16 %v292, %v290
  %v365 = vpack.c.b16 %v295, %v293
  %v366 = vpack.c.b16 %v296, %v294
  %v367 = vpack.c.b16 %v299, %v297
  %v368 = vpack.c.b16 %v300, %v298
  %v369 = vpack.c.b16 %v303, %v301
  %v370 = vpack.c.b16 %v304, %v302
  %v371 = vpack.c.b16 %v307, %v305
  %v372 = vpack.c.b16 %v308, %v306
  %v430 = vunpack.c.l.b16 %v85
  %v431 = vunpack.c.l.b16 %v86
  %v432 = vunpack.c.l.b16 %v87
  %v433 = vunpack.c.l.b16 %v88
  %v434 = vunpack.c.l.b16 %v89
  %v435 = vunpack.c.l.b16 %v90
  %v436 = vunpack.c.l.b16 %v91
  %v437 = vunpack.c.l.b16 %v92
  %v438 = vunpack.c.l.b16 %v93
  %v439 = vunpack.c.l.b16 %v94
  %v440 = vunpack.c.l.b16 %v95
  %v441 = vunpack.c.l.b16 %v96
  %v442 = vunpack.c.l.b16 %v97
  %v443 = vunpack.c.l.b16 %v98
  %v444 = vunpack.c.l.b16 %v99
  %v445 = vunpack.c.l.b16 %v100
  %v446 = vunpack.c.l.b16 %v101
  %v447 = vunpack.c.l.b16 %v102
  %v448 = vunpack.c.l.b16 %v103
  %v449 = vunpack.c.l.b16 %v104
  %v450 = vunpack.c.l.b16 %v105
  %v451 = vunpack.c.l.b16 %v106
  %v452 = vunpack.c.l.b16 %v107
  %v453 = vunpack.c.l.b16 %v108
  %v454 = vunpack.c.l.b16 %v109
  %v455 = vpack.c.b16 %v431, %v430
  %v456 = vpack.c.b16 %v433, %v432
  %v457 = vpack.c.b16 %v435, %v434
  %v458 = vpack.c.b16 %v437, %v436
  %v459 = vpack.c.b16 %v439, %v438
  %v460 = vpack.c.b16 %v441, %v440
  %v461 = vpack.c.b16 %v443, %v442
  %v462 = vpack.c.b16 %v445, %v444
  %v463 = vpack.c.b16 %v447, %v446
  %v464 = vpack.c.b16 %v449, %v448
  %v465 = vpack.c.b16 %v451, %v450
  %v466 = vpack.c.b16 %v453, %v452
  %v467 = vpack.c.b16 %v454, %v454
  %vm480 = vcmask 556032
  %v482 = vsel %vm480, %v310, 0
  %v485 = vsel %vm480, %v312, 0
  %v488 = vsel %vm480, %v314, 0
  %v491 = vsel %vm480, %v316, 0
  %v494 = vsel %vm480, %v318, 0
  %v497 = vsel %vm480, %v320, 0
  %v500 = vsel %vm480, %v322, 0
  %v503 = vsel %vm480, %v324, 0
  %v506 = vsel %vm480, %v326, 0
  %v509 = vsel %vm480, %v328, 0
  %v512 = vsel %vm480, %v330, 0
  %v515 = vsel %vm480, %v332, 0
  %v518 = vsel %vm480, %v334, 0
  %v521 = vsel %vm480, %v336, 0
  %v524 = vsel %vm480, %v338, 0
  %v527 = vsel %vm480, %v340, 0
  %v530 = vsel %vm480, %v342, 0
  %v533 = vsel %vm480, %v344, 0
  %v536 = vsel %vm480, %v346, 0
  %v539 = vsel %vm480, %v348, 0
  %v542 = vsel %vm480, %v350, 0
  %v545 = vsel %vm480, %v352, 0
  %v548 = vsel %vm480, %v354, 0
  %v551 = vsel %vm480, %v356, 0
  %v554 = vsel %vm480, %v358, 0
  %v557 = vsel %vm480, %v360, 0
  %v560 = vsel %vm480, %v362, 0
  %v563 = vsel %vm480, %v364, 0
  %v566 = vsel %vm480, %v366, 0
  %v569 = vsel %vm480, %v368, 0
  %v572 = vsel %vm480, %v370, 0
  %v575 = vsel %vm480, %v372, 0
  %vm577 = vcmask 1041408
  %v579 = vsel %vm577, %v467, 0
  %581 = vmatprep.subr.bf16.mxu0 0
  %582 = vmatpush1.bf16.msra.mxu0 %v455
  %583 = vmatprep.subr.bf16.mxu0 0
  %584 = vmatpush1.bf16.msra.mxu0 %v456
  %585 = vmatprep.subr.bf16.mxu0 0
  %586 = vmatpush1.bf16.msra.mxu0 %v457
  %587 = vmatprep.subr.bf16.mxu0 0
  %588 = vmatpush1.bf16.msra.mxu0 %v458
  %589 = vmatprep.subr.bf16.mxu0 0
  %590 = vmatpush1.bf16.msra.mxu0 %v459
  %591 = vmatprep.subr.bf16.mxu0 0
  %592 = vmatpush1.bf16.msra.mxu0 %v460
  %593 = vmatprep.subr.bf16.mxu0 0
  %594 = vmatpush1.bf16.msra.mxu0 %v461
  %595 = vmatprep.subr.bf16.mxu0 0
  %596 = vmatpush1.bf16.msra.mxu0 %v462
  %597 = vmatprep.subr.bf16.mxu0 0
  %598 = vmatpush1.bf16.msra.mxu0 %v463
  %599 = vmatprep.subr.bf16.mxu0 0
  %600 = vmatpush1.bf16.msra.mxu0 %v464
  %601 = vmatprep.subr.bf16.mxu0 0
  %602 = vmatpush1.bf16.msra.mxu0 %v465
  %603 = vmatprep.subr.bf16.mxu0 0
  %604 = vmatpush1.bf16.msra.mxu0 %v466
  %605 = vmatprep.subr.bf16.mxu0 0
  %606 = vmatpush1.bf16.msra.mxu0 %v579
  %607 = vmatprep.subr.bf16.mxu0 0
  %608 = vmatpush1.bf16.msra.mxu0 0
  %609 = vmatprep.subr.bf16.mxu0 0
  %610 = vmatpush1.bf16.msra.mxu0 0
  %611 = vmatprep.subr.bf16.mxu0 0
  %612 = vmatpush1.bf16.msra.mxu0 0
  %613 = vmatprep.mubr.bf16.mxu0 %v482
  %614 = vmatmul.mubr.bf16.gmra.mrb[0].mxu0 %v309
  %v615 = vpop.f32.mrb[0].mxu0
  %v616 = vadd.f32 %v115, %v615
  %v617 = vpop.f32.mrb[0].mxu0
  %v618 = vpop.f32.mrb[0].mxu0
  %v619 = vadd.f32 %v115, %v618
  %v620 = vpop.f32.mrb[0].mxu0
  %621 = vmatprep.mubr.bf16.mxu0 %v485
  %622 = vmatmul.mubr.bf16.gmra.mrb[0].mxu0 %v311
  %v623 = vpop.f32.mrb[0].mxu0
  %v624 = vadd.f32 %v115, %v623
  %v625 = vpop.f32.mrb[0].mxu0
  %v626 = vpop.f32.mrb[0].mxu0
  %v627 = vadd.f32 %v115, %v626
  %v628 = vpop.f32.mrb[0].mxu0
  %629 = vmatprep.mubr.bf16.mxu0 %v488
  %630 = vmatmul.mubr.bf16.gmra.mrb[0].mxu0 %v313
  %v631 = vpop.f32.mrb[0].mxu0
  %v632 = vadd.f32 %v115, %v631
  %v633 = vpop.f32.mrb[0].mxu0
  %v634 = vpop.f32.mrb[0].mxu0
  %v635 = vadd.f32 %v115, %v634
  %v636 = vpop.f32.mrb[0].mxu0
  %637 = vmatprep.mubr.bf16.mxu0 %v491
  %638 = vmatmul.mubr.bf16.gmra.mrb[0].mxu0 %v315
  %v639 = vpop.f32.mrb[0].mxu0
  %v640 = vadd.f32 %v115, %v639
  %v641 = vpop.f32.mrb[0].mxu0
  %v642 = vpop.f32.mrb[0].mxu0
  %v643 = vadd.f32 %v115, %v642
  %v644 = vpop.f32.mrb[0].mxu0
  %645 = vmatprep.mubr.bf16.mxu0 %v494
  %646 = vmatmul.mubr.bf16.gmra.mrb[0].mxu0 %v317
  %v647 = vpop.f32.mrb[0].mxu0
  %v648 = vadd.f32 %v115, %v647
  %v649 = vpop.f32.mrb[0].mxu0
  %v650 = vpop.f32.mrb[0].mxu0
  %v651 = vadd.f32 %v115, %v650
  %v652 = vpop.f32.mrb[0].mxu0
  %653 = vmatprep.mubr.bf16.mxu0 %v497
  %654 = vmatmul.mubr.bf16.gmra.mrb[0].mxu0 %v319
  %v655 = vpop.f32.mrb[0].mxu0
  %v656 = vadd.f32 %v115, %v655
  %v657 = vpop.f32.mrb[0].mxu0
  %v658 = vpop.f32.mrb[0].mxu0
  %v659 = vadd.f32 %v115, %v658
  %v660 = vpop.f32.mrb[0].mxu0
  %661 = vmatprep.mubr.bf16.mxu0 %v500
  %662 = vmatmul.mubr.bf16.gmra.mrb[0].mxu0 %v321
  %v663 = vpop.f32.mrb[0].mxu0
  %v664 = vadd.f32 %v115, %v663
  %v665 = vpop.f32.mrb[0].mxu0
  %v666 = vpop.f32.mrb[0].mxu0
  %v667 = vadd.f32 %v115, %v666
  %v668 = vpop.f32.mrb[0].mxu0
  %669 = vmatprep.mubr.bf16.mxu0 %v503
  %670 = vmatmul.mubr.bf16.gmra.mrb[0].mxu0 %v323
  %v671 = vpop.f32.mrb[0].mxu0
  %v672 = vadd.f32 %v115, %v671
  %v673 = vpop.f32.mrb[0].mxu0
  %v674 = vpop.f32.mrb[0].mxu0
  %v675 = vadd.f32 %v115, %v674
  %v676 = vpop.f32.mrb[0].mxu0
  %677 = vmatprep.mubr.bf16.mxu0 %v506
  %678 = vmatmul.mubr.bf16.gmra.mrb[0].mxu0 %v325
  %v679 = vpop.f32.mrb[0].mxu0
  %v680 = vadd.f32 %v115, %v679
  %v681 = vpop.f32.mrb[0].mxu0
  %v682 = vpop.f32.mrb[0].mxu0
  %v683 = vadd.f32 %v115, %v682
  %v684 = vpop.f32.mrb[0].mxu0
  %685 = vmatprep.mubr.bf16.mxu0 %v509
  %686 = vmatmul.mubr.bf16.gmra.mrb[0].mxu0 %v327
  %v687 = vpop.f32.mrb[0].mxu0
  %v688 = vadd.f32 %v115, %v687
  %v689 = vpop.f32.mrb[0].mxu0
  %v690 = vpop.f32.mrb[0].mxu0
  %v691 = vadd.f32 %v115, %v690
  %v692 = vpop.f32.mrb[0].mxu0
  %693 = vmatprep.mubr.bf16.mxu0 %v512
  %694 = vmatmul.mubr.bf16.gmra.mrb[0].mxu0 %v329
  %v695 = vpop.f32.mrb[0].mxu0
  %v696 = vadd.f32 %v115, %v695
  %v697 = vpop.f32.mrb[0].mxu0
  %v698 = vpop.f32.mrb[0].mxu0
  %v699 = vadd.f32 %v115, %v698
  %v700 = vpop.f32.mrb[0].mxu0
  %701 = vmatprep.mubr.bf16.mxu0 %v515
  %702 = vmatmul.mubr.bf16.gmra.mrb[0].mxu0 %v331
  %v703 = vpop.f32.mrb[0].mxu0
  %v704 = vadd.f32 %v115, %v703
  %v705 = vpop.f32.mrb[0].mxu0
  %v706 = vpop.f32.mrb[0].mxu0
  %v707 = vadd.f32 %v115, %v706
  %v708 = vpop.f32.mrb[0].mxu0
  %709 = vmatprep.mubr.bf16.mxu0 %v518
  %710 = vmatmul.mubr.bf16.gmra.mrb[0].mxu0 %v333
  %v711 = vpop.f32.mrb[0].mxu0
  %v712 = vadd.f32 %v115, %v711
  %v713 = vpop.f32.mrb[0].mxu0
  %v714 = vpop.f32.mrb[0].mxu0
  %v715 = vadd.f32 %v115, %v714
  %v716 = vpop.f32.mrb[0].mxu0
  %717 = vmatprep.mubr.bf16.mxu0 %v521
  %718 = vmatmul.mubr.bf16.gmra.mrb[0].mxu0 %v335
  %v719 = vpop.f32.mrb[0].mxu0
  %v720 = vadd.f32 %v115, %v719
  %v721 = vpop.f32.mrb[0].mxu0
  %v722 = vpop.f32.mrb[0].mxu0
  %v723 = vadd.f32 %v115, %v722
  %v724 = vpop.f32.mrb[0].mxu0
  %725 = vmatprep.mubr.bf16.mxu0 %v524
  %726 = vmatmul.mubr.bf16.gmra.mrb[0].mxu0 %v337
  %v727 = vpop.f32.mrb[0].mxu0
  %v728 = vadd.f32 %v115, %v727
  %v729 = vpop.f32.mrb[0].mxu0
  %v730 = vpop.f32.mrb[0].mxu0
  %v731 = vadd.f32 %v115, %v730
  %v732 = vpop.f32.mrb[0].mxu0
  %733 = vmatprep.mubr.bf16.mxu0 %v527
  %734 = vmatmul.mubr.bf16.gmra.mrb[0].mxu0 %v339
  %v735 = vpop.f32.mrb[0].mxu0
  %v736 = vadd.f32 %v115, %v735
  %v737 = vpop.f32.mrb[0].mxu0
  %v738 = vpop.f32.mrb[0].mxu0
  %v739 = vadd.f32 %v115, %v738
  %v740 = vpop.f32.mrb[0].mxu0
  %741 = vmatprep.mubr.bf16.mxu0 %v530
  %742 = vmatmul.mubr.bf16.gmra.mrb[0].mxu0 %v341
  %v743 = vpop.f32.mrb[0].mxu0
  %v744 = vadd.f32 %v115, %v743
  %v745 = vpop.f32.mrb[0].mxu0
  %v746 = vpop.f32.mrb[0].mxu0
  %v747 = vadd.f32 %v115, %v746
  %v748 = vpop.f32.mrb[0].mxu0
  %749 = vmatprep.mubr.bf16.mxu0 %v533
  %750 = vmatmul.mubr.bf16.gmra.mrb[0].mxu0 %v343
  %v751 = vpop.f32.mrb[0].mxu0
  %v752 = vadd.f32 %v115, %v751
  %v753 = vpop.f32.mrb[0].mxu0
  %v754 = vpop.f32.mrb[0].mxu0
  %v755 = vadd.f32 %v115, %v754
  %v756 = vpop.f32.mrb[0].mxu0
  %757 = vmatprep.mubr.bf16.mxu0 %v536
  %758 = vmatmul.mubr.bf16.gmra.mrb[0].mxu0 %v345
  %v759 = vpop.f32.mrb[0].mxu0
  %v760 = vadd.f32 %v115, %v759
  %v761 = vpop.f32.mrb[0].mxu0
  %v762 = vpop.f32.mrb[0].mxu0
  %v763 = vadd.f32 %v115, %v762
  %v764 = vpop.f32.mrb[0].mxu0
  %765 = vmatprep.mubr.bf16.mxu0 %v539
  %766 = vmatmul.mubr.bf16.gmra.mrb[0].mxu0 %v347
  %v767 = vpop.f32.mrb[0].mxu0
  %v768 = vadd.f32 %v115, %v767
  %v769 = vpop.f32.mrb[0].mxu0
  %v770 = vpop.f32.mrb[0].mxu0
  %v771 = vadd.f32 %v115, %v770
  %v772 = vpop.f32.mrb[0].mxu0
  %773 = vmatprep.mubr.bf16.mxu0 %v542
  %774 = vmatmul.mubr.bf16.gmra.mrb[0].mxu0 %v349
  %v775 = vpop.f32.mrb[0].mxu0
  %v776 = vadd.f32 %v115, %v775
  %v777 = vpop.f32.mrb[0].mxu0
  %v778 = vpop.f32.mrb[0].mxu0
  %v779 = vadd.f32 %v115, %v778
  %v780 = vpop.f32.mrb[0].mxu0
  %781 = vmatprep.mubr.bf16.mxu0 %v545
  %782 = vmatmul.mubr.bf16.gmra.mrb[0].mxu0 %v351
  %v783 = vpop.f32.mrb[0].mxu0
  %v784 = vadd.f32 %v115, %v783
  %v785 = vpop.f32.mrb[0].mxu0
  %v786 = vpop.f32.mrb[0].mxu0
  %v787 = vadd.f32 %v115, %v786
  %v788 = vpop.f32.mrb[0].mxu0
  %789 = vmatprep.mubr.bf16.mxu0 %v548
  %790 = vmatmul.mubr.bf16.gmra.mrb[0].mxu0 %v353
  %v791 = vpop.f32.mrb[0].mxu0
  %v792 = vadd.f32 %v115, %v791
  %v793 = vpop.f32.mrb[0].mxu0
  %v794 = vpop.f32.mrb[0].mxu0
  %v795 = vadd.f32 %v115, %v794
  %v796 = vpop.f32.mrb[0].mxu0
  %797 = vmatprep.mubr.bf16.mxu0 %v551
  %798 = vmatmul.mubr.bf16.gmra.mrb[0].mxu0 %v355
  %v799 = vpop.f32.mrb[0].mxu0
  %v800 = vadd.f32 %v115, %v799
  %v801 = vpop.f32.mrb[0].mxu0
  %v802 = vpop.f32.mrb[0].mxu0
  %v803 = vadd.f32 %v115, %v802
  %v804 = vpop.f32.mrb[0].mxu0
  %805 = vmatprep.mubr.bf16.mxu0 %v554
  %806 = vmatmul.mubr.bf16.gmra.mrb[0].mxu0 %v357
  %v807 = vpop.f32.mrb[0].mxu0
  %v808 = vadd.f32 %v115, %v807
  %v809 = vpop.f32.mrb[0].mxu0
  %v810 = vpop.f32.mrb[0].mxu0
  %v811 = vadd.f32 %v115, %v810
  %v812 = vpop.f32.mrb[0].mxu0
  %813 = vmatprep.mubr.bf16.mxu0 %v557
  %814 = vmatmul.mubr.bf16.gmra.mrb[0].mxu0 %v359
  %v815 = vpop.f32.mrb[0].mxu0
  %v816 = vadd.f32 %v115, %v815
  %v817 = vpop.f32.mrb[0].mxu0
  %v818 = vpop.f32.mrb[0].mxu0
  %v819 = vadd.f32 %v115, %v818
  %v820 = vpop.f32.mrb[0].mxu0
  %821 = vmatprep.mubr.bf16.mxu0 %v560
  %822 = vmatmul.mubr.bf16.gmra.mrb[0].mxu0 %v361
  %v823 = vpop.f32.mrb[0].mxu0
  %v824 = vadd.f32 %v115, %v823
  %v825 = vpop.f32.mrb[0].mxu0
  %v826 = vpop.f32.mrb[0].mxu0
  %v827 = vadd.f32 %v115, %v826
  %v828 = vpop.f32.mrb[0].mxu0
  %829 = vmatprep.mubr.bf16.mxu0 %v563
  %830 = vmatmul.mubr.bf16.gmra.mrb[0].mxu0 %v363
  %v831 = vpop.f32.mrb[0].mxu0
  %v832 = vadd.f32 %v115, %v831
  %v833 = vpop.f32.mrb[0].mxu0
  %v834 = vpop.f32.mrb[0].mxu0
  %v835 = vadd.f32 %v115, %v834
  %v836 = vpop.f32.mrb[0].mxu0
  %837 = vmatprep.mubr.bf16.mxu0 %v566
  %838 = vmatmul.mubr.bf16.gmra.mrb[0].mxu0 %v365
  %v839 = vpop.f32.mrb[0].mxu0
  %v840 = vadd.f32 %v115, %v839
  %v841 = vpop.f32.mrb[0].mxu0
  %v842 = vpop.f32.mrb[0].mxu0
  %v843 = vadd.f32 %v115, %v842
  %v844 = vpop.f32.mrb[0].mxu0
  %845 = vmatprep.mubr.bf16.mxu0 %v569
  %846 = vmatmul.mubr.bf16.gmra.mrb[0].mxu0 %v367
  %v847 = vpop.f32.mrb[0].mxu0
  %v848 = vadd.f32 %v115, %v847
  %v849 = vpop.f32.mrb[0].mxu0
  %v850 = vpop.f32.mrb[0].mxu0
  %v851 = vadd.f32 %v115, %v850
  %v852 = vpop.f32.mrb[0].mxu0
  %853 = vmatprep.mubr.bf16.mxu0 %v572
  %854 = vmatmul.mubr.bf16.gmra.mrb[0].mxu0 %v369
  %v855 = vpop.f32.mrb[0].mxu0
  %v856 = vadd.f32 %v115, %v855
  %v857 = vpop.f32.mrb[0].mxu0
  %v858 = vpop.f32.mrb[0].mxu0
  %v859 = vadd.f32 %v115, %v858
  %v860 = vpop.f32.mrb[0].mxu0
  %861 = vmatprep.mubr.bf16.mxu0 %v575
  %862 = vmatmul.mubr.bf16.gmra.mrb[0].mxu0 %v371
  %v863 = vpop.f32.mrb[0].mxu0
  %v864 = vadd.f32 %v115, %v863
  %v865 = vpop.f32.mrb[0].mxu0
  %v866 = vpop.f32.mrb[0].mxu0
  %v867 = vadd.f32 %v115, %v866
  %v868 = vpop.f32.mrb[0].mxu0
  %869 = vdwg.mxu0
  %v870 = vadd.f32 %v616, %v619
  %v871 = vadd.f32 %v870, %v624
  %v872 = vadd.f32 %v871, %v627
  %v873 = vadd.f32 %v872, %v632
  %v874 = vadd.f32 %v873, %v635
  %v875 = vadd.f32 %v874, %v640
  %v876 = vadd.f32 %v875, %v643
  %v877 = vadd.f32 %v876, %v648
  %v878 = vadd.f32 %v877, %v651
  %v879 = vadd.f32 %v878, %v656
  %v880 = vadd.f32 %v879, %v659
  %v881 = vadd.f32 %v880, %v664
  %v882 = vadd.f32 %v881, %v667
  %v883 = vadd.f32 %v882, %v672
  %v884 = vadd.f32 %v883, %v675
  %v885 = vadd.f32 %v884, %v680
  %v886 = vadd.f32 %v885, %v683
  %v887 = vadd.f32 %v886, %v688
  %v888 = vadd.f32 %v887, %v691
  %v889 = vadd.f32 %v888, %v696
  %v890 = vadd.f32 %v889, %v699
  %v891 = vadd.f32 %v890, %v704
  %v892 = vadd.f32 %v891, %v707
  %v893 = vadd.f32 %v892, %v712
  %v894 = vadd.f32 %v893, %v715
  %v895 = vadd.f32 %v894, %v720
  %v896 = vadd.f32 %v895, %v723
  %v897 = vadd.f32 %v896, %v728
  %v898 = vadd.f32 %v897, %v731
  %v899 = vadd.f32 %v898, %v736
  %v900 = vadd.f32 %v899, %v739
  %v901 = vadd.f32 %v900, %v744
  %v902 = vadd.f32 %v901, %v747
  %v903 = vadd.f32 %v902, %v752
  %v904 = vadd.f32 %v903, %v755
  %v905 = vadd.f32 %v904, %v760
  %v906 = vadd.f32 %v905, %v763
  %v907 = vadd.f32 %v906, %v768
  %v908 = vadd.f32 %v907, %v771
  %v909 = vadd.f32 %v908, %v776
  %v910 = vadd.f32 %v909, %v779
  %v911 = vadd.f32 %v910, %v784
  %v912 = vadd.f32 %v911, %v787
  %v913 = vadd.f32 %v912, %v792
  %v914 = vadd.f32 %v913, %v795
  %v915 = vadd.f32 %v914, %v800
  %v916 = vadd.f32 %v915, %v803
  %v917 = vadd.f32 %v916, %v808
  %v918 = vadd.f32 %v917, %v811
  %v919 = vadd.f32 %v918, %v816
  %v920 = vadd.f32 %v919, %v819
  %v921 = vadd.f32 %v920, %v824
  %v922 = vadd.f32 %v921, %v827
  %v923 = vadd.f32 %v922, %v832
  %v924 = vadd.f32 %v923, %v835
  %v925 = vadd.f32 %v924, %v840
  %v926 = vadd.f32 %v925, %v843
  %v927 = vadd.f32 %v926, %v848
  %v928 = vadd.f32 %v927, %v851
  %v929 = vadd.f32 %v928, %v856
  %v930 = vadd.f32 %v929, %v859
  %v931 = vadd.f32 %v930, %v864
  %v932 = vadd.f32 %v931, %v867
  %v933 = vrot.slane %v932, 4
  %v934 = vadd.f32 %v932, %v933
  %v935 = vrot.slane %v934, 2
  %v936 = vadd.f32 %v934, %v935
  %v937 = vrot.slane %v936, 1
  %v938 = vadd.f32 %v936, %v937
  %v939 = vmul.f32 %v938, 0.001953125
  %v940 = vsub.f32 %v616, %v939
  %v941 = vsub.f32 %v619, %v939
  %v942 = vsub.f32 %v624, %v939
  %v943 = vsub.f32 %v627, %v939
  %v944 = vsub.f32 %v632, %v939
  %v945 = vsub.f32 %v635, %v939
  %v946 = vsub.f32 %v640, %v939
  %v947 = vsub.f32 %v643, %v939
  %v948 = vsub.f32 %v648, %v939
  %v949 = vsub.f32 %v651, %v939
  %v950 = vsub.f32 %v656, %v939
  %v951 = vsub.f32 %v659, %v939
  %v952 = vsub.f32 %v664, %v939
  %v953 = vsub.f32 %v667, %v939
  %v954 = vsub.f32 %v672, %v939
  %v955 = vsub.f32 %v675, %v939
  %v956 = vsub.f32 %v680, %v939
  %v957 = vsub.f32 %v683, %v939
  %v958 = vsub.f32 %v688, %v939
  %v959 = vsub.f32 %v691, %v939
  %v960 = vsub.f32 %v696, %v939
  %v961 = vsub.f32 %v699, %v939
  %v962 = vsub.f32 %v704, %v939
  %v963 = vsub.f32 %v707, %v939
  %v964 = vsub.f32 %v712, %v939
  %v965 = vsub.f32 %v715, %v939
  %v966 = vsub.f32 %v720, %v939
  %v967 = vsub.f32 %v723, %v939
  %v968 = vsub.f32 %v728, %v939
  %v969 = vsub.f32 %v731, %v939
  %v970 = vsub.f32 %v736, %v939
  %v971 = vsub.f32 %v739, %v939
  %v972 = vsub.f32 %v744, %v939
  %v973 = vsub.f32 %v747, %v939
  %v974 = vsub.f32 %v752, %v939
  %v975 = vsub.f32 %v755, %v939
  %v976 = vsub.f32 %v760, %v939
  %v977 = vsub.f32 %v763, %v939
  %v978 = vsub.f32 %v768, %v939
  %v979 = vsub.f32 %v771, %v939
  %v980 = vsub.f32 %v776, %v939
  %v981 = vsub.f32 %v779, %v939
  %v982 = vsub.f32 %v784, %v939
  %v983 = vsub.f32 %v787, %v939
  %v984 = vsub.f32 %v792, %v939
  %v985 = vsub.f32 %v795, %v939
  %v986 = vsub.f32 %v800, %v939
  %v987 = vsub.f32 %v803, %v939
  %v988 = vsub.f32 %v808, %v939
  %v989 = vsub.f32 %v811, %v939
  %v990 = vsub.f32 %v816, %v939
  %v991 = vsub.f32 %v819, %v939
  %v992 = vsub.f32 %v824, %v939
  %v993 = vsub.f32 %v827, %v939
  %v994 = vsub.f32 %v832, %v939
  %v995 = vsub.f32 %v835, %v939
  %v996 = vsub.f32 %v840, %v939
  %v997 = vsub.f32 %v843, %v939
  %v998 = vsub.f32 %v848, %v939
  %v999 = vsub.f32 %v851, %v939
  %v1000 = vsub.f32 %v856, %v939
  %v1001 = vsub.f32 %v859, %v939
  %v1002 = vsub.f32 %v864, %v939
  %v1003 = vsub.f32 %v867, %v939
  %v1004 = vmul.f32 %v940, %v940
  %v1005 = vmul.f32 %v941, %v941
  %v1006 = vmul.f32 %v942, %v942
  %v1007 = vmul.f32 %v943, %v943
  %v1008 = vmul.f32 %v944, %v944
  %v1009 = vmul.f32 %v945, %v945
  %v1010 = vmul.f32 %v946, %v946
  %v1011 = vmul.f32 %v947, %v947
  %v1012 = vmul.f32 %v948, %v948
  %v1013 = vmul.f32 %v949, %v949
  %v1014 = vmul.f32 %v950, %v950
  %v1015 = vmul.f32 %v951, %v951
  %v1016 = vmul.f32 %v952, %v952
  %v1017 = vmul.f32 %v953, %v953
  %v1018 = vmul.f32 %v954, %v954
  %v1019 = vmul.f32 %v955, %v955
  %v1020 = vmul.f32 %v956, %v956
  %v1021 = vmul.f32 %v957, %v957
  %v1022 = vmul.f32 %v958, %v958
  %v1023 = vmul.f32 %v959, %v959
  %v1024 = vmul.f32 %v960, %v960
  %v1025 = vmul.f32 %v961, %v961
  %v1026 = vmul.f32 %v962, %v962
  %v1027 = vmul.f32 %v963, %v963
  %v1028 = vmul.f32 %v964, %v964
  %v1029 = vmul.f32 %v965, %v965
  %v1030 = vmul.f32 %v966, %v966
  %v1031 = vmul.f32 %v967, %v967
  %v1032 = vmul.f32 %v968, %v968
  %v1033 = vmul.f32 %v969, %v969
  %v1034 = vmul.f32 %v970, %v970
  %v1035 = vmul.f32 %v971, %v971
  %v1036 = vmul.f32 %v972, %v972
  %v1037 = vmul.f32 %v973, %v973
  %v1038 = vmul.f32 %v974, %v974
  %v1039 = vmul.f32 %v975, %v975
  %v1040 = vmul.f32 %v976, %v976
  %v1041 = vmul.f32 %v977, %v977
  %v1042 = vmul.f32 %v978, %v978
  %v1043 = vmul.f32 %v979, %v979
  %v1044 = vmul.f32 %v980, %v980
  %v1045 = vmul.f32 %v981, %v981
  %v1046 = vmul.f32 %v982, %v982
  %v1047 = vmul.f32 %v983, %v983
  %v1048 = vmul.f32 %v984, %v984
  %v1049 = vmul.f32 %v985, %v985
  %v1050 = vmul.f32 %v986, %v986
  %v1051 = vmul.f32 %v987, %v987
  %v1052 = vmul.f32 %v988, %v988
  %v1053 = vmul.f32 %v989, %v989
  %v1054 = vmul.f32 %v990, %v990
  %v1055 = vmul.f32 %v991, %v991
  %v1056 = vmul.f32 %v992, %v992
  %v1057 = vmul.f32 %v993, %v993
  %v1058 = vmul.f32 %v994, %v994
  %v1059 = vmul.f32 %v995, %v995
  %v1060 = vmul.f32 %v996, %v996
  %v1061 = vmul.f32 %v997, %v997
  %v1062 = vmul.f32 %v998, %v998
  %v1063 = vmul.f32 %v999, %v999
  %v1064 = vmul.f32 %v1000, %v1000
  %v1065 = vmul.f32 %v1001, %v1001
  %v1066 = vmul.f32 %v1002, %v1002
  %v1067 = vmul.f32 %v1003, %v1003
  %v1068 = vadd.f32 %v1004, %v1005
  %v1069 = vadd.f32 %v1068, %v1006
  %v1070 = vadd.f32 %v1069, %v1007
  %v1071 = vadd.f32 %v1070, %v1008
  %v1072 = vadd.f32 %v1071, %v1009
  %v1073 = vadd.f32 %v1072, %v1010
  %v1074 = vadd.f32 %v1073, %v1011
  %v1075 = vadd.f32 %v1074, %v1012
  %v1076 = vadd.f32 %v1075, %v1013
  %v1077 = vadd.f32 %v1076, %v1014
  %v1078 = vadd.f32 %v1077, %v1015
  %v1079 = vadd.f32 %v1078, %v1016
  %v1080 = vadd.f32 %v1079, %v1017
  %v1081 = vadd.f32 %v1080, %v1018
  %v1082 = vadd.f32 %v1081, %v1019
  %v1083 = vadd.f32 %v1082, %v1020
  %v1084 = vadd.f32 %v1083, %v1021
  %v1085 = vadd.f32 %v1084, %v1022
  %v1086 = vadd.f32 %v1085, %v1023
  %v1087 = vadd.f32 %v1086, %v1024
  %v1088 = vadd.f32 %v1087, %v1025
  %v1089 = vadd.f32 %v1088, %v1026
  %v1090 = vadd.f32 %v1089, %v1027
  %v1091 = vadd.f32 %v1090, %v1028
  %v1092 = vadd.f32 %v1091, %v1029
  %v1093 = vadd.f32 %v1092, %v1030
  %v1094 = vadd.f32 %v1093, %v1031
  %v1095 = vadd.f32 %v1094, %v1032
  %v1096 = vadd.f32 %v1095, %v1033
  %v1097 = vadd.f32 %v1096, %v1034
  %v1098 = vadd.f32 %v1097, %v1035
  %v1099 = vadd.f32 %v1098, %v1036
  %v1100 = vadd.f32 %v1099, %v1037
  %v1101 = vadd.f32 %v1100, %v1038
  %v1102 = vadd.f32 %v1101, %v1039
  %v1103 = vadd.f32 %v1102, %v1040
  %v1104 = vadd.f32 %v1103, %v1041
  %v1105 = vadd.f32 %v1104, %v1042
  %v1106 = vadd.f32 %v1105, %v1043
  %v1107 = vadd.f32 %v1106, %v1044
  %v1108 = vadd.f32 %v1107, %v1045
  %v1109 = vadd.f32 %v1108, %v1046
  %v1110 = vadd.f32 %v1109, %v1047
  %v1111 = vadd.f32 %v1110, %v1048
  %v1112 = vadd.f32 %v1111, %v1049
  %v1113 = vadd.f32 %v1112, %v1050
  %v1114 = vadd.f32 %v1113, %v1051
  %v1115 = vadd.f32 %v1114, %v1052
  %v1116 = vadd.f32 %v1115, %v1053
  %v1117 = vadd.f32 %v1116, %v1054
  %v1118 = vadd.f32 %v1117, %v1055
  %v1119 = vadd.f32 %v1118, %v1056
  %v1120 = vadd.f32 %v1119, %v1057
  %v1121 = vadd.f32 %v1120, %v1058
  %v1122 = vadd.f32 %v1121, %v1059
  %v1123 = vadd.f32 %v1122, %v1060
  %v1124 = vadd.f32 %v1123, %v1061
  %v1125 = vadd.f32 %v1124, %v1062
  %v1126 = vadd.f32 %v1125, %v1063
  %v1127 = vadd.f32 %v1126, %v1064
  %v1128 = vadd.f32 %v1127, %v1065
  %v1129 = vadd.f32 %v1128, %v1066
  %v1130 = vadd.f32 %v1129, %v1067
  %v1131 = vrot.slane %v1130, 4
  %v1132 = vadd.f32 %v1130, %v1131
  %v1133 = vrot.slane %v1132, 2
  %v1134 = vadd.f32 %v1132, %v1133
  %v1135 = vrot.slane %v1134, 1
  %v1136 = vadd.f32 %v1134, %v1135
  %v1137 = vmul.f32 %v1136, 0.001953125
  %v1138 = vadd.f32 %v1137, 1e-05
  %v1139 = vrsqrt.pop %v1138
  %v1140 = vmul.f32 %v940, %v1139
  %v1141 = vmul.f32 %v941, %v1139
  %v1142 = vmul.f32 %v942, %v1139
  %v1143 = vmul.f32 %v943, %v1139
  %v1144 = vmul.f32 %v944, %v1139
  %v1145 = vmul.f32 %v945, %v1139
  %v1146 = vmul.f32 %v946, %v1139
  %v1147 = vmul.f32 %v947, %v1139
  %v1148 = vmul.f32 %v948, %v1139
  %v1149 = vmul.f32 %v949, %v1139
  %v1150 = vmul.f32 %v950, %v1139
  %v1151 = vmul.f32 %v951, %v1139
  %v1152 = vmul.f32 %v952, %v1139
  %v1153 = vmul.f32 %v953, %v1139
  %v1154 = vmul.f32 %v954, %v1139
  %v1155 = vmul.f32 %v955, %v1139
  %v1156 = vmul.f32 %v956, %v1139
  %v1157 = vmul.f32 %v957, %v1139
  %v1158 = vmul.f32 %v958, %v1139
  %v1159 = vmul.f32 %v959, %v1139
  %v1160 = vmul.f32 %v960, %v1139
  %v1161 = vmul.f32 %v961, %v1139
  %v1162 = vmul.f32 %v962, %v1139
  %v1163 = vmul.f32 %v963, %v1139
  %v1164 = vmul.f32 %v964, %v1139
  %v1165 = vmul.f32 %v965, %v1139
  %v1166 = vmul.f32 %v966, %v1139
  %v1167 = vmul.f32 %v967, %v1139
  %v1168 = vmul.f32 %v968, %v1139
  %v1169 = vmul.f32 %v969, %v1139
  %v1170 = vmul.f32 %v970, %v1139
  %v1171 = vmul.f32 %v971, %v1139
  %v1172 = vmul.f32 %v972, %v1139
  %v1173 = vmul.f32 %v973, %v1139
  %v1174 = vmul.f32 %v974, %v1139
  %v1175 = vmul.f32 %v975, %v1139
  %v1176 = vmul.f32 %v976, %v1139
  %v1177 = vmul.f32 %v977, %v1139
  %v1178 = vmul.f32 %v978, %v1139
  %v1179 = vmul.f32 %v979, %v1139
  %v1180 = vmul.f32 %v980, %v1139
  %v1181 = vmul.f32 %v981, %v1139
  %v1182 = vmul.f32 %v982, %v1139
  %v1183 = vmul.f32 %v983, %v1139
  %v1184 = vmul.f32 %v984, %v1139
  %v1185 = vmul.f32 %v985, %v1139
  %v1186 = vmul.f32 %v986, %v1139
  %v1187 = vmul.f32 %v987, %v1139
  %v1188 = vmul.f32 %v988, %v1139
  %v1189 = vmul.f32 %v989, %v1139
  %v1190 = vmul.f32 %v990, %v1139
  %v1191 = vmul.f32 %v991, %v1139
  %v1192 = vmul.f32 %v992, %v1139
  %v1193 = vmul.f32 %v993, %v1139
  %v1194 = vmul.f32 %v994, %v1139
  %v1195 = vmul.f32 %v995, %v1139
  %v1196 = vmul.f32 %v996, %v1139
  %v1197 = vmul.f32 %v997, %v1139
  %v1198 = vmul.f32 %v998, %v1139
  %v1199 = vmul.f32 %v999, %v1139
  %v1200 = vmul.f32 %v1000, %v1139
  %v1201 = vmul.f32 %v1001, %v1139
  %v1202 = vmul.f32 %v1002, %v1139
  %v1203 = vmul.f32 %v1003, %v1139
  %v1204 = vld [vmem:[%s3] sm:$0x1]
  %v1206 = vlaneseq
  %v1207 = vshrl.u32 %v1206, 7
  %v1208 = vsub.s32 0, %v1207
  %v1209 = vrot.slane %v1204, %v1208
  %v1211 = vmul.f32 %v1140, %v1209
  %v1212 = vmul.f32 %v1141, %v1209
  %v1213 = vmul.f32 %v1142, %v1209
  %v1214 = vmul.f32 %v1143, %v1209
  %v1215 = vmul.f32 %v1144, %v1209
  %v1216 = vmul.f32 %v1145, %v1209
  %v1217 = vmul.f32 %v1146, %v1209
  %v1218 = vmul.f32 %v1147, %v1209
  %v1219 = vmul.f32 %v1148, %v1209
  %v1220 = vmul.f32 %v1149, %v1209
  %v1221 = vmul.f32 %v1150, %v1209
  %v1222 = vmul.f32 %v1151, %v1209
  %v1223 = vmul.f32 %v1152, %v1209
  %v1224 = vmul.f32 %v1153, %v1209
  %v1225 = vmul.f32 %v1154, %v1209
  %v1226 = vmul.f32 %v1155, %v1209
  %v1227 = vmul.f32 %v1156, %v1209
  %v1228 = vmul.f32 %v1157, %v1209
  %v1229 = vmul.f32 %v1158, %v1209
  %v1230 = vmul.f32 %v1159, %v1209
  %v1231 = vmul.f32 %v1160, %v1209
  %v1232 = vmul.f32 %v1161, %v1209
  %v1233 = vmul.f32 %v1162, %v1209
  %v1234 = vmul.f32 %v1163, %v1209
  %v1235 = vmul.f32 %v1164, %v1209
  %v1236 = vmul.f32 %v1165, %v1209
  %v1237 = vmul.f32 %v1166, %v1209
  %v1238 = vmul.f32 %v1167, %v1209
  %v1239 = vmul.f32 %v1168, %v1209
  %v1240 = vmul.f32 %v1169, %v1209
  %v1241 = vmul.f32 %v1170, %v1209
  %v1242 = vmul.f32 %v1171, %v1209
  %v1243 = vmul.f32 %v1172, %v1209
  %v1244 = vmul.f32 %v1173, %v1209
  %v1245 = vmul.f32 %v1174, %v1209
  %v1246 = vmul.f32 %v1175, %v1209
  %v1247 = vmul.f32 %v1176, %v1209
  %v1248 = vmul.f32 %v1177, %v1209
  %v1249 = vmul.f32 %v1178, %v1209
  %v1250 = vmul.f32 %v1179, %v1209
  %v1251 = vmul.f32 %v1180, %v1209
  %v1252 = vmul.f32 %v1181, %v1209
  %v1253 = vmul.f32 %v1182, %v1209
  %v1254 = vmul.f32 %v1183, %v1209
  %v1255 = vmul.f32 %v1184, %v1209
  %v1256 = vmul.f32 %v1185, %v1209
  %v1257 = vmul.f32 %v1186, %v1209
  %v1258 = vmul.f32 %v1187, %v1209
  %v1259 = vmul.f32 %v1188, %v1209
  %v1260 = vmul.f32 %v1189, %v1209
  %v1261 = vmul.f32 %v1190, %v1209
  %v1262 = vmul.f32 %v1191, %v1209
  %v1263 = vmul.f32 %v1192, %v1209
  %v1264 = vmul.f32 %v1193, %v1209
  %v1265 = vmul.f32 %v1194, %v1209
  %v1266 = vmul.f32 %v1195, %v1209
  %v1267 = vmul.f32 %v1196, %v1209
  %v1268 = vmul.f32 %v1197, %v1209
  %v1269 = vmul.f32 %v1198, %v1209
  %v1270 = vmul.f32 %v1199, %v1209
  %v1271 = vmul.f32 %v1200, %v1209
  %v1272 = vmul.f32 %v1201, %v1209
  %v1273 = vmul.f32 %v1202, %v1209
  %v1274 = vmul.f32 %v1203, %v1209
  %v1275 = vld [vmem:[%s4] sm:$0x1]
  %v1277 = vlaneseq
  %v1278 = vshrl.u32 %v1277, 7
  %v1279 = vsub.s32 0, %v1278
  %v1280 = vrot.slane %v1275, %v1279
  %v1282 = vadd.f32 %v1211, %v1280
  %v1283 = vadd.f32 %v1212, %v1280
  %v1284 = vadd.f32 %v1213, %v1280
  %v1285 = vadd.f32 %v1214, %v1280
  %v1286 = vadd.f32 %v1215, %v1280
  %v1287 = vadd.f32 %v1216, %v1280
  %v1288 = vadd.f32 %v1217, %v1280
  %v1289 = vadd.f32 %v1218, %v1280
  %v1290 = vadd.f32 %v1219, %v1280
  %v1291 = vadd.f32 %v1220, %v1280
  %v1292 = vadd.f32 %v1221, %v1280
  %v1293 = vadd.f32 %v1222, %v1280
  %v1294 = vadd.f32 %v1223, %v1280
  %v1295 = vadd.f32 %v1224, %v1280
  %v1296 = vadd.f32 %v1225, %v1280
  %v1297 = vadd.f32 %v1226, %v1280
  %v1298 = vadd.f32 %v1227, %v1280
  %v1299 = vadd.f32 %v1228, %v1280
  %v1300 = vadd.f32 %v1229, %v1280
  %v1301 = vadd.f32 %v1230, %v1280
  %v1302 = vadd.f32 %v1231, %v1280
  %v1303 = vadd.f32 %v1232, %v1280
  %v1304 = vadd.f32 %v1233, %v1280
  %v1305 = vadd.f32 %v1234, %v1280
  %v1306 = vadd.f32 %v1235, %v1280
  %v1307 = vadd.f32 %v1236, %v1280
  %v1308 = vadd.f32 %v1237, %v1280
  %v1309 = vadd.f32 %v1238, %v1280
  %v1310 = vadd.f32 %v1239, %v1280
  %v1311 = vadd.f32 %v1240, %v1280
  %v1312 = vadd.f32 %v1241, %v1280
  %v1313 = vadd.f32 %v1242, %v1280
  %v1314 = vadd.f32 %v1243, %v1280
  %v1315 = vadd.f32 %v1244, %v1280
  %v1316 = vadd.f32 %v1245, %v1280
  %v1317 = vadd.f32 %v1246, %v1280
  %v1318 = vadd.f32 %v1247, %v1280
  %v1319 = vadd.f32 %v1248, %v1280
  %v1320 = vadd.f32 %v1249, %v1280
  %v1321 = vadd.f32 %v1250, %v1280
  %v1322 = vadd.f32 %v1251, %v1280
  %v1323 = vadd.f32 %v1252, %v1280
  %v1324 = vadd.f32 %v1253, %v1280
  %v1325 = vadd.f32 %v1254, %v1280
  %v1326 = vadd.f32 %v1255, %v1280
  %v1327 = vadd.f32 %v1256, %v1280
  %v1328 = vadd.f32 %v1257, %v1280
  %v1329 = vadd.f32 %v1258, %v1280
  %v1330 = vadd.f32 %v1259, %v1280
  %v1331 = vadd.f32 %v1260, %v1280
  %v1332 = vadd.f32 %v1261, %v1280
  %v1333 = vadd.f32 %v1262, %v1280
  %v1334 = vadd.f32 %v1263, %v1280
  %v1335 = vadd.f32 %v1264, %v1280
  %v1336 = vadd.f32 %v1265, %v1280
  %v1337 = vadd.f32 %v1266, %v1280
  %v1338 = vadd.f32 %v1267, %v1280
  %v1339 = vadd.f32 %v1268, %v1280
  %v1340 = vadd.f32 %v1269, %v1280
  %v1341 = vadd.f32 %v1270, %v1280
  %v1342 = vadd.f32 %v1271, %v1280
  %v1343 = vadd.f32 %v1272, %v1280
  %v1344 = vadd.f32 %v1273, %v1280
  %v1345 = vadd.f32 %v1274, %v1280
  %v1346 = vmax.f32 %v1282, 0.0
  %v1347 = vmax.f32 %v1283, 0.0
  %v1348 = vmax.f32 %v1284, 0.0
  %v1349 = vmax.f32 %v1285, 0.0
  %v1350 = vmax.f32 %v1286, 0.0
  %v1351 = vmax.f32 %v1287, 0.0
  %v1352 = vmax.f32 %v1288, 0.0
  %v1353 = vmax.f32 %v1289, 0.0
  %v1354 = vmax.f32 %v1290, 0.0
  %v1355 = vmax.f32 %v1291, 0.0
  %v1356 = vmax.f32 %v1292, 0.0
  %v1357 = vmax.f32 %v1293, 0.0
  %v1358 = vmax.f32 %v1294, 0.0
  %v1359 = vmax.f32 %v1295, 0.0
  %v1360 = vmax.f32 %v1296, 0.0
  %v1361 = vmax.f32 %v1297, 0.0
  %v1362 = vmax.f32 %v1298, 0.0
  %v1363 = vmax.f32 %v1299, 0.0
  %v1364 = vmax.f32 %v1300, 0.0
  %v1365 = vmax.f32 %v1301, 0.0
  %v1366 = vmax.f32 %v1302, 0.0
  %v1367 = vmax.f32 %v1303, 0.0
  %v1368 = vmax.f32 %v1304, 0.0
  %v1369 = vmax.f32 %v1305, 0.0
  %v1370 = vmax.f32 %v1306, 0.0
  %v1371 = vmax.f32 %v1307, 0.0
  %v1372 = vmax.f32 %v1308, 0.0
  %v1373 = vmax.f32 %v1309, 0.0
  %v1374 = vmax.f32 %v1310, 0.0
  %v1375 = vmax.f32 %v1311, 0.0
  %v1376 = vmax.f32 %v1312, 0.0
  %v1377 = vmax.f32 %v1313, 0.0
  %v1378 = vmax.f32 %v1314, 0.0
  %v1379 = vmax.f32 %v1315, 0.0
  %v1380 = vmax.f32 %v1316, 0.0
  %v1381 = vmax.f32 %v1317, 0.0
  %v1382 = vmax.f32 %v1318, 0.0
  %v1383 = vmax.f32 %v1319, 0.0
  %v1384 = vmax.f32 %v1320, 0.0
  %v1385 = vmax.f32 %v1321, 0.0
  %v1386 = vmax.f32 %v1322, 0.0
  %v1387 = vmax.f32 %v1323, 0.0
  %v1388 = vmax.f32 %v1324, 0.0
  %v1389 = vmax.f32 %v1325, 0.0
  %v1390 = vmax.f32 %v1326, 0.0
  %v1391 = vmax.f32 %v1327, 0.0
  %v1392 = vmax.f32 %v1328, 0.0
  %v1393 = vmax.f32 %v1329, 0.0
  %v1394 = vmax.f32 %v1330, 0.0
  %v1395 = vmax.f32 %v1331, 0.0
  %v1396 = vmax.f32 %v1332, 0.0
  %v1397 = vmax.f32 %v1333, 0.0
  %v1398 = vmax.f32 %v1334, 0.0
  %v1399 = vmax.f32 %v1335, 0.0
  %v1400 = vmax.f32 %v1336, 0.0
  %v1401 = vmax.f32 %v1337, 0.0
  %v1402 = vmax.f32 %v1338, 0.0
  %v1403 = vmax.f32 %v1339, 0.0
  %v1404 = vmax.f32 %v1340, 0.0
  %v1405 = vmax.f32 %v1341, 0.0
  %v1406 = vmax.f32 %v1342, 0.0
  %v1407 = vmax.f32 %v1343, 0.0
  %v1408 = vmax.f32 %v1344, 0.0
  %v1409 = vmax.f32 %v1345, 0.0
  %v1410 = vpack.c.bf16 %v1347, %v1346
  %v1411 = vpack.c.bf16 %v1349, %v1348
  %v1412 = vpack.c.bf16 %v1351, %v1350
  %v1413 = vpack.c.bf16 %v1353, %v1352
  %v1414 = vpack.c.bf16 %v1355, %v1354
  %v1415 = vpack.c.bf16 %v1357, %v1356
  %v1416 = vpack.c.bf16 %v1359, %v1358
  %v1417 = vpack.c.bf16 %v1361, %v1360
  %v1418 = vpack.c.bf16 %v1363, %v1362
  %v1419 = vpack.c.bf16 %v1365, %v1364
  %v1420 = vpack.c.bf16 %v1367, %v1366
  %v1421 = vpack.c.bf16 %v1369, %v1368
  %v1422 = vpack.c.bf16 %v1371, %v1370
  %v1423 = vpack.c.bf16 %v1373, %v1372
  %v1424 = vpack.c.bf16 %v1375, %v1374
  %v1425 = vpack.c.bf16 %v1377, %v1376
  %v1426 = vpack.c.bf16 %v1379, %v1378
  %v1427 = vpack.c.bf16 %v1381, %v1380
  %v1428 = vpack.c.bf16 %v1383, %v1382
  %v1429 = vpack.c.bf16 %v1385, %v1384
  %v1430 = vpack.c.bf16 %v1387, %v1386
  %v1431 = vpack.c.bf16 %v1389, %v1388
  %v1432 = vpack.c.bf16 %v1391, %v1390
  %v1433 = vpack.c.bf16 %v1393, %v1392
  %v1434 = vpack.c.bf16 %v1395, %v1394
  %v1435 = vpack.c.bf16 %v1397, %v1396
  %v1436 = vpack.c.bf16 %v1399, %v1398
  %v1437 = vpack.c.bf16 %v1401, %v1400
  %v1438 = vpack.c.bf16 %v1403, %v1402
  %v1439 = vpack.c.bf16 %v1405, %v1404
  %v1440 = vpack.c.bf16 %v1407, %v1406
  %v1441 = vpack.c.bf16 %v1409, %v1408
  %v1474 = vunpack.c.l.b16 %v1410
  %v1475 = vunpack.c.h.b16 %v1410
  %v1476 = vunpack.c.l.b16 %v1411
  %v1477 = vunpack.c.h.b16 %v1411
  %v1478 = vunpack.c.l.b16 %v1412
  %v1479 = vunpack.c.h.b16 %v1412
  %v1480 = vunpack.c.l.b16 %v1413
  %v1481 = vunpack.c.h.b16 %v1413
  %v1482 = vunpack.c.l.b16 %v1414
  %v1483 = vunpack.c.h.b16 %v1414
  %v1484 = vunpack.c.l.b16 %v1415
  %v1485 = vunpack.c.h.b16 %v1415
  %v1486 = vunpack.c.l.b16 %v1416
  %v1487 = vunpack.c.h.b16 %v1416
  %v1488 = vunpack.c.l.b16 %v1417
  %v1489 = vunpack.c.h.b16 %v1417
  %v1490 = vunpack.c.l.b16 %v1418
  %v1491 = vunpack.c.h.b16 %v1418
  %v1492 = vunpack.c.l.b16 %v1419
  %v1493 = vunpack.c.h.b16 %v1419
  %v1494 = vunpack.c.l.b16 %v1420
  %v1495 = vunpack.c.h.b16 %v1420
  %v1496 = vunpack.c.l.b16 %v1421
  %v1497 = vunpack.c.h.b16 %v1421
  %v1498 = vunpack.c.l.b16 %v1422
  %v1499 = vunpack.c.h.b16 %v1422
  %v1500 = vunpack.c.l.b16 %v1423
  %v1501 = vunpack.c.h.b16 %v1423
  %v1502 = vunpack.c.l.b16 %v1424
  %v1503 = vunpack.c.h.b16 %v1424
  %v1504 = vunpack.c.l.b16 %v1425
  %v1505 = vunpack.c.h.b16 %v1425
  %v1506 = vunpack.c.l.b16 %v1426
  %v1507 = vunpack.c.h.b16 %v1426
  %v1508 = vunpack.c.l.b16 %v1427
  %v1509 = vunpack.c.h.b16 %v1427
  %v1510 = vunpack.c.l.b16 %v1428
  %v1511 = vunpack.c.h.b16 %v1428
  %v1512 = vunpack.c.l.b16 %v1429
  %v1513 = vunpack.c.h.b16 %v1429
  %v1514 = vunpack.c.l.b16 %v1430
  %v1515 = vunpack.c.h.b16 %v1430
  %v1516 = vunpack.c.l.b16 %v1431
  %v1517 = vunpack.c.h.b16 %v1431
  %v1518 = vunpack.c.l.b16 %v1432
  %v1519 = vunpack.c.h.b16 %v1432
  %v1520 = vunpack.c.l.b16 %v1433
  %v1521 = vunpack.c.h.b16 %v1433
  %v1522 = vunpack.c.l.b16 %v1434
  %v1523 = vunpack.c.h.b16 %v1434
  %v1524 = vunpack.c.l.b16 %v1435
  %v1525 = vunpack.c.h.b16 %v1435
  %v1526 = vunpack.c.l.b16 %v1436
  %v1527 = vunpack.c.h.b16 %v1436
  %v1528 = vunpack.c.l.b16 %v1437
  %v1529 = vunpack.c.h.b16 %v1437
  %v1530 = vunpack.c.l.b16 %v1438
  %v1531 = vunpack.c.h.b16 %v1438
  %v1532 = vunpack.c.l.b16 %v1439
  %v1533 = vunpack.c.h.b16 %v1439
  %v1534 = vunpack.c.l.b16 %v1440
  %v1535 = vunpack.c.h.b16 %v1440
  %v1536 = vunpack.c.l.b16 %v1441
  %v1537 = vunpack.c.h.b16 %v1441
  %v1538 = vpack.c.b16 %v1474, %v1474
  %v1539 = vpack.c.b16 %v1475, %v1475
  %v1540 = vpack.c.b16 %v1476, %v1476
  %v1541 = vpack.c.b16 %v1477, %v1477
  %v1542 = vpack.c.b16 %v1478, %v1478
  %v1543 = vpack.c.b16 %v1479, %v1479
  %v1544 = vpack.c.b16 %v1480, %v1480
  %v1545 = vpack.c.b16 %v1481, %v1481
  %v1546 = vpack.c.b16 %v1482, %v1482
  %v1547 = vpack.c.b16 %v1483, %v1483
  %v1548 = vpack.c.b16 %v1484, %v1484
  %v1549 = vpack.c.b16 %v1485, %v1485
  %v1550 = vpack.c.b16 %v1486, %v1486
  %v1551 = vpack.c.b16 %v1487, %v1487
  %v1552 = vpack.c.b16 %v1488, %v1488
  %v1553 = vpack.c.b16 %v1489, %v1489
  %v1554 = vpack.c.b16 %v1490, %v1490
  %v1555 = vpack.c.b16 %v1491, %v1491
  %v1556 = vpack.c.b16 %v1492, %v1492
  %v1557 = vpack.c.b16 %v1493, %v1493
  %v1558 = vpack.c.b16 %v1494, %v1494
  %v1559 = vpack.c.b16 %v1495, %v1495
  %v1560 = vpack.c.b16 %v1496, %v1496
  %v1561 = vpack.c.b16 %v1497, %v1497
  %v1562 = vpack.c.b16 %v1498, %v1498
  %v1563 = vpack.c.b16 %v1499, %v1499
  %v1564 = vpack.c.b16 %v1500, %v1500
  %v1565 = vpack.c.b16 %v1501, %v1501
  %v1566 = vpack.c.b16 %v1502, %v1502
  %v1567 = vpack.c.b16 %v1503, %v1503
  %v1568 = vpack.c.b16 %v1504, %v1504
  %v1569 = vpack.c.b16 %v1505, %v1505
  %v1570 = vpack.c.b16 %v1506, %v1506
  %v1571 = vpack.c.b16 %v1507, %v1507
  %v1572 = vpack.c.b16 %v1508, %v1508
  %v1573 = vpack.c.b16 %v1509, %v1509
  %v1574 = vpack.c.b16 %v1510, %v1510
  %v1575 = vpack.c.b16 %v1511, %v1511
  %v1576 = vpack.c.b16 %v1512, %v1512
  %v1577 = vpack.c.b16 %v1513, %v1513
  %v1578 = vpack.c.b16 %v1514, %v1514
  %v1579 = vpack.c.b16 %v1515, %v1515
  %v1580 = vpack.c.b16 %v1516, %v1516
  %v1581 = vpack.c.b16 %v1517, %v1517
  %v1582 = vpack.c.b16 %v1518, %v1518
  %v1583 = vpack.c.b16 %v1519, %v1519
  %v1584 = vpack.c.b16 %v1520, %v1520
  %v1585 = vpack.c.b16 %v1521, %v1521
  %v1586 = vpack.c.b16 %v1522, %v1522
  %v1587 = vpack.c.b16 %v1523, %v1523
  %v1588 = vpack.c.b16 %v1524, %v1524
  %v1589 = vpack.c.b16 %v1525, %v1525
  %v1590 = vpack.c.b16 %v1526, %v1526
  %v1591 = vpack.c.b16 %v1527, %v1527
  %v1592 = vpack.c.b16 %v1528, %v1528
  %v1593 = vpack.c.b16 %v1529, %v1529
  %v1594 = vpack.c.b16 %v1530, %v1530
  %v1595 = vpack.c.b16 %v1531, %v1531
  %v1596 = vpack.c.b16 %v1532, %v1532
  %v1597 = vpack.c.b16 %v1533, %v1533
  %v1598 = vpack.c.b16 %v1534, %v1534
  %v1599 = vpack.c.b16 %v1535, %v1535
  %v1600 = vpack.c.b16 %v1536, %v1536
  %v1601 = vpack.c.b16 %v1537, %v1537
  %1666 = vst [vmem:[%s5] sm:$0xf] %v1538
  %1667 = vst [vmem:[%s5 + $0x4] sm:$0xf] %v1539
  %1668 = vst [vmem:[%s5 + $0x8] sm:$0xf] %v1540
  %1669 = vst [vmem:[%s5 + $0xc] sm:$0xf] %v1541
  %1670 = vst [vmem:[%s5 + $0x10] sm:$0xf] %v1542
  %1671 = vst [vmem:[%s5 + $0x14] sm:$0xf] %v1543
  %1672 = vst [vmem:[%s5 + $0x18] sm:$0xf] %v1544
  %1673 = vst [vmem:[%s5 + $0x1c] sm:$0xf] %v1545
  %1674 = vst [vmem:[%s5 + $0x20] sm:$0xf] %v1546
  %1675 = vst [vmem:[%s5 + $0x24] sm:$0xf] %v1547
  %1676 = vst [vmem:[%s5 + $0x28] sm:$0xf] %v1548
  %1677 = vst [vmem:[%s5 + $0x2c] sm:$0xf] %v1549
  %1678 = vst [vmem:[%s5 + $0x30] sm:$0xf] %v1550
  %1679 = vst [vmem:[%s5 + $0x34] sm:$0xf] %v1551
  %1680 = vst [vmem:[%s5 + $0x38] sm:$0xf] %v1552
  %1681 = vst [vmem:[%s5 + $0x3c] sm:$0xf] %v1553
  %1682 = vst [vmem:[%s5 + $0x40] sm:$0xf] %v1554
  %1683 = vst [vmem:[%s5 + $0x44] sm:$0xf] %v1555
  %1684 = vst [vmem:[%s5 + $0x48] sm:$0xf] %v1556
  %1685 = vst [vmem:[%s5 + $0x4c] sm:$0xf] %v1557
  %1686 = vst [vmem:[%s5 + $0x50] sm:$0xf] %v1558
  %1687 = vst [vmem:[%s5 + $0x54] sm:$0xf] %v1559
  %1688 = vst [vmem:[%s5 + $0x58] sm:$0xf] %v1560
  %1689 = vst [vmem:[%s5 + $0x5c] sm:$0xf] %v1561
  %1690 = vst [vmem:[%s5 + $0x60] sm:$0xf] %v1562
  %1691 = vst [vmem:[%s5 + $0x64] sm:$0xf] %v1563
  %1692 = vst [vmem:[%s5 + $0x68] sm:$0xf] %v1564
  %1693 = vst [vmem:[%s5 + $0x6c] sm:$0xf] %v1565
  %1694 = vst [vmem:[%s5 + $0x70] sm:$0xf] %v1566
  %1695 = vst [vmem:[%s5 + $0x74] sm:$0xf] %v1567
  %1696 = vst [vmem:[%s5 + $0x78] sm:$0xf] %v1568
  %1697 = vst [vmem:[%s5 + $0x7c] sm:$0xf] %v1569
  %1698 = vst [vmem:[%s5 + $0x80] sm:$0xf] %v1570
  %1699 = vst [vmem:[%s5 + $0x84] sm:$0xf] %v1571
  %1700 = vst [vmem:[%s5 + $0x88] sm:$0xf] %v1572
  %1701 = vst [vmem:[%s5 + $0x8c] sm:$0xf] %v1573
  %1702 = vst [vmem:[%s5 + $0x90] sm:$0xf] %v1574
  %1703 = vst [vmem:[%s5 + $0x94] sm:$0xf] %v1575
  %1704 = vst [vmem:[%s5 + $0x98] sm:$0xf] %v1576
  %1705 = vst [vmem:[%s5 + $0x9c] sm:$0xf] %v1577
  %1706 = vst [vmem:[%s5 + $0xa0] sm:$0xf] %v1578
  %1707 = vst [vmem:[%s5 + $0xa4] sm:$0xf] %v1579
  %1708 = vst [vmem:[%s5 + $0xa8] sm:$0xf] %v1580
  %1709 = vst [vmem:[%s5 + $0xac] sm:$0xf] %v1581
  %1710 = vst [vmem:[%s5 + $0xb0] sm:$0xf] %v1582
  %1711 = vst [vmem:[%s5 + $0xb4] sm:$0xf] %v1583
  %1712 = vst [vmem:[%s5 + $0xb8] sm:$0xf] %v1584
  %1713 = vst [vmem:[%s5 + $0xbc] sm:$0xf] %v1585
  %1714 = vst [vmem:[%s5 + $0xc0] sm:$0xf] %v1586
  %1715 = vst [vmem:[%s5 + $0xc4] sm:$0xf] %v1587
  %1716 = vst [vmem:[%s5 + $0xc8] sm:$0xf] %v1588
  %1717 = vst [vmem:[%s5 + $0xcc] sm:$0xf] %v1589
  %1718 = vst [vmem:[%s5 + $0xd0] sm:$0xf] %v1590
  %1719 = vst [vmem:[%s5 + $0xd4] sm:$0xf] %v1591
  %1720 = vst [vmem:[%s5 + $0xd8] sm:$0xf] %v1592
  %1721 = vst [vmem:[%s5 + $0xdc] sm:$0xf] %v1593
  %1722 = vst [vmem:[%s5 + $0xe0] sm:$0xf] %v1594
  %1723 = vst [vmem:[%s5 + $0xe4] sm:$0xf] %v1595
  %1724 = vst [vmem:[%s5 + $0xe8] sm:$0xf] %v1596
  %1725 = vst [vmem:[%s5 + $0xec] sm:$0xf] %v1597
  %1726 = vst [vmem:[%s5 + $0xf0] sm:$0xf] %v1598
  %1727 = vst [vmem:[%s5 + $0xf4] sm:$0xf] %v1599
  %1728 = vst [vmem:[%s5 + $0xf8] sm:$0xf] %v1600
  %1729 = vst [vmem:[%s5 + $0xfc] sm:$0xf] %v1601
  // Predicated region
  $region22: #{label_encoder.3} parent=0 // pred_check
    _
  $region23: #{label_encoder.3} parent=0 // pred_check_branch
    %1731 = sbr.rel (0) target = $region25
  $region24: #{label_encoder.3} parent=0 // pred_region
    _
  $region25: #{label_encoder.3} parent=0 // pred_fallthru
    _
  // Predicated region
  $region26: #{label_encoder.3} parent=0 // pred_check
    _
  $region27: #{label_encoder.3} parent=0 // pred_check_branch
    %1733 = sbr.rel (0) target = $region29
  $region28: #{label_encoder.3} parent=0 // pred_region
    _
  $region29: #{label_encoder.3} parent=0 // pred_fallthru
    _

// kernel: label_encoder.4
$region0: #{label_encoder.4}
  #allocation0 [shape = 'u32[]', space=smem, size = 0x4, offset = 0x4, fixed_abs, tag = 'smem constant byte address 0x4 - core index']
  #allocation1 [shape = 'u32[144,128]{1,0:T(1,128)}', space=vmem, size = 0x12000, scoped, tag = 'internal scratch']
  %s0 = inlined_call_operand.vmem [shape: bf16[128,576], index: 0, kind: input, shape index: {}]
  %s1 = inlined_call_operand.vmem [shape: bf16[576,128], index: 1, kind: input, shape index: {}]
  %s2 = inlined_call_operand.vmem [shape: f32[1,128], index: 2, kind: input, shape index: {}]
  %s3 = inlined_call_operand.vmem [shape: f32[1,128], index: 3, kind: input, shape index: {}]
  %s4 = inlined_call_operand.vmem [shape: f32[1,128], index: 4, kind: input, shape index: {}]
  %s5 = inlined_call_operand.vmem [shape: bf16[128,128], index: 5, kind: output, shape index: {}]
  %s6 = sld [smem:[#allocation0]]
  $region30: #{label_encoder.4} parent=0
    _
  %s8 = ssub.s32 1, %s6
  %s9 = scalar_select 0, %s8, %s6
  // Predicated region
  $region2: #{label_encoder.4} parent=0 // pred_check
    _
  $region3: #{label_encoder.4} parent=0 // pred_check_branch
    %11 = sbr.rel (0) target = $region5
  $region4: #{label_encoder.4} parent=0 // pred_region
    _
  $region5: #{label_encoder.4} parent=0 // pred_fallthru
    _
  // Predicated region
  $region6: #{label_encoder.4} parent=0 // pred_check
    _
  $region7: #{label_encoder.4} parent=0 // pred_check_branch
    %13 = sbr.rel (0) target = $region9
  $region8: #{label_encoder.4} parent=0 // pred_region
    _
  $region9: #{label_encoder.4} parent=0 // pred_fallthru
    _
  // Predicated region
  $region10: #{label_encoder.4} parent=0 // pred_check
    _
  $region11: #{label_encoder.4} parent=0 // pred_check_branch
    %15 = sbr.rel (0) target = $region13
  $region12: #{label_encoder.4} parent=0 // pred_region
    _
  $region13: #{label_encoder.4} parent=0 // pred_fallthru
    _
  // Predicated region
  $region14: #{label_encoder.4} parent=0 // pred_check
    _
  $region15: #{label_encoder.4} parent=0 // pred_check_branch
    %17 = sbr.rel (0) target = $region17
  $region16: #{label_encoder.4} parent=0 // pred_region
    _
  $region17: #{label_encoder.4} parent=0 // pred_fallthru
    _
  // Predicated region
  $region18: #{label_encoder.4} parent=0 // pred_check
    _
  $region19: #{label_encoder.4} parent=0 // pred_check_branch
    %19 = sbr.rel (0) target = $region21
  $region20: #{label_encoder.4} parent=0 // pred_region
    _
  $region21: #{label_encoder.4} parent=0 // pred_fallthru
    _
  %v21 = vld [vmem:[%s0] sm:$0xff]
  %v22 = vld [vmem:[%s0 + $0x8] sm:$0xff]
  %v23 = vld [vmem:[%s0 + $0x10] sm:$0xf]
  %v24 = vld [vmem:[%s0 + $0x14] sm:$0xff]
  %v25 = vld [vmem:[%s0 + $0x1c] sm:$0xff]
  %v26 = vld [vmem:[%s0 + $0x24] sm:$0xf]
  %v27 = vld [vmem:[%s0 + $0x28] sm:$0xff]
  %v28 = vld [vmem:[%s0 + $0x30] sm:$0xff]
  %v29 = vld [vmem:[%s0 + $0x38] sm:$0xf]
  %v30 = vld [vmem:[%s0 + $0x3c] sm:$0xff]
  %v31 = vld [vmem:[%s0 + $0x44] sm:$0xff]
  %v32 = vld [vmem:[%s0 + $0x4c] sm:$0xf]
  %v33 = vld [vmem:[%s0 + $0x50] sm:$0xff]
  %v34 = vld [vmem:[%s0 + $0x58] sm:$0xff]
  %v35 = vld [vmem:[%s0 + $0x60] sm:$0xf]
  %v36 = vld [vmem:[%s0 + $0x64] sm:$0xff]
  %v37 = vld [vmem:[%s0 + $0x6c] sm:$0xff]
  %v38 = vld [vmem:[%s0 + $0x74] sm:$0xf]
  %v39 = vld [vmem:[%s0 + $0x78] sm:$0xff]
  %v40 = vld [vmem:[%s0 + $0x80] sm:$0xff]
  %v41 = vld [vmem:[%s0 + $0x88] sm:$0xf]
  %v42 = vld [vmem:[%s0 + $0x8c] sm:$0xff]
  %v43 = vld [vmem:[%s0 + $0x94] sm:$0xff]
  %v44 = vld [vmem:[%s0 + $0x9c] sm:$0xf]
  %v45 = vld [vmem:[%s0 + $0xa0] sm:$0xff]
  %v46 = vld [vmem:[%s0 + $0xa8] sm:$0xff]
  %v47 = vld [vmem:[%s0 + $0xb0] sm:$0xf]
  %v48 = vld [vmem:[%s0 + $0xb4] sm:$0xff]
  %v49 = vld [vmem:[%s0 + $0xbc] sm:$0xff]
  %v50 = vld [vmem:[%s0 + $0xc4] sm:$0xf]
  %v51 = vld [vmem:[%s0 + $0xc8] sm:$0xff]
  %v52 = vld [vmem:[%s0 + $0xd0] sm:$0xff]
  %v53 = vld [vmem:[%s0 + $0xd8] sm:$0xf]
  %v54 = vld [vmem:[%s0 + $0xdc] sm:$0xff]
  %v55 = vld [vmem:[%s0 + $0xe4] sm:$0xff]
  %v56 = vld [vmem:[%s0 + $0xec] sm:$0xf]
  %v57 = vld [vmem:[%s0 + $0xf0] sm:$0xff]
  %v58 = vld [vmem:[%s0 + $0xf8] sm:$0xff]
  %v59 = vld [vmem:[%s0 + $0x100] sm:$0xf]
  %v60 = vld [vmem:[%s0 + $0x104] sm:$0xff]
  %v61 = vld [vmem:[%s0 + $0x10c] sm:$0xff]
  %v62 = vld [vmem:[%s0 + $0x114] sm:$0xf]
  %v63 = vld [vmem:[%s0 + $0x118] sm:$0xff]
  %v64 = vld [vmem:[%s0 + $0x120] sm:$0xff]
  %v65 = vld [vmem:[%s0 + $0x128] sm:$0xf]
  %v66 = vld [vmem:[%s0 + $0x12c] sm:$0xff]
  %v67 = vld [vmem:[%s0 + $0x134] sm:$0xff]
  %v68 = vld [vmem:[%s0 + $0x13c] sm:$0xf]
  %v69 = vld [vmem:[%s1] sm:$0xf]
  %v70 = vld [vmem:[%s1 + $0x4] sm:$0xf]
  %v71 = vld [vmem:[%s1 + $0x8] sm:$0xf]
  %v72 = vld [vmem:[%s1 + $0xc] sm:$0xf]
  %v73 = vld [vmem:[%s1 + $0x10] sm:$0xf]
  %v74 = vld [vmem:[%s1 + $0x14] sm:$0xf]
  %v75 = vld [vmem:[%s1 + $0x18] sm:$0xf]
  %v76 = vld [vmem:[%s1 + $0x1c] sm:$0xf]
  %v77 = vld [vmem:[%s1 + $0x20] sm:$0xf]
  %v78 = vld [vmem:[%s1 + $0x24] sm:$0xf]
  %v79 = vld [vmem:[%s1 + $0x28] sm:$0xf]
  %v80 = vld [vmem:[%s1 + $0x2c] sm:$0xf]
  %v81 = vld [vmem:[%s1 + $0x30] sm:$0xf]
  %v82 = vld [vmem:[%s1 + $0x34] sm:$0xf]
  %v83 = vld [vmem:[%s1 + $0x38] sm:$0xf]
  %v84 = vld [vmem:[%s1 + $0x3c] sm:$0xf]
  %v85 = vld [vmem:[%s1 + $0x40] sm:$0xf]
  %v86 = vld [vmem:[%s1 + $0x44] sm:$0xf]
  %v87 = vld [vmem:[%s1 + $0x48] sm:$0xf]
  %v88 = vld [vmem:[%s1 + $0x4c] sm:$0xf]
  %v89 = vld [vmem:[%s1 + $0x50] sm:$0xf]
  %v90 = vld [vmem:[%s1 + $0x54] sm:$0xf]
  %v91 = vld [vmem:[%s1 + $0x58] sm:$0xf]
  %v92 = vld [vmem:[%s1 + $0x5c] sm:$0xf]
  %v93 = vld [vmem:[%s1 + $0x60] sm:$0xf]
  %v94 = vld [vmem:[%s1 + $0x64] sm:$0xf]
  %v95 = vld [vmem:[%s1 + $0x68] sm:$0xf]
  %v96 = vld [vmem:[%s1 + $0x6c] sm:$0xf]
  %v97 = vld [vmem:[%s1 + $0x70] sm:$0xf]
  %v98 = vld [vmem:[%s1 + $0x74] sm:$0xf]
  %v99 = vld [vmem:[%s1 + $0x78] sm:$0xf]
  %v100 = vld [vmem:[%s1 + $0x7c] sm:$0xf]
  %v101 = vld [vmem:[%s1 + $0x80] sm:$0xf]
  %v102 = vld [vmem:[%s1 + $0x84] sm:$0xf]
  %v103 = vld [vmem:[%s1 + $0x88] sm:$0xf]
  %v104 = vld [vmem:[%s1 + $0x8c] sm:$0xf]
  %v105 = vld [vmem:[%s1 + $0x90] sm:$0xf]
  %v106 = vld [vmem:[%s1 + $0x94] sm:$0xf]
  %v107 = vld [vmem:[%s1 + $0x98] sm:$0xf]
  %v108 = vld [vmem:[%s1 + $0x9c] sm:$0xf]
  %v109 = vld [vmem:[%s1 + $0xa0] sm:$0xf]
  %v110 = vld [vmem:[%s1 + $0xa4] sm:$0xf]
  %v111 = vld [vmem:[%s1 + $0xa8] sm:$0xf]
  %v112 = vld [vmem:[%s1 + $0xac] sm:$0xf]
  %v113 = vld [vmem:[%s1 + $0xb0] sm:$0xf]
  %v114 = vld [vmem:[%s1 + $0xb4] sm:$0xf]
  %v115 = vld [vmem:[%s1 + $0xb8] sm:$0xf]
  %v116 = vld [vmem:[%s1 + $0xbc] sm:$0xf]
  %v117 = vld [vmem:[%s1 + $0xc0] sm:$0xf]
  %v118 = vld [vmem:[%s1 + $0xc4] sm:$0xf]
  %v119 = vld [vmem:[%s1 + $0xc8] sm:$0xf]
  %v120 = vld [vmem:[%s1 + $0xcc] sm:$0xf]
  %v121 = vld [vmem:[%s1 + $0xd0] sm:$0xf]
  %v122 = vld [vmem:[%s1 + $0xd4] sm:$0xf]
  %v123 = vld [vmem:[%s1 + $0xd8] sm:$0xf]
  %v124 = vld [vmem:[%s1 + $0xdc] sm:$0xf]
  %v125 = vld [vmem:[%s1 + $0xe0] sm:$0xf]
  %v126 = vld [vmem:[%s1 + $0xe4] sm:$0xf]
  %v127 = vld [vmem:[%s1 + $0xe8] sm:$0xf]
  %v128 = vld [vmem:[%s1 + $0xec] sm:$0xf]
  %v129 = vld [vmem:[%s1 + $0xf0] sm:$0xf]
  %v130 = vld [vmem:[%s1 + $0xf4] sm:$0xf]
  %v131 = vld [vmem:[%s1 + $0xf8] sm:$0xf]
  %v132 = vld [vmem:[%s1 + $0xfc] sm:$0xf]
  %v133 = vld [vmem:[%s1 + $0x100] sm:$0xf]
  %v134 = vld [vmem:[%s1 + $0x104] sm:$0xf]
  %v135 = vld [vmem:[%s1 + $0x108] sm:$0xf]
  %v136 = vld [vmem:[%s1 + $0x10c] sm:$0xf]
  %v137 = vld [vmem:[%s1 + $0x110] sm:$0xf]
  %v138 = vld [vmem:[%s1 + $0x114] sm:$0xf]
  %v139 = vld [vmem:[%s1 + $0x118] sm:$0xf]
  %v140 = vld [vmem:[%s1 + $0x11c] sm:$0xf]
  %v141 = vld [vmem:[%s2] sm:$0x1]
  %v143 = vlaneseq
  %v144 = vshrl.u32 %v143, 7
  %v145 = vsub.s32 0, %v144
  %v146 = vrot.slane %v141, %v145
  %v196 = vunpack.c.l.b16 %v21
  %v197 = vunpack.c.h.b16 %v21
  %v198 = vunpack.c.l.b16 %v22
  %v199 = vunpack.c.h.b16 %v22
  %v200 = vunpack.c.l.b16 %v23
  %v201 = vunpack.c.l.b16 %v24
  %v202 = vunpack.c.h.b16 %v24
  %v203 = vunpack.c.l.b16 %v25
  %v204 = vunpack.c.h.b16 %v25
  %v205 = vunpack.c.l.b16 %v26
  %v206 = vunpack.c.l.b16 %v27
  %v207 = vunpack.c.h.b16 %v27
  %v208 = vunpack.c.l.b16 %v28
  %v209 = vunpack.c.h.b16 %v28
  %v210 = vunpack.c.l.b16 %v29
  %v211 = vunpack.c.l.b16 %v30
  %v212 = vunpack.c.h.b16 %v30
  %v213 = vunpack.c.l.b16 %v31
  %v214 = vunpack.c.h.b16 %v31
  %v215 = vunpack.c.l.b16 %v32
  %v216 = vunpack.c.l.b16 %v33
  %v217 = vunpack.c.h.b16 %v33
  %v218 = vunpack.c.l.b16 %v34
  %v219 = vunpack.c.h.b16 %v34
  %v220 = vunpack.c.l.b16 %v35
  %v221 = vunpack.c.l.b16 %v36
  %v222 = vunpack.c.h.b16 %v36
  %v223 = vunpack.c.l.b16 %v37
  %v224 = vunpack.c.h.b16 %v37
  %v225 = vunpack.c.l.b16 %v38
  %v226 = vunpack.c.l.b16 %v39
  %v227 = vunpack.c.h.b16 %v39
  %v228 = vunpack.c.l.b16 %v40
  %v229 = vunpack.c.h.b16 %v40
  %v230 = vunpack.c.l.b16 %v41
  %v231 = vunpack.c.l.b16 %v42
  %v232 = vunpack.c.h.b16 %v42
  %v233 = vunpack.c.l.b16 %v43
  %v234 = vunpack.c.h.b16 %v43
  %v235 = vunpack.c.l.b16 %v44
  %v236 = vunpack.c.l.b16 %v45
  %v237 = vunpack.c.h.b16 %v45
  %v238 = vunpack.c.l.b16 %v46
  %v239 = vunpack.c.h.b16 %v46
  %v240 = vunpack.c.l.b16 %v47
  %v241 = vunpack.c.l.b16 %v48
  %v242 = vunpack.c.h.b16 %v48
  %v243 = vunpack.c.l.b16 %v49
  %v244 = vunpack.c.h.b16 %v49
  %v245 = vunpack.c.l.b16 %v50
  %v246 = vunpack.c.l.b16 %v51
  %v247 = vunpack.c.h.b16 %v51
  %v248 = vunpack.c.l.b16 %v52
  %v249 = vunpack.c.h.b16 %v52
  %v250 = vunpack.c.l.b16 %v53
  %v251 = vunpack.c.l.b16 %v54
  %v252 = vunpack.c.h.b16 %v54
  %v253 = vunpack.c.l.b16 %v55
  %v254 = vunpack.c.h.b16 %v55
  %v255 = vunpack.c.l.b16 %v56
  %v256 = vunpack.c.l.b16 %v57
  %v257 = vunpack.c.h.b16 %v57
  %v258 = vunpack.c.l.b16 %v58
  %v259 = vunpack.c.h.b16 %v58
  %v260 = vunpack.c.l.b16 %v59
  %v261 = vunpack.c.l.b16 %v60
  %v262 = vunpack.c.h.b16 %v60
  %v263 = vunpack.c.l.b16 %v61
  %v264 = vunpack.c.h.b16 %v61
  %v265 = vunpack.c.l.b16 %v62
  %v266 = vunpack.c.l.b16 %v63
  %v267 = vunpack.c.h.b16 %v63
  %v268 = vunpack.c.l.b16 %v64
  %v269 = vunpack.c.h.b16 %v64
  %v270 = vunpack.c.l.b16 %v65
  %v271 = vunpack.c.l.b16 %v66
  %v272 = vunpack.c.h.b16 %v66
  %v273 = vunpack.c.l.b16 %v67
  %v274 = vunpack.c.h.b16 %v67
  %v275 = vunpack.c.l.b16 %v68
  %v276 = vpack.c.b16 %v201, %v196
  %v277 = vpack.c.b16 %v202, %v197
  %v278 = vpack.c.b16 %v203, %v198
  %v279 = vpack.c.b16 %v204, %v199
  %v280 = vpack.c.b16 %v205, %v200
  %v281 = vpack.c.b16 %v211, %v206
  %v282 = vpack.c.b16 %v212, %v207
  %v283 = vpack.c.b16 %v213, %v208
  %v284 = vpack.c.b16 %v214, %v209
  %v285 = vpack.c.b16 %v215, %v210
  %v286 = vpack.c.b16 %v221, %v216
  %v287 = vpack.c.b16 %v222, %v217
  %v288 = vpack.c.b16 %v223, %v218
  %v289 = vpack.c.b16 %v224, %v219
  %v290 = vpack.c.b16 %v225, %v220
  %v291 = vpack.c.b16 %v231, %v226
  %v292 = vpack.c.b16 %v232, %v227
  %v293 = vpack.c.b16 %v233, %v228
  %v294 = vpack.c.b16 %v234, %v229
  %v295 = vpack.c.b16 %v235, %v230
  %v296 = vpack.c.b16 %v241, %v236
  %v297 = vpack.c.b16 %v242, %v237
  %v298 = vpack.c.b16 %v243, %v238
  %v299 = vpack.c.b16 %v244, %v239
  %v300 = vpack.c.b16 %v245, %v240
  %v301 = vpack.c.b16 %v251, %v246
  %v302 = vpack.c.b16 %v252, %v247
  %v303 = vpack.c.b16 %v253, %v248
  %v304 = vpack.c.b16 %v254, %v249
  %v305 = vpack.c.b16 %v255, %v250
  %v306 = vpack.c.b16 %v261, %v256
  %v307 = vpack.c.b16 %v262, %v257
  %v308 = vpack.c.b16 %v263, %v258
  %v309 = vpack.c.b16 %v264, %v259
  %v310 = vpack.c.b16 %v265, %v260
  %v311 = vpack.c.b16 %v271, %v266
  %v312 = vpack.c.b16 %v272, %v267
  %v313 = vpack.c.b16 %v273, %v268
  %v314 = vpack.c.b16 %v274, %v269
  %v315 = vpack.c.b16 %v275, %v270
  %v420 = vunpack.c.l.b16 %v69
  %v421 = vunpack.c.l.b16 %v70
  %v422 = vunpack.c.l.b16 %v71
  %v423 = vunpack.c.l.b16 %v72
  %v424 = vunpack.c.l.b16 %v73
  %v425 = vunpack.c.l.b16 %v74
  %v426 = vunpack.c.l.b16 %v75
  %v427 = vunpack.c.l.b16 %v76
  %v428 = vunpack.c.l.b16 %v77
  %v429 = vunpack.c.l.b16 %v78
  %v430 = vunpack.c.l.b16 %v79
  %v431 = vunpack.c.l.b16 %v80
  %v432 = vunpack.c.l.b16 %v81
  %v433 = vunpack.c.l.b16 %v82
  %v434 = vunpack.c.l.b16 %v83
  %v435 = vunpack.c.l.b16 %v84
  %v436 = vunpack.c.l.b16 %v85
  %v437 = vunpack.c.l.b16 %v86
  %v438 = vunpack.c.l.b16 %v87
  %v439 = vunpack.c.l.b16 %v88
  %v440 = vunpack.c.l.b16 %v89
  %v441 = vunpack.c.l.b16 %v90
  %v442 = vunpack.c.l.b16 %v91
  %v443 = vunpack.c.l.b16 %v92
  %v444 = vunpack.c.l.b16 %v93
  %v445 = vunpack.c.l.b16 %v94
  %v446 = vunpack.c.l.b16 %v95
  %v447 = vunpack.c.l.b16 %v96
  %v448 = vunpack.c.l.b16 %v97
  %v449 = vunpack.c.l.b16 %v98
  %v450 = vunpack.c.l.b16 %v99
  %v451 = vunpack.c.l.b16 %v100
  %v452 = vunpack.c.l.b16 %v101
  %v453 = vunpack.c.l.b16 %v102
  %v454 = vunpack.c.l.b16 %v103
  %v455 = vunpack.c.l.b16 %v104
  %v456 = vunpack.c.l.b16 %v105
  %v457 = vunpack.c.l.b16 %v106
  %v458 = vunpack.c.l.b16 %v107
  %v459 = vunpack.c.l.b16 %v108
  %v460 = vunpack.c.l.b16 %v109
  %v461 = vunpack.c.l.b16 %v110
  %v462 = vunpack.c.l.b16 %v111
  %v463 = vunpack.c.l.b16 %v112
  %v464 = vunpack.c.l.b16 %v113
  %v465 = vunpack.c.l.b16 %v114
  %v466 = vunpack.c.l.b16 %v115
  %v467 = vunpack.c.l.b16 %v116
  %v468 = vunpack.c.l.b16 %v117
  %v469 = vunpack.c.l.b16 %v118
  %v470 = vunpack.c.l.b16 %v119
  %v471 = vunpack.c.l.b16 %v120
  %v472 = vunpack.c.l.b16 %v121
  %v473 = vunpack.c.l.b16 %v122
  %v474 = vunpack.c.l.b16 %v123
  %v475 = vunpack.c.l.b16 %v124
  %v476 = vunpack.c.l.b16 %v125
  %v477 = vunpack.c.l.b16 %v126
  %v478 = vunpack.c.l.b16 %v127
  %v479 = vunpack.c.l.b16 %v128
  %v480 = vunpack.c.l.b16 %v129
  %v481 = vunpack.c.l.b16 %v130
  %v482 = vunpack.c.l.b16 %v131
  %v483 = vunpack.c.l.b16 %v132
  %v484 = vunpack.c.l.b16 %v133
  %v485 = vunpack.c.l.b16 %v134
  %v486 = vunpack.c.l.b16 %v135
  %v487 = vunpack.c.l.b16 %v136
  %v488 = vunpack.c.l.b16 %v137
  %v489 = vunpack.c.l.b16 %v138
  %v490 = vunpack.c.l.b16 %v139
  %v491 = vunpack.c.l.b16 %v140
  %v492 = vpack.c.b16 %v421, %v420
  %v493 = vpack.c.b16 %v423, %v422
  %v494 = vpack.c.b16 %v425, %v424
  %v495 = vpack.c.b16 %v427, %v426
  %v496 = vpack.c.b16 %v429, %v428
  %v497 = vpack.c.b16 %v431, %v430
  %v498 = vpack.c.b16 %v433, %v432
  %v499 = vpack.c.b16 %v435, %v434
  %v500 = vpack.c.b16 %v437, %v436
  %v501 = vpack.c.b16 %v439, %v438
  %v502 = vpack.c.b16 %v441, %v440
  %v503 = vpack.c.b16 %v443, %v442
  %v504 = vpack.c.b16 %v445, %v444
  %v505 = vpack.c.b16 %v447, %v446
  %v506 = vpack.c.b16 %v449, %v448
  %v507 = vpack.c.b16 %v451, %v450
  %v508 = vpack.c.b16 %v453, %v452
  %v509 = vpack.c.b16 %v455, %v454
  %v510 = vpack.c.b16 %v457, %v456
  %v511 = vpack.c.b16 %v459, %v458
  %v512 = vpack.c.b16 %v461, %v460
  %v513 = vpack.c.b16 %v463, %v462
  %v514 = vpack.c.b16 %v465, %v464
  %v515 = vpack.c.b16 %v467, %v466
  %v516 = vpack.c.b16 %v469, %v468
  %v517 = vpack.c.b16 %v471, %v470
  %v518 = vpack.c.b16 %v473, %v472
  %v519 = vpack.c.b16 %v475, %v474
  %v520 = vpack.c.b16 %v477, %v476
  %v521 = vpack.c.b16 %v479, %v478
  %v522 = vpack.c.b16 %v481, %v480
  %v523 = vpack.c.b16 %v483, %v482
  %v524 = vpack.c.b16 %v485, %v484
  %v525 = vpack.c.b16 %v487, %v486
  %v526 = vpack.c.b16 %v489, %v488
  %v527 = vpack.c.b16 %v491, %v490
  %vm564 = vcmask 523264
  %v566 = vsel %vm564, %v280, 0
  %v569 = vsel %vm564, %v285, 0
  %v572 = vsel %vm564, %v290, 0
  %v575 = vsel %vm564, %v295, 0
  %v578 = vsel %vm564, %v300, 0
  %v581 = vsel %vm564, %v305, 0
  %v584 = vsel %vm564, %v310, 0
  %v587 = vsel %vm564, %v315, 0
  %589 = vmatprep.subr.bf16.mxu0 0
  %590 = vmatpush1.bf16.msra.mxu0 %v492
  %591 = vmatprep.subr.bf16.mxu0 0
  %592 = vmatpush1.bf16.msra.mxu0 %v493
  %593 = vmatprep.subr.bf16.mxu0 0
  %594 = vmatpush1.bf16.msra.mxu0 %v494
  %595 = vmatprep.subr.bf16.mxu0 0
  %596 = vmatpush1.bf16.msra.mxu0 %v495
  %597 = vmatprep.subr.bf16.mxu0 0
  %598 = vmatpush1.bf16.msra.mxu0 %v496
  %599 = vmatprep.subr.bf16.mxu0 0
  %600 = vmatpush1.bf16.msra.mxu0 %v497
  %601 = vmatprep.subr.bf16.mxu0 0
  %602 = vmatpush1.bf16.msra.mxu0 %v498
  %603 = vmatprep.subr.bf16.mxu0 0
  %604 = vmatpush1.bf16.msra.mxu0 %v499
  %605 = vmatprep.subr.bf16.mxu0 0
  %606 = vmatpush1.bf16.msra.mxu0 %v500
  %607 = vmatprep.subr.bf16.mxu0 0
  %608 = vmatpush1.bf16.msra.mxu0 %v501
  %609 = vmatprep.subr.bf16.mxu0 0
  %610 = vmatpush1.bf16.msra.mxu0 %v502
  %611 = vmatprep.subr.bf16.mxu0 0
  %612 = vmatpush1.bf16.msra.mxu0 %v503
  %613 = vmatprep.subr.bf16.mxu0 0
  %614 = vmatpush1.bf16.msra.mxu0 %v504
  %615 = vmatprep.subr.bf16.mxu0 0
  %616 = vmatpush1.bf16.msra.mxu0 %v505
  %617 = vmatprep.subr.bf16.mxu0 0
  %618 = vmatpush1.bf16.msra.mxu0 %v506
  %619 = vmatprep.subr.bf16.mxu0 0
  %620 = vmatpush1.bf16.msra.mxu0 %v507
  %621 = vmatprep.mubr.bf16.mxu0 %v277
  %622 = vmatmul.mubr.bf16.gmra.mrb[0].mxu0 %v276
  %v623 = vpop.f32.mrb[0].mxu0
  %v624 = vadd.f32 %v146, %v623
  %v625 = vpop.f32.mrb[0].mxu0
  %v626 = vpop.f32.mrb[0].mxu0
  %v627 = vadd.f32 %v146, %v626
  %v628 = vpop.f32.mrb[0].mxu0
  %629 = vmatprep.mubr.bf16.mxu0 %v282
  %630 = vmatmul.mubr.bf16.gmra.mrb[0].mxu0 %v281
  %v631 = vpop.f32.mrb[0].mxu0
  %v632 = vadd.f32 %v146, %v631
  %v633 = vpop.f32.mrb[0].mxu0
  %v634 = vpop.f32.mrb[0].mxu0
  %v635 = vadd.f32 %v146, %v634
  %v636 = vpop.f32.mrb[0].mxu0
  %637 = vmatprep.mubr.bf16.mxu0 %v287
  %638 = vmatmul.mubr.bf16.gmra.mrb[0].mxu0 %v286
  %v639 = vpop.f32.mrb[0].mxu0
  %v640 = vadd.f32 %v146, %v639
  %v641 = vpop.f32.mrb[0].mxu0
  %v642 = vpop.f32.mrb[0].mxu0
  %v643 = vadd.f32 %v146, %v642
  %v644 = vpop.f32.mrb[0].mxu0
  %645 = vmatprep.mubr.bf16.mxu0 %v292
  %646 = vmatmul.mubr.bf16.gmra.mrb[0].mxu0 %v291
  %v647 = vpop.f32.mrb[0].mxu0
  %v648 = vadd.f32 %v146, %v647
  %v649 = vpop.f32.mrb[0].mxu0
  %v650 = vpop.f32.mrb[0].mxu0
  %v651 = vadd.f32 %v146, %v650
  %v652 = vpop.f32.mrb[0].mxu0
  %653 = vmatprep.mubr.bf16.mxu0 %v297
  %654 = vmatmul.mubr.bf16.gmra.mrb[0].mxu0 %v296
  %v655 = vpop.f32.mrb[0].mxu0
  %v656 = vadd.f32 %v146, %v655
  %v657 = vpop.f32.mrb[0].mxu0
  %v658 = vpop.f32.mrb[0].mxu0
  %v659 = vadd.f32 %v146, %v658
  %v660 = vpop.f32.mrb[0].mxu0
  %661 = vmatprep.mubr.bf16.mxu0 %v302
  %662 = vmatmul.mubr.bf16.gmra.mrb[0].mxu0 %v301
  %v663 = vpop.f32.mrb[0].mxu0
  %v664 = vadd.f32 %v146, %v663
  %v665 = vpop.f32.mrb[0].mxu0
  %v666 = vpop.f32.mrb[0].mxu0
  %v667 = vadd.f32 %v146, %v666
  %v668 = vpop.f32.mrb[0].mxu0
  %669 = vmatprep.mubr.bf16.mxu0 %v307
  %670 = vmatmul.mubr.bf16.gmra.mrb[0].mxu0 %v306
  %v671 = vpop.f32.mrb[0].mxu0
  %v672 = vadd.f32 %v146, %v671
  %v673 = vpop.f32.mrb[0].mxu0
  %v674 = vpop.f32.mrb[0].mxu0
  %v675 = vadd.f32 %v146, %v674
  %v676 = vpop.f32.mrb[0].mxu0
  %677 = vmatprep.mubr.bf16.mxu0 %v312
  %678 = vmatmul.mubr.bf16.gmra.mrb[0].mxu0 %v311
  %v679 = vpop.f32.mrb[0].mxu0
  %v680 = vadd.f32 %v146, %v679
  %v681 = vpop.f32.mrb[0].mxu0
  %v682 = vpop.f32.mrb[0].mxu0
  %v683 = vadd.f32 %v146, %v682
  %v684 = vpop.f32.mrb[0].mxu0
  %685 = vdwg.mxu0
  %686 = vmatprep.subr.bf16.mxu0 0
  %687 = vmatpush1.bf16.msra.mxu0 %v508
  %688 = vmatprep.subr.bf16.mxu0 0
  %689 = vmatpush1.bf16.msra.mxu0 %v509
  %690 = vmatprep.subr.bf16.mxu0 0
  %691 = vmatpush1.bf16.msra.mxu0 %v510
  %692 = vmatprep.subr.bf16.mxu0 0
  %693 = vmatpush1.bf16.msra.mxu0 %v511
  %694 = vmatprep.subr.bf16.mxu0 0
  %695 = vmatpush1.bf16.msra.mxu0 %v512
  %696 = vmatprep.subr.bf16.mxu0 0
  %697 = vmatpush1.bf16.msra.mxu0 %v513
  %698 = vmatprep.subr.bf16.mxu0 0
  %699 = vmatpush1.bf16.msra.mxu0 %v514
  %700 = vmatprep.subr.bf16.mxu0 0
  %701 = vmatpush1.bf16.msra.mxu0 %v515
  %702 = vmatprep.subr.bf16.mxu0 0
  %703 = vmatpush1.bf16.msra.mxu0 %v516
  %704 = vmatprep.subr.bf16.mxu0 0
  %705 = vmatpush1.bf16.msra.mxu0 %v517
  %706 = vmatprep.subr.bf16.mxu0 0
  %707 = vmatpush1.bf16.msra.mxu0 %v518
  %708 = vmatprep.subr.bf16.mxu0 0
  %709 = vmatpush1.bf16.msra.mxu0 %v519
  %710 = vmatprep.subr.bf16.mxu0 0
  %711 = vmatpush1.bf16.msra.mxu0 %v520
  %712 = vmatprep.subr.bf16.mxu0 0
  %713 = vmatpush1.bf16.msra.mxu0 %v521
  %714 = vmatprep.subr.bf16.mxu0 0
  %715 = vmatpush1.bf16.msra.mxu0 %v522
  %716 = vmatprep.subr.bf16.mxu0 0
  %717 = vmatpush1.bf16.msra.mxu0 %v523
  %718 = vmatprep.mubr.bf16.mxu0 %v279
  %719 = vmatmul.mubr.bf16.gmra.mrb[0].mxu0 %v278
  %v720 = vpop.f32.mrb[0].mxu0
  %v721 = vadd.f32 %v624, %v720
  %v722 = vpop.f32.mrb[0].mxu0
  %v723 = vpop.f32.mrb[0].mxu0
  %v724 = vadd.f32 %v627, %v723
  %v725 = vpop.f32.mrb[0].mxu0
  %726 = vmatprep.mubr.bf16.mxu0 %v284
  %727 = vmatmul.mubr.bf16.gmra.mrb[0].mxu0 %v283
  %v728 = vpop.f32.mrb[0].mxu0
  %v729 = vadd.f32 %v632, %v728
  %v730 = vpop.f32.mrb[0].mxu0
  %v731 = vpop.f32.mrb[0].mxu0
  %v732 = vadd.f32 %v635, %v731
  %v733 = vpop.f32.mrb[0].mxu0
  %734 = vmatprep.mubr.bf16.mxu0 %v289
  %735 = vmatmul.mubr.bf16.gmra.mrb[0].mxu0 %v288
  %v736 = vpop.f32.mrb[0].mxu0
  %v737 = vadd.f32 %v640, %v736
  %v738 = vpop.f32.mrb[0].mxu0
  %v739 = vpop.f32.mrb[0].mxu0
  %v740 = vadd.f32 %v643, %v739
  %v741 = vpop.f32.mrb[0].mxu0
  %742 = vmatprep.mubr.bf16.mxu0 %v294
  %743 = vmatmul.mubr.bf16.gmra.mrb[0].mxu0 %v293
  %v744 = vpop.f32.mrb[0].mxu0
  %v745 = vadd.f32 %v648, %v744
  %v746 = vpop.f32.mrb[0].mxu0
  %v747 = vpop.f32.mrb[0].mxu0
  %v748 = vadd.f32 %v651, %v747
  %v749 = vpop.f32.mrb[0].mxu0
  %750 = vmatprep.mubr.bf16.mxu0 %v299
  %751 = vmatmul.mubr.bf16.gmra.mrb[0].mxu0 %v298
  %v752 = vpop.f32.mrb[0].mxu0
  %v753 = vadd.f32 %v656, %v752
  %v754 = vpop.f32.mrb[0].mxu0
  %v755 = vpop.f32.mrb[0].mxu0
  %v756 = vadd.f32 %v659, %v755
  %v757 = vpop.f32.mrb[0].mxu0
  %758 = vmatprep.mubr.bf16.mxu0 %v304
  %759 = vmatmul.mubr.bf16.gmra.mrb[0].mxu0 %v303
  %v760 = vpop.f32.mrb[0].mxu0
  %v761 = vadd.f32 %v664, %v760
  %v762 = vpop.f32.mrb[0].mxu0
  %v763 = vpop.f32.mrb[0].mxu0
  %v764 = vadd.f32 %v667, %v763
  %v765 = vpop.f32.mrb[0].mxu0
  %766 = vmatprep.mubr.bf16.mxu0 %v309
  %767 = vmatmul.mubr.bf16.gmra.mrb[0].mxu0 %v308
  %v768 = vpop.f32.mrb[0].mxu0
  %v769 = vadd.f32 %v672, %v768
  %v770 = vpop.f32.mrb[0].mxu0
  %v771 = vpop.f32.mrb[0].mxu0
  %v772 = vadd.f32 %v675, %v771
  %v773 = vpop.f32.mrb[0].mxu0
  %774 = vmatprep.mubr.bf16.mxu0 %v314
  %775 = vmatmul.mubr.bf16.gmra.mrb[0].mxu0 %v313
  %v776 = vpop.f32.mrb[0].mxu0
  %v777 = vadd.f32 %v680, %v776
  %v778 = vpop.f32.mrb[0].mxu0
  %v779 = vpop.f32.mrb[0].mxu0
  %v780 = vadd.f32 %v683, %v779
  %v781 = vpop.f32.mrb[0].mxu0
  %782 = vdwg.mxu0
  %783 = vmatprep.subr.bf16.mxu0 0
  %784 = vmatpush1.bf16.msra.mxu0 %v524
  %785 = vmatprep.subr.bf16.mxu0 0
  %786 = vmatpush1.bf16.msra.mxu0 %v525
  %787 = vmatprep.subr.bf16.mxu0 0
  %788 = vmatpush1.bf16.msra.mxu0 %v526
  %789 = vmatprep.subr.bf16.mxu0 0
  %790 = vmatpush1.bf16.msra.mxu0 %v527
  %791 = vmatprep.subr.bf16.mxu0 0
  %792 = vmatpush1.bf16.msra.mxu0 0
  %793 = vmatprep.subr.bf16.mxu0 0
  %794 = vmatpush1.bf16.msra.mxu0 0
  %795 = vmatprep.subr.bf16.mxu0 0
  %796 = vmatpush1.bf16.msra.mxu0 0
  %797 = vmatprep.subr.bf16.mxu0 0
  %798 = vmatpush1.bf16.msra.mxu0 0
  %799 = vmatprep.subr.bf16.mxu0 0
  %800 = vmatpush1.bf16.msra.mxu0 0
  %801 = vmatprep.subr.bf16.mxu0 0
  %802 = vmatpush1.bf16.msra.mxu0 0
  %803 = vmatprep.subr.bf16.mxu0 0
  %804 = vmatpush1.bf16.msra.mxu0 0
  %805 = vmatprep.subr.bf16.mxu0 0
  %806 = vmatpush1.bf16.msra.mxu0 0
  %807 = vmatprep.subr.bf16.mxu0 0
  %808 = vmatpush1.bf16.msra.mxu0 0
  %809 = vmatprep.subr.bf16.mxu0 0
  %810 = vmatpush1.bf16.msra.mxu0 0
  %811 = vmatprep.subr.bf16.mxu0 0
  %812 = vmatpush1.bf16.msra.mxu0 0
  %813 = vmatprep.subr.bf16.mxu0 0
  %814 = vmatpush1.bf16.msra.mxu0 0
  %815 = vmatprep.mubr.bf16.mxu0 0
  %816 = vmatmul.mubr.bf16.gmra.mrb[0].mxu0 %v566
  %v817 = vpop.f32.mrb[0].mxu0
  %v818 = vadd.f32 %v721, %v817
  %v819 = vpop.f32.mrb[0].mxu0
  %v820 = vpop.f32.mrb[0].mxu0
  %v821 = vadd.f32 %v724, %v820
  %v822 = vpop.f32.mrb[0].mxu0
  %823 = vmatprep.mubr.bf16.mxu0 0
  %824 = vmatmul.mubr.bf16.gmra.mrb[0].mxu0 %v569
  %v825 = vpop.f32.mrb[0].mxu0
  %v826 = vadd.f32 %v729, %v825
  %v827 = vpop.f32.mrb[0].mxu0
  %v828 = vpop.f32.mrb[0].mxu0
  %v829 = vadd.f32 %v732, %v828
  %v830 = vpop.f32.mrb[0].mxu0
  %831 = vmatprep.mubr.bf16.mxu0 0
  %832 = vmatmul.mubr.bf16.gmra.mrb[0].mxu0 %v572
  %v833 = vpop.f32.mrb[0].mxu0
  %v834 = vadd.f32 %v737, %v833
  %v835 = vpop.f32.mrb[0].mxu0
  %v836 = vpop.f32.mrb[0].mxu0
  %v837 = vadd.f32 %v740, %v836
  %v838 = vpop.f32.mrb[0].mxu0
  %839 = vmatprep.mubr.bf16.mxu0 0
  %840 = vmatmul.mubr.bf16.gmra.mrb[0].mxu0 %v575
  %v841 = vpop.f32.mrb[0].mxu0
  %v842 = vadd.f32 %v745, %v841
  %v843 = vpop.f32.mrb[0].mxu0
  %v844 = vpop.f32.mrb[0].mxu0
  %v845 = vadd.f32 %v748, %v844
  %v846 = vpop.f32.mrb[0].mxu0
  %847 = vmatprep.mubr.bf16.mxu0 0
  %848 = vmatmul.mubr.bf16.gmra.mrb[0].mxu0 %v578
  %v849 = vpop.f32.mrb[0].mxu0
  %v850 = vadd.f32 %v753, %v849
  %v851 = vpop.f32.mrb[0].mxu0
  %v852 = vpop.f32.mrb[0].mxu0
  %v853 = vadd.f32 %v756, %v852
  %v854 = vpop.f32.mrb[0].mxu0
  %855 = vmatprep.mubr.bf16.mxu0 0
  %856 = vmatmul.mubr.bf16.gmra.mrb[0].mxu0 %v581
  %v857 = vpop.f32.mrb[0].mxu0
  %v858 = vadd.f32 %v761, %v857
  %v859 = vpop.f32.mrb[0].mxu0
  %v860 = vpop.f32.mrb[0].mxu0
  %v861 = vadd.f32 %v764, %v860
  %v862 = vpop.f32.mrb[0].mxu0
  %863 = vmatprep.mubr.bf16.mxu0 0
  %864 = vmatmul.mubr.bf16.gmra.mrb[0].mxu0 %v584
  %v865 = vpop.f32.mrb[0].mxu0
  %v866 = vadd.f32 %v769, %v865
  %v867 = vpop.f32.mrb[0].mxu0
  %v868 = vpop.f32.mrb[0].mxu0
  %v869 = vadd.f32 %v772, %v868
  %v870 = vpop.f32.mrb[0].mxu0
  %871 = vmatprep.mubr.bf16.mxu0 0
  %872 = vmatmul.mubr.bf16.gmra.mrb[0].mxu0 %v587
  %v873 = vpop.f32.mrb[0].mxu0
  %v874 = vadd.f32 %v777, %v873
  %v875 = vpop.f32.mrb[0].mxu0
  %v876 = vpop.f32.mrb[0].mxu0
  %v877 = vadd.f32 %v780, %v876
  %v878 = vpop.f32.mrb[0].mxu0
  %879 = vdwg.mxu0
  %v880 = vadd.f32 %v818, %v821
  %v881 = vadd.f32 %v880, %v826
  %v882 = vadd.f32 %v881, %v829
  %v883 = vadd.f32 %v882, %v834
  %v884 = vadd.f32 %v883, %v837
  %v885 = vadd.f32 %v884, %v842
  %v886 = vadd.f32 %v885, %v845
  %v887 = vadd.f32 %v886, %v850
  %v888 = vadd.f32 %v887, %v853
  %v889 = vadd.f32 %v888, %v858
  %v890 = vadd.f32 %v889, %v861
  %v891 = vadd.f32 %v890, %v866
  %v892 = vadd.f32 %v891, %v869
  %v893 = vadd.f32 %v892, %v874
  %v894 = vadd.f32 %v893, %v877
  %v895 = vrot.slane %v894, 4
  %v896 = vadd.f32 %v894, %v895
  %v897 = vrot.slane %v896, 2
  %v898 = vadd.f32 %v896, %v897
  %v899 = vrot.slane %v898, 1
  %v900 = vadd.f32 %v898, %v899
  %v901 = vmul.f32 %v900, 0.0078125
  %v902 = vsub.f32 %v818, %v901
  %v903 = vsub.f32 %v821, %v901
  %v904 = vsub.f32 %v826, %v901
  %v905 = vsub.f32 %v829, %v901
  %v906 = vsub.f32 %v834, %v901
  %v907 = vsub.f32 %v837, %v901
  %v908 = vsub.f32 %v842, %v901
  %v909 = vsub.f32 %v845, %v901
  %v910 = vsub.f32 %v850, %v901
  %v911 = vsub.f32 %v853, %v901
  %v912 = vsub.f32 %v858, %v901
  %v913 = vsub.f32 %v861, %v901
  %v914 = vsub.f32 %v866, %v901
  %v915 = vsub.f32 %v869, %v901
  %v916 = vsub.f32 %v874, %v901
  %v917 = vsub.f32 %v877, %v901
  %v918 = vmul.f32 %v902, %v902
  %v919 = vmul.f32 %v903, %v903
  %v920 = vmul.f32 %v904, %v904
  %v921 = vmul.f32 %v905, %v905
  %v922 = vmul.f32 %v906, %v906
  %v923 = vmul.f32 %v907, %v907
  %v924 = vmul.f32 %v908, %v908
  %v925 = vmul.f32 %v909, %v909
  %v926 = vmul.f32 %v910, %v910
  %v927 = vmul.f32 %v911, %v911
  %v928 = vmul.f32 %v912, %v912
  %v929 = vmul.f32 %v913, %v913
  %v930 = vmul.f32 %v914, %v914
  %v931 = vmul.f32 %v915, %v915
  %v932 = vmul.f32 %v916, %v916
  %v933 = vmul.f32 %v917, %v917
  %v934 = vadd.f32 %v918, %v919
  %v935 = vadd.f32 %v934, %v920
  %v936 = vadd.f32 %v935, %v921
  %v937 = vadd.f32 %v936, %v922
  %v938 = vadd.f32 %v937, %v923
  %v939 = vadd.f32 %v938, %v924
  %v940 = vadd.f32 %v939, %v925
  %v941 = vadd.f32 %v940, %v926
  %v942 = vadd.f32 %v941, %v927
  %v943 = vadd.f32 %v942, %v928
  %v944 = vadd.f32 %v943, %v929
  %v945 = vadd.f32 %v944, %v930
  %v946 = vadd.f32 %v945, %v931
  %v947 = vadd.f32 %v946, %v932
  %v948 = vadd.f32 %v947, %v933
  %v949 = vrot.slane %v948, 4
  %v950 = vadd.f32 %v948, %v949
  %v951 = vrot.slane %v950, 2
  %v952 = vadd.f32 %v950, %v951
  %v953 = vrot.slane %v952, 1
  %v954 = vadd.f32 %v952, %v953
  %v955 = vmul.f32 %v954, 0.0078125
  %v956 = vadd.f32 %v955, 1e-05
  %v957 = vrsqrt.pop %v956
  %v958 = vmul.f32 %v902, %v957
  %v959 = vmul.f32 %v903, %v957
  %v960 = vmul.f32 %v904, %v957
  %v961 = vmul.f32 %v905, %v957
  %v962 = vmul.f32 %v906, %v957
  %v963 = vmul.f32 %v907, %v957
  %v964 = vmul.f32 %v908, %v957
  %v965 = vmul.f32 %v909, %v957
  %v966 = vmul.f32 %v910, %v957
  %v967 = vmul.f32 %v911, %v957
  %v968 = vmul.f32 %v912, %v957
  %v969 = vmul.f32 %v913, %v957
  %v970 = vmul.f32 %v914, %v957
  %v971 = vmul.f32 %v915, %v957
  %v972 = vmul.f32 %v916, %v957
  %v973 = vmul.f32 %v917, %v957
  %v974 = vld [vmem:[%s3] sm:$0x1]
  %v976 = vlaneseq
  %v977 = vshrl.u32 %v976, 7
  %v978 = vsub.s32 0, %v977
  %v979 = vrot.slane %v974, %v978
  %v981 = vmul.f32 %v958, %v979
  %v982 = vmul.f32 %v959, %v979
  %v983 = vmul.f32 %v960, %v979
  %v984 = vmul.f32 %v961, %v979
  %v985 = vmul.f32 %v962, %v979
  %v986 = vmul.f32 %v963, %v979
  %v987 = vmul.f32 %v964, %v979
  %v988 = vmul.f32 %v965, %v979
  %v989 = vmul.f32 %v966, %v979
  %v990 = vmul.f32 %v967, %v979
  %v991 = vmul.f32 %v968, %v979
  %v992 = vmul.f32 %v969, %v979
  %v993 = vmul.f32 %v970, %v979
  %v994 = vmul.f32 %v971, %v979
  %v995 = vmul.f32 %v972, %v979
  %v996 = vmul.f32 %v973, %v979
  %v997 = vld [vmem:[%s4] sm:$0x1]
  %v999 = vlaneseq
  %v1000 = vshrl.u32 %v999, 7
  %v1001 = vsub.s32 0, %v1000
  %v1002 = vrot.slane %v997, %v1001
  %v1004 = vadd.f32 %v981, %v1002
  %v1005 = vadd.f32 %v982, %v1002
  %v1006 = vadd.f32 %v983, %v1002
  %v1007 = vadd.f32 %v984, %v1002
  %v1008 = vadd.f32 %v985, %v1002
  %v1009 = vadd.f32 %v986, %v1002
  %v1010 = vadd.f32 %v987, %v1002
  %v1011 = vadd.f32 %v988, %v1002
  %v1012 = vadd.f32 %v989, %v1002
  %v1013 = vadd.f32 %v990, %v1002
  %v1014 = vadd.f32 %v991, %v1002
  %v1015 = vadd.f32 %v992, %v1002
  %v1016 = vadd.f32 %v993, %v1002
  %v1017 = vadd.f32 %v994, %v1002
  %v1018 = vadd.f32 %v995, %v1002
  %v1019 = vadd.f32 %v996, %v1002
  %v1020 = vmax.f32 %v1004, 0.0
  %v1021 = vmax.f32 %v1005, 0.0
  %v1022 = vmax.f32 %v1006, 0.0
  %v1023 = vmax.f32 %v1007, 0.0
  %v1024 = vmax.f32 %v1008, 0.0
  %v1025 = vmax.f32 %v1009, 0.0
  %v1026 = vmax.f32 %v1010, 0.0
  %v1027 = vmax.f32 %v1011, 0.0
  %v1028 = vmax.f32 %v1012, 0.0
  %v1029 = vmax.f32 %v1013, 0.0
  %v1030 = vmax.f32 %v1014, 0.0
  %v1031 = vmax.f32 %v1015, 0.0
  %v1032 = vmax.f32 %v1016, 0.0
  %v1033 = vmax.f32 %v1017, 0.0
  %v1034 = vmax.f32 %v1018, 0.0
  %v1035 = vmax.f32 %v1019, 0.0
  %v1036 = vpack.c.bf16 %v1021, %v1020
  %v1037 = vpack.c.bf16 %v1023, %v1022
  %v1038 = vpack.c.bf16 %v1025, %v1024
  %v1039 = vpack.c.bf16 %v1027, %v1026
  %v1040 = vpack.c.bf16 %v1029, %v1028
  %v1041 = vpack.c.bf16 %v1031, %v1030
  %v1042 = vpack.c.bf16 %v1033, %v1032
  %v1043 = vpack.c.bf16 %v1035, %v1034
  %v1052 = vunpack.c.l.b16 %v1036
  %v1053 = vunpack.c.h.b16 %v1036
  %v1054 = vunpack.c.l.b16 %v1037
  %v1055 = vunpack.c.h.b16 %v1037
  %v1056 = vunpack.c.l.b16 %v1038
  %v1057 = vunpack.c.h.b16 %v1038
  %v1058 = vunpack.c.l.b16 %v1039
  %v1059 = vunpack.c.h.b16 %v1039
  %v1060 = vunpack.c.l.b16 %v1040
  %v1061 = vunpack.c.h.b16 %v1040
  %v1062 = vunpack.c.l.b16 %v1041
  %v1063 = vunpack.c.h.b16 %v1041
  %v1064 = vunpack.c.l.b16 %v1042
  %v1065 = vunpack.c.h.b16 %v1042
  %v1066 = vunpack.c.l.b16 %v1043
  %v1067 = vunpack.c.h.b16 %v1043
  %v1068 = vpack.c.b16 %v1052, %v1052
  %v1069 = vpack.c.b16 %v1053, %v1053
  %v1070 = vpack.c.b16 %v1054, %v1054
  %v1071 = vpack.c.b16 %v1055, %v1055
  %v1072 = vpack.c.b16 %v1056, %v1056
  %v1073 = vpack.c.b16 %v1057, %v1057
  %v1074 = vpack.c.b16 %v1058, %v1058
  %v1075 = vpack.c.b16 %v1059, %v1059
  %v1076 = vpack.c.b16 %v1060, %v1060
  %v1077 = vpack.c.b16 %v1061, %v1061
  %v1078 = vpack.c.b16 %v1062, %v1062
  %v1079 = vpack.c.b16 %v1063, %v1063
  %v1080 = vpack.c.b16 %v1064, %v1064
  %v1081 = vpack.c.b16 %v1065, %v1065
  %v1082 = vpack.c.b16 %v1066, %v1066
  %v1083 = vpack.c.b16 %v1067, %v1067
  %1100 = vst [vmem:[%s5] sm:$0xf] %v1068
  %1101 = vst [vmem:[%s5 + $0x4] sm:$0xf] %v1069
  %1102 = vst [vmem:[%s5 + $0x8] sm:$0xf] %v1070
  %1103 = vst [vmem:[%s5 + $0xc] sm:$0xf] %v1071
  %1104 = vst [vmem:[%s5 + $0x10] sm:$0xf] %v1072
  %1105 = vst [vmem:[%s5 + $0x14] sm:$0xf] %v1073
  %1106 = vst [vmem:[%s5 + $0x18] sm:$0xf] %v1074
  %1107 = vst [vmem:[%s5 + $0x1c] sm:$0xf] %v1075
  %1108 = vst [vmem:[%s5 + $0x20] sm:$0xf] %v1076
  %1109 = vst [vmem:[%s5 + $0x24] sm:$0xf] %v1077
  %1110 = vst [vmem:[%s5 + $0x28] sm:$0xf] %v1078
  %1111 = vst [vmem:[%s5 + $0x2c] sm:$0xf] %v1079
  %1112 = vst [vmem:[%s5 + $0x30] sm:$0xf] %v1080
  %1113 = vst [vmem:[%s5 + $0x34] sm:$0xf] %v1081
  %1114 = vst [vmem:[%s5 + $0x38] sm:$0xf] %v1082
  %1115 = vst [vmem:[%s5 + $0x3c] sm:$0xf] %v1083
  // Predicated region
  $region22: #{label_encoder.4} parent=0 // pred_check
    _
  $region23: #{label_encoder.4} parent=0 // pred_check_branch
    %1117 = sbr.rel (0) target = $region25
  $region24: #{label_encoder.4} parent=0 // pred_region
    _
  $region25: #{label_encoder.4} parent=0 // pred_fallthru
    _
  // Predicated region
  $region26: #{label_encoder.4} parent=0 // pred_check
    _
  $region27: #{label_encoder.4} parent=0 // pred_check_branch
    %1119 = sbr.rel (0) target = $region29
  $region28: #{label_encoder.4} parent=0 // pred_region
    _
  $region29: #{label_encoder.4} parent=0 // pred_fallthru
    _

// kernel: label_encoder.5
$region0: #{label_encoder.5}
  #allocation0 [shape = 'u32[]', space=smem, size = 0x4, offset = 0x4, fixed_abs, tag = 'smem constant byte address 0x4 - core index']
  #allocation1 [shape = 'u32[144,128]{1,0:T(1,128)}', space=vmem, size = 0x12000, scoped, tag = 'internal scratch']
  %s0 = inlined_call_operand.vmem [shape: bf16[32,1152], index: 0, kind: input, shape index: {}]
  %s1 = inlined_call_operand.vmem [shape: bf16[1152,256], index: 1, kind: input, shape index: {}]
  %s2 = inlined_call_operand.vmem [shape: f32[1,256], index: 2, kind: input, shape index: {}]
  %s3 = inlined_call_operand.vmem [shape: f32[1,256], index: 3, kind: input, shape index: {}]
  %s4 = inlined_call_operand.vmem [shape: f32[1,256], index: 4, kind: input, shape index: {}]
  %s5 = inlined_call_operand.vmem [shape: f32[32,256], index: 5, kind: output, shape index: {}]
  %s6 = sld [smem:[#allocation0]]
  $region30: #{label_encoder.5} parent=0
    _
  %s8 = ssub.s32 1, %s6
  %s9 = scalar_select 0, %s8, %s6
  // Predicated region
  $region2: #{label_encoder.5} parent=0 // pred_check
    _
  $region3: #{label_encoder.5} parent=0 // pred_check_branch
    %11 = sbr.rel (0) target = $region5
  $region4: #{label_encoder.5} parent=0 // pred_region
    _
  $region5: #{label_encoder.5} parent=0 // pred_fallthru
    _
  // Predicated region
  $region6: #{label_encoder.5} parent=0 // pred_check
    _
  $region7: #{label_encoder.5} parent=0 // pred_check_branch
    %13 = sbr.rel (0) target = $region9
  $region8: #{label_encoder.5} parent=0 // pred_region
    _
  $region9: #{label_encoder.5} parent=0 // pred_fallthru
    _
  // Predicated region
  $region10: #{label_encoder.5} parent=0 // pred_check
    _
  $region11: #{label_encoder.5} parent=0 // pred_check_branch
    %15 = sbr.rel (0) target = $region13
  $region12: #{label_encoder.5} parent=0 // pred_region
    _
  $region13: #{label_encoder.5} parent=0 // pred_fallthru
    _
  // Predicated region
  $region14: #{label_encoder.5} parent=0 // pred_check
    _
  $region15: #{label_encoder.5} parent=0 // pred_check_branch
    %17 = sbr.rel (0) target = $region17
  $region16: #{label_encoder.5} parent=0 // pred_region
    _
  $region17: #{label_encoder.5} parent=0 // pred_fallthru
    _
  // Predicated region
  $region18: #{label_encoder.5} parent=0 // pred_check
    _
  $region19: #{label_encoder.5} parent=0 // pred_check_branch
    %19 = sbr.rel (0) target = $region21
  $region20: #{label_encoder.5} parent=0 // pred_region
    _
  $region21: #{label_encoder.5} parent=0 // pred_fallthru
    _
  %v21 = vld [vmem:[%s0] sm:$0xff]
  %v22 = vld [vmem:[%s0 + $0x8] sm:$0xff]
  %v23 = vld [vmem:[%s0 + $0x10] sm:$0xff]
  %v24 = vld [vmem:[%s0 + $0x18] sm:$0xff]
  %v25 = vld [vmem:[%s0 + $0x20] sm:$0xf]
  %v26 = vld [vmem:[%s0 + $0x24] sm:$0xff]
  %v27 = vld [vmem:[%s0 + $0x2c] sm:$0xff]
  %v28 = vld [vmem:[%s0 + $0x34] sm:$0xff]
  %v29 = vld [vmem:[%s0 + $0x3c] sm:$0xff]
  %v30 = vld [vmem:[%s0 + $0x44] sm:$0xf]
  %v31 = vld [vmem:[%s0 + $0x48] sm:$0xff]
  %v32 = vld [vmem:[%s0 + $0x50] sm:$0xff]
  %v33 = vld [vmem:[%s0 + $0x58] sm:$0xff]
  %v34 = vld [vmem:[%s0 + $0x60] sm:$0xff]
  %v35 = vld [vmem:[%s0 + $0x68] sm:$0xf]
  %v36 = vld [vmem:[%s0 + $0x6c] sm:$0xff]
  %v37 = vld [vmem:[%s0 + $0x74] sm:$0xff]
  %v38 = vld [vmem:[%s0 + $0x7c] sm:$0xff]
  %v39 = vld [vmem:[%s0 + $0x84] sm:$0xff]
  %v40 = vld [vmem:[%s0 + $0x8c] sm:$0xf]
  %v41 = vld [vmem:[%s1] sm:$0xff]
  %v42 = vld [vmem:[%s1 + $0x8] sm:$0xff]
  %v43 = vld [vmem:[%s1 + $0x10] sm:$0xff]
  %v44 = vld [vmem:[%s1 + $0x18] sm:$0xff]
  %v45 = vld [vmem:[%s1 + $0x20] sm:$0xff]
  %v46 = vld [vmem:[%s1 + $0x28] sm:$0xff]
  %v47 = vld [vmem:[%s1 + $0x30] sm:$0xff]
  %v48 = vld [vmem:[%s1 + $0x38] sm:$0xff]
  %v49 = vld [vmem:[%s1 + $0x40] sm:$0xff]
  %v50 = vld [vmem:[%s1 + $0x48] sm:$0xff]
  %v51 = vld [vmem:[%s1 + $0x50] sm:$0xff]
  %v52 = vld [vmem:[%s1 + $0x58] sm:$0xff]
  %v53 = vld [vmem:[%s1 + $0x60] sm:$0xff]
  %v54 = vld [vmem:[%s1 + $0x68] sm:$0xff]
  %v55 = vld [vmem:[%s1 + $0x70] sm:$0xff]
  %v56 = vld [vmem:[%s1 + $0x78] sm:$0xff]
  %v57 = vld [vmem:[%s1 + $0x80] sm:$0xff]
  %v58 = vld [vmem:[%s1 + $0x88] sm:$0xff]
  %v59 = vld [vmem:[%s1 + $0x90] sm:$0xff]
  %v60 = vld [vmem:[%s1 + $0x98] sm:$0xff]
  %v61 = vld [vmem:[%s1 + $0xa0] sm:$0xff]
  %v62 = vld [vmem:[%s1 + $0xa8] sm:$0xff]
  %v63 = vld [vmem:[%s1 + $0xb0] sm:$0xff]
  %v64 = vld [vmem:[%s1 + $0xb8] sm:$0xff]
  %v65 = vld [vmem:[%s1 + $0xc0] sm:$0xff]
  %v66 = vld [vmem:[%s1 + $0xc8] sm:$0xff]
  %v67 = vld [vmem:[%s1 + $0xd0] sm:$0xff]
  %v68 = vld [vmem:[%s1 + $0xd8] sm:$0xff]
  %v69 = vld [vmem:[%s1 + $0xe0] sm:$0xff]
  %v70 = vld [vmem:[%s1 + $0xe8] sm:$0xff]
  %v71 = vld [vmem:[%s1 + $0xf0] sm:$0xff]
  %v72 = vld [vmem:[%s1 + $0xf8] sm:$0xff]
  %v73 = vld [vmem:[%s1 + $0x100] sm:$0xff]
  %v74 = vld [vmem:[%s1 + $0x108] sm:$0xff]
  %v75 = vld [vmem:[%s1 + $0x110] sm:$0xff]
  %v76 = vld [vmem:[%s1 + $0x118] sm:$0xff]
  %v77 = vld [vmem:[%s1 + $0x120] sm:$0xff]
  %v78 = vld [vmem:[%s1 + $0x128] sm:$0xff]
  %v79 = vld [vmem:[%s1 + $0x130] sm:$0xff]
  %v80 = vld [vmem:[%s1 + $0x138] sm:$0xff]
  %v81 = vld [vmem:[%s1 + $0x140] sm:$0xff]
  %v82 = vld [vmem:[%s1 + $0x148] sm:$0xff]
  %v83 = vld [vmem:[%s1 + $0x150] sm:$0xff]
  %v84 = vld [vmem:[%s1 + $0x158] sm:$0xff]
  %v85 = vld [vmem:[%s1 + $0x160] sm:$0xff]
  %v86 = vld [vmem:[%s1 + $0x168] sm:$0xff]
  %v87 = vld [vmem:[%s1 + $0x170] sm:$0xff]
  %v88 = vld [vmem:[%s1 + $0x178] sm:$0xff]
  %v89 = vld [vmem:[%s1 + $0x180] sm:$0xff]
  %v90 = vld [vmem:[%s1 + $0x188] sm:$0xff]
  %v91 = vld [vmem:[%s1 + $0x190] sm:$0xff]
  %v92 = vld [vmem:[%s1 + $0x198] sm:$0xff]
  %v93 = vld [vmem:[%s1 + $0x1a0] sm:$0xff]
  %v94 = vld [vmem:[%s1 + $0x1a8] sm:$0xff]
  %v95 = vld [vmem:[%s1 + $0x1b0] sm:$0xff]
  %v96 = vld [vmem:[%s1 + $0x1b8] sm:$0xff]
  %v97 = vld [vmem:[%s1 + $0x1c0] sm:$0xff]
  %v98 = vld [vmem:[%s1 + $0x1c8] sm:$0xff]
  %v99 = vld [vmem:[%s1 + $0x1d0] sm:$0xff]
  %v100 = vld [vmem:[%s1 + $0x1d8] sm:$0xff]
  %v101 = vld [vmem:[%s1 + $0x1e0] sm:$0xff]
  %v102 = vld [vmem:[%s1 + $0x1e8] sm:$0xff]
  %v103 = vld [vmem:[%s1 + $0x1f0] sm:$0xff]
  %v104 = vld [vmem:[%s1 + $0x1f8] sm:$0xff]
  %v105 = vld [vmem:[%s1 + $0x200] sm:$0xff]
  %v106 = vld [vmem:[%s1 + $0x208] sm:$0xff]
  %v107 = vld [vmem:[%s1 + $0x210] sm:$0xff]
  %v108 = vld [vmem:[%s1 + $0x218] sm:$0xff]
  %v109 = vld [vmem:[%s1 + $0x220] sm:$0xff]
  %v110 = vld [vmem:[%s1 + $0x228] sm:$0xff]
  %v111 = vld [vmem:[%s1 + $0x230] sm:$0xff]
  %v112 = vld [vmem:[%s1 + $0x238] sm:$0xff]
  %v113 = vld [vmem:[%s1 + $0x240] sm:$0xff]
  %v114 = vld [vmem:[%s1 + $0x248] sm:$0xff]
  %v115 = vld [vmem:[%s1 + $0x250] sm:$0xff]
  %v116 = vld [vmem:[%s1 + $0x258] sm:$0xff]
  %v117 = vld [vmem:[%s1 + $0x260] sm:$0xff]
  %v118 = vld [vmem:[%s1 + $0x268] sm:$0xff]
  %v119 = vld [vmem:[%s1 + $0x270] sm:$0xff]
  %v120 = vld [vmem:[%s1 + $0x278] sm:$0xff]
  %v121 = vld [vmem:[%s1 + $0x280] sm:$0xff]
  %v122 = vld [vmem:[%s1 + $0x288] sm:$0xff]
  %v123 = vld [vmem:[%s1 + $0x290] sm:$0xff]
  %v124 = vld [vmem:[%s1 + $0x298] sm:$0xff]
  %v125 = vld [vmem:[%s1 + $0x2a0] sm:$0xff]
  %v126 = vld [vmem:[%s1 + $0x2a8] sm:$0xff]
  %v127 = vld [vmem:[%s1 + $0x2b0] sm:$0xff]
  %v128 = vld [vmem:[%s1 + $0x2b8] sm:$0xff]
  %v129 = vld [vmem:[%s1 + $0x2c0] sm:$0xff]
  %v130 = vld [vmem:[%s1 + $0x2c8] sm:$0xff]
  %v131 = vld [vmem:[%s1 + $0x2d0] sm:$0xff]
  %v132 = vld [vmem:[%s1 + $0x2d8] sm:$0xff]
  %v133 = vld [vmem:[%s1 + $0x2e0] sm:$0xff]
  %v134 = vld [vmem:[%s1 + $0x2e8] sm:$0xff]
  %v135 = vld [vmem:[%s1 + $0x2f0] sm:$0xff]
  %v136 = vld [vmem:[%s1 + $0x2f8] sm:$0xff]
  %v137 = vld [vmem:[%s1 + $0x300] sm:$0xff]
  %v138 = vld [vmem:[%s1 + $0x308] sm:$0xff]
  %v139 = vld [vmem:[%s1 + $0x310] sm:$0xff]
  %v140 = vld [vmem:[%s1 + $0x318] sm:$0xff]
  %v141 = vld [vmem:[%s1 + $0x320] sm:$0xff]
  %v142 = vld [vmem:[%s1 + $0x328] sm:$0xff]
  %v143 = vld [vmem:[%s1 + $0x330] sm:$0xff]
  %v144 = vld [vmem:[%s1 + $0x338] sm:$0xff]
  %v145 = vld [vmem:[%s1 + $0x340] sm:$0xff]
  %v146 = vld [vmem:[%s1 + $0x348] sm:$0xff]
  %v147 = vld [vmem:[%s1 + $0x350] sm:$0xff]
  %v148 = vld [vmem:[%s1 + $0x358] sm:$0xff]
  %v149 = vld [vmem:[%s1 + $0x360] sm:$0xff]
  %v150 = vld [vmem:[%s1 + $0x368] sm:$0xff]
  %v151 = vld [vmem:[%s1 + $0x370] sm:$0xff]
  %v152 = vld [vmem:[%s1 + $0x378] sm:$0xff]
  %v153 = vld [vmem:[%s1 + $0x380] sm:$0xff]
  %v154 = vld [vmem:[%s1 + $0x388] sm:$0xff]
  %v155 = vld [vmem:[%s1 + $0x390] sm:$0xff]
  %v156 = vld [vmem:[%s1 + $0x398] sm:$0xff]
  %v157 = vld [vmem:[%s1 + $0x3a0] sm:$0xff]
  %v158 = vld [vmem:[%s1 + $0x3a8] sm:$0xff]
  %v159 = vld [vmem:[%s1 + $0x3b0] sm:$0xff]
  %v160 = vld [vmem:[%s1 + $0x3b8] sm:$0xff]
  %v161 = vld [vmem:[%s1 + $0x3c0] sm:$0xff]
  %v162 = vld [vmem:[%s1 + $0x3c8] sm:$0xff]
  %v163 = vld [vmem:[%s1 + $0x3d0] sm:$0xff]
  %v164 = vld [vmem:[%s1 + $0x3d8] sm:$0xff]
  %v165 = vld [vmem:[%s1 + $0x3e0] sm:$0xff]
  %v166 = vld [vmem:[%s1 + $0x3e8] sm:$0xff]
  %v167 = vld [vmem:[%s1 + $0x3f0] sm:$0xff]
  %v168 = vld [vmem:[%s1 + $0x3f8] sm:$0xff]
  %v169 = vld [vmem:[%s1 + $0x400] sm:$0xff]
  %v170 = vld [vmem:[%s1 + $0x408] sm:$0xff]
  %v171 = vld [vmem:[%s1 + $0x410] sm:$0xff]
  %v172 = vld [vmem:[%s1 + $0x418] sm:$0xff]
  %v173 = vld [vmem:[%s1 + $0x420] sm:$0xff]
  %v174 = vld [vmem:[%s1 + $0x428] sm:$0xff]
  %v175 = vld [vmem:[%s1 + $0x430] sm:$0xff]
  %v176 = vld [vmem:[%s1 + $0x438] sm:$0xff]
  %v177 = vld [vmem:[%s1 + $0x440] sm:$0xff]
  %v178 = vld [vmem:[%s1 + $0x448] sm:$0xff]
  %v179 = vld [vmem:[%s1 + $0x450] sm:$0xff]
  %v180 = vld [vmem:[%s1 + $0x458] sm:$0xff]
  %v181 = vld [vmem:[%s1 + $0x460] sm:$0xff]
  %v182 = vld [vmem:[%s1 + $0x468] sm:$0xff]
  %v183 = vld [vmem:[%s1 + $0x470] sm:$0xff]
  %v184 = vld [vmem:[%s1 + $0x478] sm:$0xff]
  %v185 = vld [vmem:[%s2] sm:$0x3]
  %v187 = vlaneseq
  %v188 = vshrl.u32 %v187, 7
  %v189 = vsub.s32 0, %v188
  %v190 = vrot.slane %v185, %v189
  %v191 = vlaneseq
  %v192 = vshrl.u32 %v191, 7
  %v193 = vsub.s32 1, %v192
  %v194 = vrot.slane %v185, %v193
  %v217 = vunpack.c.l.b16 %v21
  %v218 = vunpack.c.h.b16 %v21
  %v219 = vunpack.c.l.b16 %v22
  %v220 = vunpack.c.h.b16 %v22
  %v221 = vunpack.c.l.b16 %v23
  %v222 = vunpack.c.h.b16 %v23
  %v223 = vunpack.c.l.b16 %v24
  %v224 = vunpack.c.h.b16 %v24
  %v225 = vunpack.c.l.b16 %v25
  %v226 = vunpack.c.l.b16 %v26
  %v227 = vunpack.c.h.b16 %v26
  %v228 = vunpack.c.l.b16 %v27
  %v229 = vunpack.c.h.b16 %v27
  %v230 = vunpack.c.l.b16 %v28
  %v231 = vunpack.c.h.b16 %v28
  %v232 = vunpack.c.l.b16 %v29
  %v233 = vunpack.c.h.b16 %v29
  %v234 = vunpack.c.l.b16 %v30
  %v235 = vunpack.c.l.b16 %v31
  %v236 = vunpack.c.h.b16 %v31
  %v237 = vunpack.c.l.b16 %v32
  %v238 = vunpack.c.h.b16 %v32
  %v239 = vunpack.c.l.b16 %v33
  %v240 = vunpack.c.h.b16 %v33
  %v241 = vunpack.c.l.b16 %v34
  %v242 = vunpack.c.h.b16 %v34
  %v243 = vunpack.c.l.b16 %v35
  %v244 = vunpack.c.l.b16 %v36
  %v245 = vunpack.c.h.b16 %v36
  %v246 = vunpack.c.l.b16 %v37
  %v247 = vunpack.c.h.b16 %v37
  %v248 = vunpack.c.l.b16 %v38
  %v249 = vunpack.c.h.b16 %v38
  %v250 = vunpack.c.l.b16 %v39
  %v251 = vunpack.c.h.b16 %v39
  %v252 = vunpack.c.l.b16 %v40
  %v253 = vpack.c.b16 %v226, %v217
  %v254 = vpack.c.b16 %v227, %v218
  %v255 = vpack.c.b16 %v228, %v219
  %v256 = vpack.c.b16 %v229, %v220
  %v257 = vpack.c.b16 %v230, %v221
  %v258 = vpack.c.b16 %v231, %v222
  %v259 = vpack.c.b16 %v232, %v223
  %v260 = vpack.c.b16 %v233, %v224
  %v261 = vpack.c.b16 %v234, %v225
  %v262 = vpack.c.b16 %v244, %v235
  %v263 = vpack.c.b16 %v245, %v236
  %v264 = vpack.c.b16 %v246, %v237
  %v265 = vpack.c.b16 %v247, %v238
  %v266 = vpack.c.b16 %v248, %v239
  %v267 = vpack.c.b16 %v249, %v240
  %v268 = vpack.c.b16 %v250, %v241
  %v269 = vpack.c.b16 %v251, %v242
  %v270 = vpack.c.b16 %v252, %v243
  %v433 = vunpack.c.l.b16 %v41
  %v434 = vunpack.c.h.b16 %v41
  %v435 = vunpack.c.l.b16 %v42
  %v436 = vunpack.c.h.b16 %v42
  %v437 = vunpack.c.l.b16 %v43
  %v438 = vunpack.c.h.b16 %v43
  %v439 = vunpack.c.l.b16 %v44
  %v440 = vunpack.c.h.b16 %v44
  %v441 = vunpack.c.l.b16 %v45
  %v442 = vunpack.c.h.b16 %v45
  %v443 = vunpack.c.l.b16 %v46
  %v444 = vunpack.c.h.b16 %v46
  %v445 = vunpack.c.l.b16 %v47
  %v446 = vunpack.c.h.b16 %v47
  %v447 = vunpack.c.l.b16 %v48
  %v448 = vunpack.c.h.b16 %v48
  %v449 = vunpack.c.l.b16 %v49
  %v450 = vunpack.c.h.b16 %v49
  %v451 = vunpack.c.l.b16 %v50
  %v452 = vunpack.c.h.b16 %v50
  %v453 = vunpack.c.l.b16 %v51
  %v454 = vunpack.c.h.b16 %v51
  %v455 = vunpack.c.l.b16 %v52
  %v456 = vunpack.c.h.b16 %v52
  %v457 = vunpack.c.l.b16 %v53
  %v458 = vunpack.c.h.b16 %v53
  %v459 = vunpack.c.l.b16 %v54
  %v460 = vunpack.c.h.b16 %v54
  %v461 = vunpack.c.l.b16 %v55
  %v462 = vunpack.c.h.b16 %v55
  %v463 = vunpack.c.l.b16 %v56
  %v464 = vunpack.c.h.b16 %v56
  %v465 = vunpack.c.l.b16 %v57
  %v466 = vunpack.c.h.b16 %v57
  %v467 = vunpack.c.l.b16 %v58
  %v468 = vunpack.c.h.b16 %v58
  %v469 = vunpack.c.l.b16 %v59
  %v470 = vunpack.c.h.b16 %v59
  %v471 = vunpack.c.l.b16 %v60
  %v472 = vunpack.c.h.b16 %v60
  %v473 = vunpack.c.l.b16 %v61
  %v474 = vunpack.c.h.b16 %v61
  %v475 = vunpack.c.l.b16 %v62
  %v476 = vunpack.c.h.b16 %v62
  %v477 = vunpack.c.l.b16 %v63
  %v478 = vunpack.c.h.b16 %v63
  %v479 = vunpack.c.l.b16 %v64
  %v480 = vunpack.c.h.b16 %v64
  %v481 = vunpack.c.l.b16 %v65
  %v482 = vunpack.c.h.b16 %v65
  %v483 = vunpack.c.l.b16 %v66
  %v484 = vunpack.c.h.b16 %v66
  %v485 = vunpack.c.l.b16 %v67
  %v486 = vunpack.c.h.b16 %v67
  %v487 = vunpack.c.l.b16 %v68
  %v488 = vunpack.c.h.b16 %v68
  %v489 = vunpack.c.l.b16 %v69
  %v490 = vunpack.c.h.b16 %v69
  %v491 = vunpack.c.l.b16 %v70
  %v492 = vunpack.c.h.b16 %v70
  %v493 = vunpack.c.l.b16 %v71
  %v494 = vunpack.c.h.b16 %v71
  %v495 = vunpack.c.l.b16 %v72
  %v496 = vunpack.c.h.b16 %v72
  %v497 = vunpack.c.l.b16 %v73
  %v498 = vunpack.c.h.b16 %v73
  %v499 = vunpack.c.l.b16 %v74
  %v500 = vunpack.c.h.b16 %v74
  %v501 = vunpack.c.l.b16 %v75
  %v502 = vunpack.c.h.b16 %v75
  %v503 = vunpack.c.l.b16 %v76
  %v504 = vunpack.c.h.b16 %v76
  %v505 = vunpack.c.l.b16 %v77
  %v506 = vunpack.c.h.b16 %v77
  %v507 = vunpack.c.l.b16 %v78
  %v508 = vunpack.c.h.b16 %v78
  %v509 = vunpack.c.l.b16 %v79
  %v510 = vunpack.c.h.b16 %v79
  %v511 = vunpack.c.l.b16 %v80
  %v512 = vunpack.c.h.b16 %v80
  %v513 = vunpack.c.l.b16 %v81
  %v514 = vunpack.c.h.b16 %v81
  %v515 = vunpack.c.l.b16 %v82
  %v516 = vunpack.c.h.b16 %v82
  %v517 = vunpack.c.l.b16 %v83
  %v518 = vunpack.c.h.b16 %v83
  %v519 = vunpack.c.l.b16 %v84
  %v520 = vunpack.c.h.b16 %v84
  %v521 = vunpack.c.l.b16 %v85
  %v522 = vunpack.c.h.b16 %v85
  %v523 = vunpack.c.l.b16 %v86
  %v524 = vunpack.c.h.b16 %v86
  %v525 = vunpack.c.l.b16 %v87
  %v526 = vunpack.c.h.b16 %v87
  %v527 = vunpack.c.l.b16 %v88
  %v528 = vunpack.c.h.b16 %v88
  %v529 = vunpack.c.l.b16 %v89
  %v530 = vunpack.c.h.b16 %v89
  %v531 = vunpack.c.l.b16 %v90
  %v532 = vunpack.c.h.b16 %v90
  %v533 = vunpack.c.l.b16 %v91
  %v534 = vunpack.c.h.b16 %v91
  %v535 = vunpack.c.l.b16 %v92
  %v536 = vunpack.c.h.b16 %v92
  %v537 = vunpack.c.l.b16 %v93
  %v538 = vunpack.c.h.b16 %v93
  %v539 = vunpack.c.l.b16 %v94
  %v540 = vunpack.c.h.b16 %v94
  %v541 = vunpack.c.l.b16 %v95
  %v542 = vunpack.c.h.b16 %v95
  %v543 = vunpack.c.l.b16 %v96
  %v544 = vunpack.c.h.b16 %v96
  %v545 = vunpack.c.l.b16 %v97
  %v546 = vunpack.c.h.b16 %v97
  %v547 = vunpack.c.l.b16 %v98
  %v548 = vunpack.c.h.b16 %v98
  %v549 = vunpack.c.l.b16 %v99
  %v550 = vunpack.c.h.b16 %v99
  %v551 = vunpack.c.l.b16 %v100
  %v552 = vunpack.c.h.b16 %v100
  %v553 = vunpack.c.l.b16 %v101
  %v554 = vunpack.c.h.b16 %v101
  %v555 = vunpack.c.l.b16 %v102
  %v556 = vunpack.c.h.b16 %v102
  %v557 = vunpack.c.l.b16 %v103
  %v558 = vunpack.c.h.b16 %v103
  %v559 = vunpack.c.l.b16 %v104
  %v560 = vunpack.c.h.b16 %v104
  %v561 = vunpack.c.l.b16 %v105
  %v562 = vunpack.c.h.b16 %v105
  %v563 = vunpack.c.l.b16 %v106
  %v564 = vunpack.c.h.b16 %v106
  %v565 = vunpack.c.l.b16 %v107
  %v566 = vunpack.c.h.b16 %v107
  %v567 = vunpack.c.l.b16 %v108
  %v568 = vunpack.c.h.b16 %v108
  %v569 = vunpack.c.l.b16 %v109
  %v570 = vunpack.c.h.b16 %v109
  %v571 = vunpack.c.l.b16 %v110
  %v572 = vunpack.c.h.b16 %v110
  %v573 = vunpack.c.l.b16 %v111
  %v574 = vunpack.c.h.b16 %v111
  %v575 = vunpack.c.l.b16 %v112
  %v576 = vunpack.c.h.b16 %v112
  %v577 = vunpack.c.l.b16 %v113
  %v578 = vunpack.c.h.b16 %v113
  %v579 = vunpack.c.l.b16 %v114
  %v580 = vunpack.c.h.b16 %v114
  %v581 = vunpack.c.l.b16 %v115
  %v582 = vunpack.c.h.b16 %v115
  %v583 = vunpack.c.l.b16 %v116
  %v584 = vunpack.c.h.b16 %v116
  %v585 = vunpack.c.l.b16 %v117
  %v586 = vunpack.c.h.b16 %v117
  %v587 = vunpack.c.l.b16 %v118
  %v588 = vunpack.c.h.b16 %v118
  %v589 = vunpack.c.l.b16 %v119
  %v590 = vunpack.c.h.b16 %v119
  %v591 = vunpack.c.l.b16 %v120
  %v592 = vunpack.c.h.b16 %v120
  %v593 = vunpack.c.l.b16 %v121
  %v594 = vunpack.c.h.b16 %v121
  %v595 = vunpack.c.l.b16 %v122
  %v596 = vunpack.c.h.b16 %v122
  %v597 = vunpack.c.l.b16 %v123
  %v598 = vunpack.c.h.b16 %v123
  %v599 = vunpack.c.l.b16 %v124
  %v600 = vunpack.c.h.b16 %v124
  %v601 = vunpack.c.l.b16 %v125
  %v602 = vunpack.c.h.b16 %v125
  %v603 = vunpack.c.l.b16 %v126
  %v604 = vunpack.c.h.b16 %v126
  %v605 = vunpack.c.l.b16 %v127
  %v606 = vunpack.c.h.b16 %v127
  %v607 = vunpack.c.l.b16 %v128
  %v608 = vunpack.c.h.b16 %v128
  %v609 = vunpack.c.l.b16 %v129
  %v610 = vunpack.c.h.b16 %v129
  %v611 = vunpack.c.l.b16 %v130
  %v612 = vunpack.c.h.b16 %v130
  %v613 = vunpack.c.l.b16 %v131
  %v614 = vunpack.c.h.b16 %v131
  %v615 = vunpack.c.l.b16 %v132
  %v616 = vunpack.c.h.b16 %v132
  %v617 = vunpack.c.l.b16 %v133
  %v618 = vunpack.c.h.b16 %v133
  %v619 = vunpack.c.l.b16 %v134
  %v620 = vunpack.c.h.b16 %v134
  %v621 = vunpack.c.l.b16 %v135
  %v622 = vunpack.c.h.b16 %v135
  %v623 = vunpack.c.l.b16 %v136
  %v624 = vunpack.c.h.b16 %v136
  %v625 = vunpack.c.l.b16 %v137
  %v626 = vunpack.c.h.b16 %v137
  %v627 = vunpack.c.l.b16 %v138
  %v628 = vunpack.c.h.b16 %v138
  %v629 = vunpack.c.l.b16 %v139
  %v630 = vunpack.c.h.b16 %v139
  %v631 = vunpack.c.l.b16 %v140
  %v632 = vunpack.c.h.b16 %v140
  %v633 = vunpack.c.l.b16 %v141
  %v634 = vunpack.c.h.b16 %v141
  %v635 = vunpack.c.l.b16 %v142
  %v636 = vunpack.c.h.b16 %v142
  %v637 = vunpack.c.l.b16 %v143
  %v638 = vunpack.c.h.b16 %v143
  %v639 = vunpack.c.l.b16 %v144
  %v640 = vunpack.c.h.b16 %v144
  %v641 = vunpack.c.l.b16 %v145
  %v642 = vunpack.c.h.b16 %v145
  %v643 = vunpack.c.l.b16 %v146
  %v644 = vunpack.c.h.b16 %v146
  %v645 = vunpack.c.l.b16 %v147
  %v646 = vunpack.c.h.b16 %v147
  %v647 = vunpack.c.l.b16 %v148
  %v648 = vunpack.c.h.b16 %v148
  %v649 = vunpack.c.l.b16 %v149
  %v650 = vunpack.c.h.b16 %v149
  %v651 = vunpack.c.l.b16 %v150
  %v652 = vunpack.c.h.b16 %v150
  %v653 = vunpack.c.l.b16 %v151
  %v654 = vunpack.c.h.b16 %v151
  %v655 = vunpack.c.l.b16 %v152
  %v656 = vunpack.c.h.b16 %v152
  %v657 = vunpack.c.l.b16 %v153
  %v658 = vunpack.c.h.b16 %v153
  %v659 = vunpack.c.l.b16 %v154
  %v660 = vunpack.c.h.b16 %v154
  %v661 = vunpack.c.l.b16 %v155
  %v662 = vunpack.c.h.b16 %v155
  %v663 = vunpack.c.l.b16 %v156
  %v664 = vunpack.c.h.b16 %v156
  %v665 = vunpack.c.l.b16 %v157
  %v666 = vunpack.c.h.b16 %v157
  %v667 = vunpack.c.l.b16 %v158
  %v668 = vunpack.c.h.b16 %v158
  %v669 = vunpack.c.l.b16 %v159
  %v670 = vunpack.c.h.b16 %v159
  %v671 = vunpack.c.l.b16 %v160
  %v672 = vunpack.c.h.b16 %v160
  %v673 = vunpack.c.l.b16 %v161
  %v674 = vunpack.c.h.b16 %v161
  %v675 = vunpack.c.l.b16 %v162
  %v676 = vunpack.c.h.b16 %v162
  %v677 = vunpack.c.l.b16 %v163
  %v678 = vunpack.c.h.b16 %v163
  %v679 = vunpack.c.l.b16 %v164
  %v680 = vunpack.c.h.b16 %v164
  %v681 = vunpack.c.l.b16 %v165
  %v682 = vunpack.c.h.b16 %v165
  %v683 = vunpack.c.l.b16 %v166
  %v684 = vunpack.c.h.b16 %v166
  %v685 = vunpack.c.l.b16 %v167
  %v686 = vunpack.c.h.b16 %v167
  %v687 = vunpack.c.l.b16 %v168
  %v688 = vunpack.c.h.b16 %v168
  %v689 = vunpack.c.l.b16 %v169
  %v690 = vunpack.c.h.b16 %v169
  %v691 = vunpack.c.l.b16 %v170
  %v692 = vunpack.c.h.b16 %v170
  %v693 = vunpack.c.l.b16 %v171
  %v694 = vunpack.c.h.b16 %v171
  %v695 = vunpack.c.l.b16 %v172
  %v696 = vunpack.c.h.b16 %v172
  %v697 = vunpack.c.l.b16 %v173
  %v698 = vunpack.c.h.b16 %v173
  %v699 = vunpack.c.l.b16 %v174
  %v700 = vunpack.c.h.b16 %v174
  %v701 = vunpack.c.l.b16 %v175
  %v702 = vunpack.c.h.b16 %v175
  %v703 = vunpack.c.l.b16 %v176
  %v704 = vunpack.c.h.b16 %v176
  %v705 = vunpack.c.l.b16 %v177
  %v706 = vunpack.c.h.b16 %v177
  %v707 = vunpack.c.l.b16 %v178
  %v708 = vunpack.c.h.b16 %v178
  %v709 = vunpack.c.l.b16 %v179
  %v710 = vunpack.c.h.b16 %v179
  %v711 = vunpack.c.l.b16 %v180
  %v712 = vunpack.c.h.b16 %v180
  %v713 = vunpack.c.l.b16 %v181
  %v714 = vunpack.c.h.b16 %v181
  %v715 = vunpack.c.l.b16 %v182
  %v716 = vunpack.c.h.b16 %v182
  %v717 = vunpack.c.l.b16 %v183
  %v718 = vunpack.c.h.b16 %v183
  %v719 = vunpack.c.l.b16 %v184
  %v720 = vunpack.c.h.b16 %v184
  %v721 = vpack.c.b16 %v435, %v433
  %v722 = vpack.c.b16 %v436, %v434
  %v723 = vpack.c.b16 %v439, %v437
  %v724 = vpack.c.b16 %v440, %v438
  %v725 = vpack.c.b16 %v443, %v441
  %v726 = vpack.c.b16 %v444, %v442
  %v727 = vpack.c.b16 %v447, %v445
  %v728 = vpack.c.b16 %v448, %v446
  %v729 = vpack.c.b16 %v451, %v449
  %v730 = vpack.c.b16 %v452, %v450
  %v731 = vpack.c.b16 %v455, %v453
  %v732 = vpack.c.b16 %v456, %v454
  %v733 = vpack.c.b16 %v459, %v457
  %v734 = vpack.c.b16 %v460, %v458
  %v735 = vpack.c.b16 %v463, %v461
  %v736 = vpack.c.b16 %v464, %v462
  %v737 = vpack.c.b16 %v467, %v465
  %v738 = vpack.c.b16 %v468, %v466
  %v739 = vpack.c.b16 %v471, %v469
  %v740 = vpack.c.b16 %v472, %v470
  %v741 = vpack.c.b16 %v475, %v473
  %v742 = vpack.c.b16 %v476, %v474
  %v743 = vpack.c.b16 %v479, %v477
  %v744 = vpack.c.b16 %v480, %v478
  %v745 = vpack.c.b16 %v483, %v481
  %v746 = vpack.c.b16 %v484, %v482
  %v747 = vpack.c.b16 %v487, %v485
  %v748 = vpack.c.b16 %v488, %v486
  %v749 = vpack.c.b16 %v491, %v489
  %v750 = vpack.c.b16 %v492, %v490
  %v751 = vpack.c.b16 %v495, %v493
  %v752 = vpack.c.b16 %v496, %v494
  %v753 = vpack.c.b16 %v499, %v497
  %v754 = vpack.c.b16 %v500, %v498
  %v755 = vpack.c.b16 %v503, %v501
  %v756 = vpack.c.b16 %v504, %v502
  %v757 = vpack.c.b16 %v507, %v505
  %v758 = vpack.c.b16 %v508, %v506
  %v759 = vpack.c.b16 %v511, %v509
  %v760 = vpack.c.b16 %v512, %v510
  %v761 = vpack.c.b16 %v515, %v513
  %v762 = vpack.c.b16 %v516, %v514
  %v763 = vpack.c.b16 %v519, %v517
  %v764 = vpack.c.b16 %v520, %v518
  %v765 = vpack.c.b16 %v523, %v521
  %v766 = vpack.c.b16 %v524, %v522
  %v767 = vpack.c.b16 %v527, %v525
  %v768 = vpack.c.b16 %v528, %v526
  %v769 = vpack.c.b16 %v531, %v529
  %v770 = vpack.c.b16 %v532, %v530
  %v771 = vpack.c.b16 %v535, %v533
  %v772 = vpack.c.b16 %v536, %v534
  %v773 = vpack.c.b16 %v539, %v537
  %v774 = vpack.c.b16 %v540, %v538
  %v775 = vpack.c.b16 %v543, %v541
  %v776 = vpack.c.b16 %v544, %v542
  %v777 = vpack.c.b16 %v547, %v545
  %v778 = vpack.c.b16 %v548, %v546
  %v779 = vpack.c.b16 %v551, %v549
  %v780 = vpack.c.b16 %v552, %v550
  %v781 = vpack.c.b16 %v555, %v553
  %v782 = vpack.c.b16 %v556, %v554
  %v783 = vpack.c.b16 %v559, %v557
  %v784 = vpack.c.b16 %v560, %v558
  %v785 = vpack.c.b16 %v563, %v561
  %v786 = vpack.c.b16 %v564, %v562
  %v787 = vpack.c.b16 %v567, %v565
  %v788 = vpack.c.b16 %v568, %v566
  %v789 = vpack.c.b16 %v571, %v569
  %v790 = vpack.c.b16 %v572, %v570
  %v791 = vpack.c.b16 %v575, %v573
  %v792 = vpack.c.b16 %v576, %v574
  %v793 = vpack.c.b16 %v579, %v577
  %v794 = vpack.c.b16 %v580, %v578
  %v795 = vpack.c.b16 %v583, %v581
  %v796 = vpack.c.b16 %v584, %v582
  %v797 = vpack.c.b16 %v587, %v585
  %v798 = vpack.c.b16 %v588, %v586
  %v799 = vpack.c.b16 %v591, %v589
  %v800 = vpack.c.b16 %v592, %v590
  %v801 = vpack.c.b16 %v595, %v593
  %v802 = vpack.c.b16 %v596, %v594
  %v803 = vpack.c.b16 %v599, %v597
  %v804 = vpack.c.b16 %v600, %v598
  %v805 = vpack.c.b16 %v603, %v601
  %v806 = vpack.c.b16 %v604, %v602
  %v807 = vpack.c.b16 %v607, %v605
  %v808 = vpack.c.b16 %v608, %v606
  %v809 = vpack.c.b16 %v611, %v609
  %v810 = vpack.c.b16 %v612, %v610
  %v811 = vpack.c.b16 %v615, %v613
  %v812 = vpack.c.b16 %v616, %v614
  %v813 = vpack.c.b16 %v619, %v617
  %v814 = vpack.c.b16 %v620, %v618
  %v815 = vpack.c.b16 %v623, %v621
  %v816 = vpack.c.b16 %v624, %v622
  %v817 = vpack.c.b16 %v627, %v625
  %v818 = vpack.c.b16 %v628, %v626
  %v819 = vpack.c.b16 %v631, %v629
  %v820 = vpack.c.b16 %v632, %v630
  %v821 = vpack.c.b16 %v635, %v633
  %v822 = vpack.c.b16 %v636, %v634
  %v823 = vpack.c.b16 %v639, %v637
  %v824 = vpack.c.b16 %v640, %v638
  %v825 = vpack.c.b16 %v643, %v641
  %v826 = vpack.c.b16 %v644, %v642
  %v827 = vpack.c.b16 %v647, %v645
  %v828 = vpack.c.b16 %v648, %v646
  %v829 = vpack.c.b16 %v651, %v649
  %v830 = vpack.c.b16 %v652, %v650
  %v831 = vpack.c.b16 %v655, %v653
  %v832 = vpack.c.b16 %v656, %v654
  %v833 = vpack.c.b16 %v659, %v657
  %v834 = vpack.c.b16 %v660, %v658
  %v835 = vpack.c.b16 %v663, %v661
  %v836 = vpack.c.b16 %v664, %v662
  %v837 = vpack.c.b16 %v667, %v665
  %v838 = vpack.c.b16 %v668, %v666
  %v839 = vpack.c.b16 %v671, %v669
  %v840 = vpack.c.b16 %v672, %v670
  %v841 = vpack.c.b16 %v675, %v673
  %v842 = vpack.c.b16 %v676, %v674
  %v843 = vpack.c.b16 %v679, %v677
  %v844 = vpack.c.b16 %v680, %v678
  %v845 = vpack.c.b16 %v683, %v681
  %v846 = vpack.c.b16 %v684, %v682
  %v847 = vpack.c.b16 %v687, %v685
  %v848 = vpack.c.b16 %v688, %v686
  %v849 = vpack.c.b16 %v691, %v689
  %v850 = vpack.c.b16 %v692, %v690
  %v851 = vpack.c.b16 %v695, %v693
  %v852 = vpack.c.b16 %v696, %v694
  %v853 = vpack.c.b16 %v699, %v697
  %v854 = vpack.c.b16 %v700, %v698
  %v855 = vpack.c.b16 %v703, %v701
  %v856 = vpack.c.b16 %v704, %v702
  %v857 = vpack.c.b16 %v707, %v705
  %v858 = vpack.c.b16 %v708, %v706
  %v859 = vpack.c.b16 %v711, %v709
  %v860 = vpack.c.b16 %v712, %v710
  %v861 = vpack.c.b16 %v715, %v713
  %v862 = vpack.c.b16 %v716, %v714
  %v863 = vpack.c.b16 %v719, %v717
  %v864 = vpack.c.b16 %v720, %v718
  %1009 = vmatprep.subr.bf16.mxu0 %v722
  %1010 = vmatpush1.bf16.msra.mxu0 %v721
  %1011 = vmatprep.subr.bf16.mxu0 %v724
  %1012 = vmatpush1.bf16.msra.mxu0 %v723
  %1013 = vmatprep.subr.bf16.mxu0 %v726
  %1014 = vmatpush1.bf16.msra.mxu0 %v725
  %1015 = vmatprep.subr.bf16.mxu0 %v728
  %1016 = vmatpush1.bf16.msra.mxu0 %v727
  %1017 = vmatprep.subr.bf16.mxu0 %v730
  %1018 = vmatpush1.bf16.msra.mxu0 %v729
  %1019 = vmatprep.subr.bf16.mxu0 %v732
  %1020 = vmatpush1.bf16.msra.mxu0 %v731
  %1021 = vmatprep.subr.bf16.mxu0 %v734
  %1022 = vmatpush1.bf16.msra.mxu0 %v733
  %1023 = vmatprep.subr.bf16.mxu0 %v736
  %1024 = vmatpush1.bf16.msra.mxu0 %v735
  %1025 = vmatprep.subr.bf16.mxu0 %v738
  %1026 = vmatpush1.bf16.msra.mxu0 %v737
  %1027 = vmatprep.subr.bf16.mxu0 %v740
  %1028 = vmatpush1.bf16.msra.mxu0 %v739
  %1029 = vmatprep.subr.bf16.mxu0 %v742
  %1030 = vmatpush1.bf16.msra.mxu0 %v741
  %1031 = vmatprep.subr.bf16.mxu0 %v744
  %1032 = vmatpush1.bf16.msra.mxu0 %v743
  %1033 = vmatprep.subr.bf16.mxu0 %v746
  %1034 = vmatpush1.bf16.msra.mxu0 %v745
  %1035 = vmatprep.subr.bf16.mxu0 %v748
  %1036 = vmatpush1.bf16.msra.mxu0 %v747
  %1037 = vmatprep.subr.bf16.mxu0 %v750
  %1038 = vmatpush1.bf16.msra.mxu0 %v749
  %1039 = vmatprep.subr.bf16.mxu0 %v752
  %1040 = vmatpush1.bf16.msra.mxu0 %v751
  %1041 = vmatprep.mubr.bf16.mxu0 %v254
  %1042 = vmatmul.mubr.bf16.gmra.mrb[0].mxu0 %v253
  %v1043 = vpop.f32.mrb[0].mxu0
  %v1044 = vadd.f32 %v190, %v1043
  %v1045 = vpop.f32.mrb[0].mxu0
  %v1046 = vadd.f32 %v194, %v1045
  %v1047 = vpop.f32.mrb[0].mxu0
  %v1048 = vadd.f32 %v190, %v1047
  %v1049 = vpop.f32.mrb[0].mxu0
  %v1050 = vadd.f32 %v194, %v1049
  %1051 = vmatprep.mubr.bf16.mxu0 %v263
  %1052 = vmatmul.mubr.bf16.gmra.mrb[0].mxu0 %v262
  %v1053 = vpop.f32.mrb[0].mxu0
  %v1054 = vadd.f32 %v190, %v1053
  %v1055 = vpop.f32.mrb[0].mxu0
  %v1056 = vadd.f32 %v194, %v1055
  %v1057 = vpop.f32.mrb[0].mxu0
  %v1058 = vadd.f32 %v190, %v1057
  %v1059 = vpop.f32.mrb[0].mxu0
  %v1060 = vadd.f32 %v194, %v1059
  %1061 = vdwg.mxu0
  %1062 = vmatprep.subr.bf16.mxu0 %v754
  %1063 = vmatpush1.bf16.msra.mxu0 %v753
  %1064 = vmatprep.subr.bf16.mxu0 %v756
  %1065 = vmatpush1.bf16.msra.mxu0 %v755
  %1066 = vmatprep.subr.bf16.mxu0 %v758
  %1067 = vmatpush1.bf16.msra.mxu0 %v757
  %1068 = vmatprep.subr.bf16.mxu0 %v760
  %1069 = vmatpush1.bf16.msra.mxu0 %v759
  %1070 = vmatprep.subr.bf16.mxu0 %v762
  %1071 = vmatpush1.bf16.msra.mxu0 %v761
  %1072 = vmatprep.subr.bf16.mxu0 %v764
  %1073 = vmatpush1.bf16.msra.mxu0 %v763
  %1074 = vmatprep.subr.bf16.mxu0 %v766
  %1075 = vmatpush1.bf16.msra.mxu0 %v765
  %1076 = vmatprep.subr.bf16.mxu0 %v768
  %1077 = vmatpush1.bf16.msra.mxu0 %v767
  %1078 = vmatprep.subr.bf16.mxu0 %v770
  %1079 = vmatpush1.bf16.msra.mxu0 %v769
  %1080 = vmatprep.subr.bf16.mxu0 %v772
  %1081 = vmatpush1.bf16.msra.mxu0 %v771
  %1082 = vmatprep.subr.bf16.mxu0 %v774
  %1083 = vmatpush1.bf16.msra.mxu0 %v773
  %1084 = vmatprep.subr.bf16.mxu0 %v776
  %1085 = vmatpush1.bf16.msra.mxu0 %v775
  %1086 = vmatprep.subr.bf16.mxu0 %v778
  %1087 = vmatpush1.bf16.msra.mxu0 %v777
  %1088 = vmatprep.subr.bf16.mxu0 %v780
  %1089 = vmatpush1.bf16.msra.mxu0 %v779
  %1090 = vmatprep.subr.bf16.mxu0 %v782
  %1091 = vmatpush1.bf16.msra.mxu0 %v781
  %1092 = vmatprep.subr.bf16.mxu0 %v784
  %1093 = vmatpush1.bf16.msra.mxu0 %v783
  %1094 = vmatprep.mubr.bf16.mxu0 %v256
  %1095 = vmatmul.mubr.bf16.gmra.mrb[0].mxu0 %v255
  %v1096 = vpop.f32.mrb[0].mxu0
  %v1097 = vadd.f32 %v1044, %v1096
  %v1098 = vpop.f32.mrb[0].mxu0
  %v1099 = vadd.f32 %v1046, %v1098
  %v1100 = vpop.f32.mrb[0].mxu0
  %v1101 = vadd.f32 %v1048, %v1100
  %v1102 = vpop.f32.mrb[0].mxu0
  %v1103 = vadd.f32 %v1050, %v1102
  %1104 = vmatprep.mubr.bf16.mxu0 %v265
  %1105 = vmatmul.mubr.bf16.gmra.mrb[0].mxu0 %v264
  %v1106 = vpop.f32.mrb[0].mxu0
  %v1107 = vadd.f32 %v1054, %v1106
  %v1108 = vpop.f32.mrb[0].mxu0
  %v1109 = vadd.f32 %v1056, %v1108
  %v1110 = vpop.f32.mrb[0].mxu0
  %v1111 = vadd.f32 %v1058, %v1110
  %v1112 = vpop.f32.mrb[0].mxu0
  %v1113 = vadd.f32 %v1060, %v1112
  %1114 = vdwg.mxu0
  %1115 = vmatprep.subr.bf16.mxu0 %v786
  %1116 = vmatpush1.bf16.msra.mxu0 %v785
  %1117 = vmatprep.subr.bf16.mxu0 %v788
  %1118 = vmatpush1.bf16.msra.mxu0 %v787
  %1119 = vmatprep.subr.bf16.mxu0 %v790
  %1120 = vmatpush1.bf16.msra.mxu0 %v789
  %1121 = vmatprep.subr.bf16.mxu0 %v792
  %1122 = vmatpush1.bf16.msra.mxu0 %v791
  %1123 = vmatprep.subr.bf16.mxu0 %v794
  %1124 = vmatpush1.bf16.msra.mxu0 %v793
  %1125 = vmatprep.subr.bf16.mxu0 %v796
  %1126 = vmatpush1.bf16.msra.mxu0 %v795
  %1127 = vmatprep.subr.bf16.mxu0 %v798
  %1128 = vmatpush1.bf16.msra.mxu0 %v797
  %1129 = vmatprep.subr.bf16.mxu0 %v800
  %1130 = vmatpush1.bf16.msra.mxu0 %v799
  %1131 = vmatprep.subr.bf16.mxu0 %v802
  %1132 = vmatpush1.bf16.msra.mxu0 %v801
  %1133 = vmatprep.subr.bf16.mxu0 %v804
  %1134 = vmatpush1.bf16.msra.mxu0 %v803
  %1135 = vmatprep.subr.bf16.mxu0 %v806
  %1136 = vmatpush1.bf16.msra.mxu0 %v805
  %1137 = vmatprep.subr.bf16.mxu0 %v808
  %1138 = vmatpush1.bf16.msra.mxu0 %v807
  %1139 = vmatprep.subr.bf16.mxu0 %v810
  %1140 = vmatpush1.bf16.msra.mxu0 %v809
  %1141 = vmatprep.subr.bf16.mxu0 %v812
  %1142 = vmatpush1.bf16.msra.mxu0 %v811
  %1143 = vmatprep.subr.bf16.mxu0 %v814
  %1144 = vmatpush1.bf16.msra.mxu0 %v813
  %1145 = vmatprep.subr.bf16.mxu0 %v816
  %1146 = vmatpush1.bf16.msra.mxu0 %v815
  %1147 = vmatprep.mubr.bf16.mxu0 %v258
  %1148 = vmatmul.mubr.bf16.gmra.mrb[0].mxu0 %v257
  %v1149 = vpop.f32.mrb[0].mxu0
  %v1150 = vadd.f32 %v1097, %v1149
  %v1151 = vpop.f32.mrb[0].mxu0
  %v1152 = vadd.f32 %v1099, %v1151
  %v1153 = vpop.f32.mrb[0].mxu0
  %v1154 = vadd.f32 %v1101, %v1153
  %v1155 = vpop.f32.mrb[0].mxu0
  %v1156 = vadd.f32 %v1103, %v1155
  %1157 = vmatprep.mubr.bf16.mxu0 %v267
  %1158 = vmatmul.mubr.bf16.gmra.mrb[0].mxu0 %v266
  %v1159 = vpop.f32.mrb[0].mxu0
  %v1160 = vadd.f32 %v1107, %v1159
  %v1161 = vpop.f32.mrb[0].mxu0
  %v1162 = vadd.f32 %v1109, %v1161
  %v1163 = vpop.f32.mrb[0].mxu0
  %v1164 = vadd.f32 %v1111, %v1163
  %v1165 = vpop.f32.mrb[0].mxu0
  %v1166 = vadd.f32 %v1113, %v1165
  %1167 = vdwg.mxu0
  %1168 = vmatprep.subr.bf16.mxu0 %v818
  %1169 = vmatpush1.bf16.msra.mxu0 %v817
  %1170 = vmatprep.subr.bf16.mxu0 %v820
  %1171 = vmatpush1.bf16.msra.mxu0 %v819
  %1172 = vmatprep.subr.bf16.mxu0 %v822
  %1173 = vmatpush1.bf16.msra.mxu0 %v821
  %1174 = vmatprep.subr.bf16.mxu0 %v824
  %1175 = vmatpush1.bf16.msra.mxu0 %v823
  %1176 = vmatprep.subr.bf16.mxu0 %v826
  %1177 = vmatpush1.bf16.msra.mxu0 %v825
  %1178 = vmatprep.subr.bf16.mxu0 %v828
  %1179 = vmatpush1.bf16.msra.mxu0 %v827
  %1180 = vmatprep.subr.bf16.mxu0 %v830
  %1181 = vmatpush1.bf16.msra.mxu0 %v829
  %1182 = vmatprep.subr.bf16.mxu0 %v832
  %1183 = vmatpush1.bf16.msra.mxu0 %v831
  %1184 = vmatprep.subr.bf16.mxu0 %v834
  %1185 = vmatpush1.bf16.msra.mxu0 %v833
  %1186 = vmatprep.subr.bf16.mxu0 %v836
  %1187 = vmatpush1.bf16.msra.mxu0 %v835
  %1188 = vmatprep.subr.bf16.mxu0 %v838
  %1189 = vmatpush1.bf16.msra.mxu0 %v837
  %1190 = vmatprep.subr.bf16.mxu0 %v840
  %1191 = vmatpush1.bf16.msra.mxu0 %v839
  %1192 = vmatprep.subr.bf16.mxu0 %v842
  %1193 = vmatpush1.bf16.msra.mxu0 %v841
  %1194 = vmatprep.subr.bf16.mxu0 %v844
  %1195 = vmatpush1.bf16.msra.mxu0 %v843
  %1196 = vmatprep.subr.bf16.mxu0 %v846
  %1197 = vmatpush1.bf16.msra.mxu0 %v845
  %1198 = vmatprep.subr.bf16.mxu0 %v848
  %1199 = vmatpush1.bf16.msra.mxu0 %v847
  %1200 = vmatprep.mubr.bf16.mxu0 %v260
  %1201 = vmatmul.mubr.bf16.gmra.mrb[0].mxu0 %v259
  %v1202 = vpop.f32.mrb[0].mxu0
  %v1203 = vadd.f32 %v1150, %v1202
  %v1204 = vpop.f32.mrb[0].mxu0
  %v1205 = vadd.f32 %v1152, %v1204
  %v1206 = vpop.f32.mrb[0].mxu0
  %v1207 = vadd.f32 %v1154, %v1206
  %v1208 = vpop.f32.mrb[0].mxu0
  %v1209 = vadd.f32 %v1156, %v1208
  %1210 = vmatprep.mubr.bf16.mxu0 %v269
  %1211 = vmatmul.mubr.bf16.gmra.mrb[0].mxu0 %v268
  %v1212 = vpop.f32.mrb[0].mxu0
  %v1213 = vadd.f32 %v1160, %v1212
  %v1214 = vpop.f32.mrb[0].mxu0
  %v1215 = vadd.f32 %v1162, %v1214
  %v1216 = vpop.f32.mrb[0].mxu0
  %v1217 = vadd.f32 %v1164, %v1216
  %v1218 = vpop.f32.mrb[0].mxu0
  %v1219 = vadd.f32 %v1166, %v1218
  %1220 = vdwg.mxu0
  %1221 = vmatprep.subr.bf16.mxu0 %v850
  %1222 = vmatpush1.bf16.msra.mxu0 %v849
  %1223 = vmatprep.subr.bf16.mxu0 %v852
  %1224 = vmatpush1.bf16.msra.mxu0 %v851
  %1225 = vmatprep.subr.bf16.mxu0 %v854
  %1226 = vmatpush1.bf16.msra.mxu0 %v853
  %1227 = vmatprep.subr.bf16.mxu0 %v856
  %1228 = vmatpush1.bf16.msra.mxu0 %v855
  %1229 = vmatprep.subr.bf16.mxu0 %v858
  %1230 = vmatpush1.bf16.msra.mxu0 %v857
  %1231 = vmatprep.subr.bf16.mxu0 %v860
  %1232 = vmatpush1.bf16.msra.mxu0 %v859
  %1233 = vmatprep.subr.bf16.mxu0 %v862
  %1234 = vmatpush1.bf16.msra.mxu0 %v861
  %1235 = vmatprep.subr.bf16.mxu0 %v864
  %1236 = vmatpush1.bf16.msra.mxu0 %v863
  %1237 = vmatprep.subr.bf16.mxu0 0
  %1238 = vmatpush1.bf16.msra.mxu0 0
  %1239 = vmatprep.subr.bf16.mxu0 0
  %1240 = vmatpush1.bf16.msra.mxu0 0
  %1241 = vmatprep.subr.bf16.mxu0 0
  %1242 = vmatpush1.bf16.msra.mxu0 0
  %1243 = vmatprep.subr.bf16.mxu0 0
  %1244 = vmatpush1.bf16.msra.mxu0 0
  %1245 = vmatprep.subr.bf16.mxu0 0
  %1246 = vmatpush1.bf16.msra.mxu0 0
  %1247 = vmatprep.subr.bf16.mxu0 0
  %1248 = vmatpush1.bf16.msra.mxu0 0
  %1249 = vmatprep.subr.bf16.mxu0 0
  %1250 = vmatpush1.bf16.msra.mxu0 0
  %1251 = vmatprep.subr.bf16.mxu0 0
  %1252 = vmatpush1.bf16.msra.mxu0 0
  %1253 = vmatprep.mubr.bf16.mxu0 0
  %1254 = vmatmul.mubr.bf16.gmra.mrb[0].mxu0 %v261
  %v1255 = vpop.f32.mrb[0].mxu0
  %v1256 = vadd.f32 %v1203, %v1255
  %v1257 = vpop.f32.mrb[0].mxu0
  %v1258 = vadd.f32 %v1205, %v1257
  %v1259 = vpop.f32.mrb[0].mxu0
  %v1260 = vadd.f32 %v1207, %v1259
  %v1261 = vpop.f32.mrb[0].mxu0
  %v1262 = vadd.f32 %v1209, %v1261
  %1263 = vmatprep.mubr.bf16.mxu0 0
  %1264 = vmatmul.mubr.bf16.gmra.mrb[0].mxu0 %v270
  %v1265 = vpop.f32.mrb[0].mxu0
  %v1266 = vadd.f32 %v1213, %v1265
  %v1267 = vpop.f32.mrb[0].mxu0
  %v1268 = vadd.f32 %v1215, %v1267
  %v1269 = vpop.f32.mrb[0].mxu0
  %v1270 = vadd.f32 %v1217, %v1269
  %v1271 = vpop.f32.mrb[0].mxu0
  %v1272 = vadd.f32 %v1219, %v1271
  %1273 = vdwg.mxu0
  %v1274 = vadd.f32 %v1256, %v1260
  %v1275 = vadd.f32 %v1274, %v1266
  %v1276 = vadd.f32 %v1275, %v1270
  %v1277 = vrot.slane %v1276, 4
  %v1278 = vadd.f32 %v1276, %v1277
  %v1279 = vrot.slane %v1278, 2
  %v1280 = vadd.f32 %v1278, %v1279
  %v1281 = vrot.slane %v1280, 1
  %v1282 = vadd.f32 %v1280, %v1281
  %v1283 = vadd.f32 %v1258, %v1262
  %v1284 = vadd.f32 %v1283, %v1268
  %v1285 = vadd.f32 %v1284, %v1272
  %v1286 = vrot.slane %v1285, 4
  %v1287 = vadd.f32 %v1285, %v1286
  %v1288 = vrot.slane %v1287, 2
  %v1289 = vadd.f32 %v1287, %v1288
  %v1290 = vrot.slane %v1289, 1
  %v1291 = vadd.f32 %v1289, %v1290
  %v1292 = vmul.f32 %v1282, 0.03125
  %v1293 = vmul.f32 %v1291, 0.03125
  %v1294 = vsub.f32 %v1256, %v1292
  %v1295 = vsub.f32 %v1258, %v1293
  %v1296 = vsub.f32 %v1260, %v1292
  %v1297 = vsub.f32 %v1262, %v1293
  %v1298 = vsub.f32 %v1266, %v1292
  %v1299 = vsub.f32 %v1268, %v1293
  %v1300 = vsub.f32 %v1270, %v1292
  %v1301 = vsub.f32 %v1272, %v1293
  %v1302 = vmul.f32 %v1294, %v1294
  %v1303 = vmul.f32 %v1295, %v1295
  %v1304 = vmul.f32 %v1296, %v1296
  %v1305 = vmul.f32 %v1297, %v1297
  %v1306 = vmul.f32 %v1298, %v1298
  %v1307 = vmul.f32 %v1299, %v1299
  %v1308 = vmul.f32 %v1300, %v1300
  %v1309 = vmul.f32 %v1301, %v1301
  %v1310 = vadd.f32 %v1302, %v1304
  %v1311 = vadd.f32 %v1310, %v1306
  %v1312 = vadd.f32 %v1311, %v1308
  %v1313 = vrot.slane %v1312, 4
  %v1314 = vadd.f32 %v1312, %v1313
  %v1315 = vrot.slane %v1314, 2
  %v1316 = vadd.f32 %v1314, %v1315
  %v1317 = vrot.slane %v1316, 1
  %v1318 = vadd.f32 %v1316, %v1317
  %v1319 = vadd.f32 %v1303, %v1305
  %v1320 = vadd.f32 %v1319, %v1307
  %v1321 = vadd.f32 %v1320, %v1309
  %v1322 = vrot.slane %v1321, 4
  %v1323 = vadd.f32 %v1321, %v1322
  %v1324 = vrot.slane %v1323, 2
  %v1325 = vadd.f32 %v1323, %v1324
  %v1326 = vrot.slane %v1325, 1
  %v1327 = vadd.f32 %v1325, %v1326
  %v1328 = vmul.f32 %v1318, 0.03125
  %v1329 = vmul.f32 %v1327, 0.03125
  %v1330 = vadd.f32 %v1328, 1e-05
  %v1331 = vadd.f32 %v1329, 1e-05
  %v1332 = vrsqrt.pop %v1330
  %v1333 = vrsqrt.pop %v1331
  %v1334 = vmul.f32 %v1294, %v1332
  %v1335 = vmul.f32 %v1295, %v1333
  %v1336 = vmul.f32 %v1296, %v1332
  %v1337 = vmul.f32 %v1297, %v1333
  %v1338 = vmul.f32 %v1298, %v1332
  %v1339 = vmul.f32 %v1299, %v1333
  %v1340 = vmul.f32 %v1300, %v1332
  %v1341 = vmul.f32 %v1301, %v1333
  %v1342 = vld [vmem:[%s3] sm:$0x3]
  %v1344 = vlaneseq
  %v1345 = vshrl.u32 %v1344, 7
  %v1346 = vsub.s32 0, %v1345
  %v1347 = vrot.slane %v1342, %v1346
  %v1348 = vlaneseq
  %v1349 = vshrl.u32 %v1348, 7
  %v1350 = vsub.s32 1, %v1349
  %v1351 = vrot.slane %v1342, %v1350
  %v1354 = vmul.f32 %v1334, %v1347
  %v1355 = vmul.f32 %v1335, %v1351
  %v1356 = vmul.f32 %v1336, %v1347
  %v1357 = vmul.f32 %v1337, %v1351
  %v1358 = vmul.f32 %v1338, %v1347
  %v1359 = vmul.f32 %v1339, %v1351
  %v1360 = vmul.f32 %v1340, %v1347
  %v1361 = vmul.f32 %v1341, %v1351
  %v1362 = vld [vmem:[%s4] sm:$0x3]
  %v1364 = vlaneseq
  %v1365 = vshrl.u32 %v1364, 7
  %v1366 = vsub.s32 0, %v1365
  %v1367 = vrot.slane %v1362, %v1366
  %v1368 = vlaneseq
  %v1369 = vshrl.u32 %v1368, 7
  %v1370 = vsub.s32 1, %v1369
  %v1371 = vrot.slane %v1362, %v1370
  %v1374 = vadd.f32 %v1354, %v1367
  %v1375 = vadd.f32 %v1355, %v1371
  %v1376 = vadd.f32 %v1356, %v1367
  %v1377 = vadd.f32 %v1357, %v1371
  %v1378 = vadd.f32 %v1358, %v1367
  %v1379 = vadd.f32 %v1359, %v1371
  %v1380 = vadd.f32 %v1360, %v1367
  %v1381 = vadd.f32 %v1361, %v1371
  %v1382 = vmax.f32 %v1374, 0.0
  %v1383 = vmax.f32 %v1375, 0.0
  %v1384 = vmax.f32 %v1376, 0.0
  %v1385 = vmax.f32 %v1377, 0.0
  %v1386 = vmax.f32 %v1378, 0.0
  %v1387 = vmax.f32 %v1379, 0.0
  %v1388 = vmax.f32 %v1380, 0.0
  %v1389 = vmax.f32 %v1381, 0.0
  %1390 = vst [vmem:[%s5] sm:$0xff] %v1382
  %1391 = vst [vmem:[%s5 + $0x8] sm:$0xff] %v1383
  %1392 = vst [vmem:[%s5 + $0x10] sm:$0xff] %v1384
  %1393 = vst [vmem:[%s5 + $0x18] sm:$0xff] %v1385
  %1394 = vst [vmem:[%s5 + $0x20] sm:$0xff] %v1386
  %1395 = vst [vmem:[%s5 + $0x28] sm:$0xff] %v1387
  %1396 = vst [vmem:[%s5 + $0x30] sm:$0xff] %v1388
  %1397 = vst [vmem:[%s5 + $0x38] sm:$0xff] %v1389
  // Predicated region
  $region22: #{label_encoder.5} parent=0 // pred_check
    _
  $region23: #{label_encoder.5} parent=0 // pred_check_branch
    %1399 = sbr.rel (0) target = $region25
  $region24: #{label_encoder.5} parent=0 // pred_region
    _
  $region25: #{label_encoder.5} parent=0 // pred_fallthru
    _
  // Predicated region
  $region26: #{label_encoder.5} parent=0 // pred_check
    _
  $region27: #{label_encoder.5} parent=0 // pred_check_branch
    %1401 = sbr.rel (0) target = $region29
  $region28: #{label_encoder.5} parent=0 // pred_region
    _
  $region29: #{label_encoder.5} parent=0 // pred_fallthru
    _

</llo_original>
